<compile_context>
chip_gen: v7x
topology: tpu7x:2x2x1
jax: 0.10.0
libtpu: 0.0.40
codegen_flags: <defaults>
</compile_context>

<pallas_src>
import functools
import math

import jax
import jax.numpy as jnp
from jax.experimental import pallas as pl
from jax.experimental.pallas import tpu as pltpu

EPS = 1e-5  # RoBERTa layer_norm_eps

# Matmul weight storage dtype.  f32 keeps exact parity at toy scale; set to
# jnp.bfloat16 on v6e/v7x at real RoBERTa scale (MXU-native, halves weight VMEM/HBM).
MM_DTYPE = jnp.float32

CFG = dict(vocab=100, max_pos=16, type_vocab=1, D=32, H=2, FFN=64, L=2, proj1=256, proj2=128)

_SQRT1_2 = 1.0 / math.sqrt(2.0)


# ------------------------------ math helpers ------------------------------ #

def _layernorm(x, gamma, beta, eps):
    # torch.nn.LayerNorm semantics (biased variance over the last axis).
    mu = jnp.mean(x, axis=-1, keepdims=True)
    var = jnp.mean((x - mu) ** 2, axis=-1, keepdims=True)
    return (x - mu) * jax.lax.rsqrt(var + eps) * gamma + beta


def _erf_approx(x):
    # Abramowitz & Stegun 7.1.26, |error| < 1.5e-7.  Gives exact-erf GELU numerics
    # (torch.nn.GELU default) using only exp / divide / select, which all lower in
    # Mosaic, instead of relying on a lax.erf lowering.
    a1, a2, a3, a4, a5 = 0.254829592, -0.284496736, 1.421413741, -1.453152027, 1.061405429
    p = 0.3275911
    ax = jnp.abs(x)
    t = 1.0 / (1.0 + p * ax)
    poly = ((((a5 * t + a4) * t + a3) * t + a2) * t + a1) * t
    y = 1.0 - poly * jnp.exp(-(ax * ax))
    return jnp.where(x >= 0.0, y, -y)


def _gelu_exact(x):
    return 0.5 * x * (1.0 + _erf_approx(x * _SQRT1_2))


# ------------------------------ fused Pallas kernel ------------------------------ #

def _fused_forward_kernel(x_ref, bias_ref, sel_ref,
                          emb_g_ref, emb_b_ref,
                          wqkv_ref, bqkv_ref, wo_ref, bo_ref,
                          ln1_g_ref, ln1_b_ref, w1_ref, b1_ref, w2_ref, b2_ref,
                          ln2_g_ref, ln2_b_ref,
                          pw1_ref, pb1_ref, pw2_ref, pb2_ref,
                          emb_ref, *, num_layers, num_heads, eps):
    """Embedding-LN -> L encoder layers -> projection head, all VMEM-resident."""
    x = x_ref[...].astype(jnp.float32)             # (R, D) slab: R = seqs_per_step * S
    R, D = x.shape
    H = num_heads
    Dh = D // H
    scale = 1.0 / math.sqrt(Dh)

    # Host-built additive key bias: 0 for (same sequence AND non-padding) keys,
    # -1e9 otherwise (block-diagonal => per-sequence attention on the flat slab).
    bias = bias_ref[...].astype(jnp.float32)       # (R, R)

    # --- embedding LayerNorm (dropout = identity) ---
    x = _layernorm(x, emb_g_ref[...], emb_b_ref[...], eps)

    for l in range(num_layers):                    # static unroll, L=2
        wqkv_l = wqkv_ref[l]                       # (3H, D, Dh)  [q heads | k heads | v heads]
        bqkv_l = bqkv_ref[l]                       # (3H, 1, Dh)
        wo_l = wo_ref[l]                           # (H, Dh, D)
        xm = x.astype(wqkv_l.dtype)
        attn = jnp.zeros((R, D), jnp.float32)
        # TODO(synk): at real head counts (H=12) use lax.fori_loop(..., unroll=True)
        # instead of a static unroll to bound vreg live ranges.
        for h in range(H):
            q = jnp.dot(xm, wqkv_l[h], preferred_element_type=jnp.float32) + bqkv_l[h]
            k = jnp.dot(xm, wqkv_l[H + h], preferred_element_type=jnp.float32) + bqkv_l[H + h]
            v = jnp.dot(xm, wqkv_l[2 * H + h], preferred_element_type=jnp.float32) + bqkv_l[2 * H + h]
            # scores: contract the Dh axes (q @ k^T) without an explicit transpose.
            s = jax.lax.dot_general(q, k, (((1,), (1,)), ((), ())),
                                    preferred_element_type=jnp.float32) * scale + bias
            s = s - jnp.max(s, axis=-1, keepdims=True)
            p = jnp.exp(s)
            p = p * pl.reciprocal(jnp.sum(p, axis=-1, keepdims=True), approx=True)  # EUP
            ctx = jnp.dot(p, v, preferred_element_type=jnp.float32)                 # (R, Dh)
            # concat_h(ctx_h) @ Wo == sum_h ctx_h @ Wo[h]  (avoids lane-dim concat)
            attn = attn + jnp.dot(ctx.astype(wo_l.dtype), wo_l[h],
                                  preferred_element_type=jnp.float32)
        attn = attn + bo_ref[l]

        # residual + LayerNorm 1 (fused epilogue)
        x = _layernorm(attn + x, ln1_g_ref[l], ln1_b_ref[l], eps)

        # FFN (exact-erf GELU) + residual + LayerNorm 2
        w1_l = w1_ref[l]
        ff = jnp.dot(x.astype(w1_l.dtype), w1_l, preferred_element_type=jnp.float32) + b1_ref[l]
        ff = _gelu_exact(ff)
        w2_l = w2_ref[l]
        ff = jnp.dot(ff.astype(w2_l.dtype), w2_l, preferred_element_type=jnp.float32) + b2_ref[l]
        x = _layernorm(ff + x, ln2_g_ref[l], ln2_b_ref[l], eps)

    # --- projection head epilogue on the CLS row of every sequence (dropout = id) ---
    cls = jnp.dot(sel_ref[...], x, preferred_element_type=jnp.float32)   # (n_seq, D)
    pw1 = pw1_ref[...]
    hid = jnp.dot(cls.astype(pw1.dtype), pw1, preferred_element_type=jnp.float32) + pb1_ref[...]
    hid = jnp.maximum(hid, 0.0)
    pw2 = pw2_ref[...]
    emb = jnp.dot(hid.astype(pw2.dtype), pw2, preferred_element_type=jnp.float32) + pb2_ref[...]
    emb_ref[...] = emb.astype(emb_ref.dtype)


# ------------------------------ Pallas wrapper ------------------------------ #

def _invariant_spec(shape):
    n = len(shape)
    return pl.BlockSpec(shape, lambda g, _n=n: (0,) * _n)


def pallas_contrastive_forward(params, cfg, input_ids1, attention_mask1,
                               input_ids2, attention_mask2):
    B, S = input_ids1.shape
    D = cfg["D"]

    # The two towers share weights -> concatenate into one encoder pass.
    ids = jnp.concatenate([input_ids1, input_ids2], axis=0)            # (BT, S)
    msk = jnp.concatenate([attention_mask1, attention_mask2], axis=0)  # (BT, S)
    BT = 2 * B

    # Embedding gathers stay in XLA (data-dependent lookups); everything downstream
    # runs in the single fused kernel.  Dropout = identity (inference semantics).
    # TODO(synk): real RoBERTa offsets position ids by padding_idx+1; plain arange here.
    x = (params["word_emb"][ids]
         + params["pos_emb"][jnp.arange(S)][None, :, :]
         + params["type_emb"][0][None, None, :]).astype(jnp.float32)   # (BT, S, D)

    # grid=(2,): one fat step per v7x TensorCore; on single-TC v5e/v6e this only
    # costs one extra ~600-cycle grid step.  Each step owns a (BT//G * S, D) slab.
    G = 2 if BT % 2 == 0 else 1
    n_seq = BT // G
    R = n_seq * S

    x_flat = x.reshape(BT * S, D)

    # Block-diagonal same-sequence + key-padding bias, built once on the host.
    key_valid = msk.astype(jnp.float32).reshape(G, 1, R)               # (G, 1, R)
    seq_id = jnp.arange(R, dtype=jnp.int32) // S
    same_seq = (seq_id[:, None] == seq_id[None, :]).astype(jnp.float32)  # (R, R)
    attn_bias = (same_seq[None, :, :] * key_valid - 1.0) * 1e9         # (G, R, R)

    # CLS-row selection matrix (row i picks slab row i*S).
    cls_sel = jax.nn.one_hot(jnp.arange(n_seq) * S, R, dtype=jnp.float32)  # (n_seq, R)

    kern = functools.partial(_fused_forward_kernel,
                             num_layers=cfg["L"], num_heads=cfg["H"], eps=EPS)

    weight_args = (
        params["emb_ln_g"], params["emb_ln_b"],
        params["wqkv"], params["bqkv"], params["wo"], params["bo"],
        params["ln1_g"], params["ln1_b"], params["w1"], params["b1"],
        params["w2"], params["b2"], params["ln2_g"], params["ln2_b"],
        params["proj_w1"], params["proj_b1"], params["proj_w2"], params["proj_b2"],
    )
    in_specs = ([pl.BlockSpec((R, D), lambda g: (g, 0)),               # activation slab
                 pl.BlockSpec((None, R, R), lambda g: (g, 0, 0)),      # attention bias
                 _invariant_spec((n_seq, R))]                          # CLS selector
                + [_invariant_spec(w.shape) for w in weight_args])     # grid-invariant weights

    emb = pl.pallas_call(
        kern,
        out_shape=jax.ShapeDtypeStruct((G, n_seq, cfg["proj2"]), jnp.float32),
        grid=(G,),
        in_specs=in_specs,
        out_specs=pl.BlockSpec((None, n_seq, cfg["proj2"]), lambda g: (g, 0, 0)),
        compiler_params=pltpu.CompilerParams(
            dimension_semantics=("parallel",),
            vmem_limit_bytes=32 * 1024 * 1024),
    )(x_flat, attn_bias, cls_sel, *weight_args)

    emb = emb.reshape(BT, cfg["proj2"])
    return emb[:B], emb[B:]


# --------------------------- parameters (host side) ---------------------------- #

def init_params(key, cfg):
    # Deterministic synthetic init (N(0, 0.02) weights, zero biases, unit gammas).
    keys = iter(jax.random.split(key, 64))
    nrm = lambda shape: 0.02 * jax.random.normal(next(keys), shape, jnp.float32)
    D, FFN = cfg["D"], cfg["FFN"]
    params = dict(
        word_emb=nrm((cfg["vocab"], D)),
        pos_emb=nrm((cfg["max_pos"], D)),
        type_emb=nrm((cfg["type_vocab"], D)),
        emb_ln_g=jnp.ones((D,), jnp.float32), emb_ln_b=jnp.zeros((D,), jnp.float32),
        layers=[],
        proj_w1=nrm((D, cfg["proj1"])), proj_b1=jnp.zeros((cfg["proj1"],), jnp.float32),
        proj_w2=nrm((cfg["proj1"], cfg["proj2"])), proj_b2=jnp.zeros((cfg["proj2"],), jnp.float32),
    )
    for _ in range(cfg["L"]):
        params["layers"].append(dict(
            wq=nrm((D, D)), bq=jnp.zeros((D,), jnp.float32),
            wk=nrm((D, D)), bk=jnp.zeros((D,), jnp.float32),
            wv=nrm((D, D)), bv=jnp.zeros((D,), jnp.float32),
            wo=nrm((D, D)), bo=jnp.zeros((D,), jnp.float32),
            ln1_g=jnp.ones((D,), jnp.float32), ln1_b=jnp.zeros((D,), jnp.float32),
            w1=nrm((D, FFN)), b1=jnp.zeros((FFN,), jnp.float32),
            w2=nrm((FFN, D)), b2=jnp.zeros((D,), jnp.float32),
            ln2_g=jnp.ones((D,), jnp.float32), ln2_b=jnp.zeros((D,), jnp.float32),
        ))
    return params


def prepare_params(raw, cfg):
    """One-time host-side re-layout into the kernel's layer/head-stacked format.

    TODO(synk): torch nn.Linear stores weights as (out, in); transpose a real
    checkpoint before this re-layout (synthetic params here are already (in, out)).
    """
    D, H, L, FFN = cfg["D"], cfg["H"], cfg["L"], cfg["FFN"]
    Dh = D // H
    mm = MM_DTYPE

    def head_cols(w):   # (D, D) -> (H, D, Dh): head h owns output cols h*Dh:(h+1)*Dh
        return w.reshape(D, H, Dh).transpose(1, 0, 2)

    def head_bias(b):   # (D,) -> (H, 1, Dh)
        return b.reshape(H, 1, Dh)

    wqkv, bqkv, wo, bo = [], [], [], []
    ln1_g, ln1_b, w1, b1, w2, b2, ln2_g, ln2_b = [], [], [], [], [], [], [], []
    for lp in raw["layers"]:
        wqkv.append(jnp.concatenate([head_cols(lp["wq"]), head_cols(lp["wk"]),
                                     head_cols(lp["wv"])], axis=0))        # (3H, D, Dh)
        bqkv.append(jnp.concatenate([head_bias(lp["bq"]), head_bias(lp["bk"]),
                                     head_bias(lp["bv"])], axis=0))        # (3H, 1, Dh)
        wo.append(lp["wo"].reshape(H, Dh, D))
        bo.append(lp["bo"].reshape(1, D))
        ln1_g.append(lp["ln1_g"].reshape(1, D)); ln1_b.append(lp["ln1_b"].reshape(1, D))
        w1.append(lp["w1"]); b1.append(lp["b1"].reshape(1, FFN))
        w2.append(lp["w2"]); b2.append(lp["b2"].reshape(1, D))
        ln2_g.append(lp["ln2_g"].reshape(1, D)); ln2_b.append(lp["ln2_b"].reshape(1, D))

    st = lambda xs: jnp.stack(xs, axis=0)
    return dict(
        word_emb=raw["word_emb"], pos_emb=raw["pos_emb"], type_emb=raw["type_emb"],
        emb_ln_g=raw["emb_ln_g"].reshape(1, D), emb_ln_b=raw["emb_ln_b"].reshape(1, D),
        wqkv=st(wqkv).astype(mm), bqkv=st(bqkv),
        wo=st(wo).astype(mm), bo=st(bo),
        ln1_g=st(ln1_g), ln1_b=st(ln1_b),
        w1=st(w1).astype(mm), b1=st(b1),
        w2=st(w2).astype(mm), b2=st(b2),
        ln2_g=st(ln2_g), ln2_b=st(ln2_b),
        proj_w1=raw["proj_w1"].astype(mm), proj_b1=raw["proj_b1"].reshape(1, -1),
        proj_w2=raw["proj_w2"].astype(mm), proj_b2=raw["proj_b2"].reshape(1, -1),
    )


# --------------------------- pure-JAX reference ---------------------------- #

def reference_forward(raw, cfg, ids1, m1, ids2, m2):
    D, H = cfg["D"], cfg["H"]
    Dh = D // H

    def encode(ids, mask):
        B, S = ids.shape
        x = (raw["word_emb"][ids] + raw["pos_emb"][jnp.arange(S)][None]
             + raw["type_emb"][0][None, None, :])
        x = _layernorm(x, raw["emb_ln_g"], raw["emb_ln_b"], EPS)
        bias = (1.0 - mask.astype(jnp.float32))[:, None, None, :] * (-1e9)   # (B,1,1,S)
        for lp in raw["layers"]:
            q = (x @ lp["wq"] + lp["bq"]).reshape(B, S, H, Dh).transpose(0, 2, 1, 3)
            k = (x @ lp["wk"] + lp["bk"]).reshape(B, S, H, Dh).transpose(0, 2, 1, 3)
            v = (x @ lp["wv"] + lp["bv"]).reshape(B, S, H, Dh).transpose(0, 2, 1, 3)
            s = jnp.einsum("bhqd,bhkd->bhqk", q, k) / math.sqrt(Dh) + bias
            p = jax.nn.softmax(s, axis=-1)
            ctx = jnp.einsum("bhqk,bhkd->bhqd", p, v).transpose(0, 2, 1, 3).reshape(B, S, D)
            attn = ctx @ lp["wo"] + lp["bo"]
            x = _layernorm(attn + x, lp["ln1_g"], lp["ln1_b"], EPS)
            ff = jax.nn.gelu(x @ lp["w1"] + lp["b1"], approximate=False)
            ff = ff @ lp["w2"] + lp["b2"]
            x = _layernorm(ff + x, lp["ln2_g"], lp["ln2_b"], EPS)
        return x

    def project(cls):
        h = jnp.maximum(cls @ raw["proj_w1"] + raw["proj_b1"], 0.0)
        return h @ raw["proj_w2"] + raw["proj_b2"]

    return project(encode(ids1, m1)[:, 0, :]), project(encode(ids2, m2)[:, 0, :])


# ---------------------------------- main ----------------------------------- #

if __name__ == "__main__":
    cfg = CFG
    key = jax.random.PRNGKey(0)
    kp, k1, k2 = jax.random.split(key, 3)
    raw = init_params(kp, cfg)
    params = prepare_params(raw, cfg)

    B, S = 2, 8
    input_ids1 = jax.random.randint(k1, (B, S), 0, cfg["vocab"], dtype=jnp.int32)
    input_ids2 = jax.random.randint(k2, (B, S), 0, cfg["vocab"], dtype=jnp.int32)
    attention_mask1 = jnp.ones((B, S), jnp.int32)
    attention_mask2 = jnp.ones((B, S), jnp.int32).at[1, S - 2:].set(0)   # pad last 2 tokens

    fwd = jax.jit(functools.partial(pallas_contrastive_forward, params, cfg))
    emb1, emb2 = fwd(input_ids1, attention_mask1, input_ids2, attention_mask2)
    jax.block_until_ready((emb1, emb2))

    assert emb1.shape == (B, cfg["proj2"]) and emb2.shape == (B, cfg["proj2"])
    assert bool(jnp.all(jnp.isfinite(emb1))) and bool(jnp.all(jnp.isfinite(emb2)))

    # Pure-JAX reference check (loose tolerance: MXU default-precision f32 matmuls
    # plus the approximate EUP reciprocal in the kernel softmax).
    ref1, ref2 = reference_forward(raw, cfg, input_ids1, attention_mask1,
                                   input_ids2, attention_mask2)
    assert bool(jnp.allclose(emb1, ref1, atol=5e-3, rtol=5e-2)), "mismatch vs reference (tower 1)"
    assert bool(jnp.allclose(emb2, ref2, atol=5e-3, rtol=5e-2)), "mismatch vs reference (tower 2)"

    print("KERNEL_OK")
</pallas_src>

<mosaic_0001>
module attributes {stable_mosaic.version = 11 : i64} {
  func.func @_fused_forward_kernel(%arg0: i32, %arg1: memref<16x32xf32, #tpu.memory_space<vmem>>, %arg2: memref<1x16x16xf32, #tpu.memory_space<vmem>>, %arg3: memref<2x16xf32, #tpu.memory_space<vmem>>, %arg4: memref<1x32xf32, #tpu.memory_space<vmem>>, %arg5: memref<1x32xf32, #tpu.memory_space<vmem>>, %arg6: memref<2x6x32x16xf32, #tpu.memory_space<vmem>>, %arg7: memref<2x6x1x16xf32, #tpu.memory_space<vmem>>, %arg8: memref<2x2x16x32xf32, #tpu.memory_space<vmem>>, %arg9: memref<2x1x32xf32, #tpu.memory_space<vmem>>, %arg10: memref<2x1x32xf32, #tpu.memory_space<vmem>>, %arg11: memref<2x1x32xf32, #tpu.memory_space<vmem>>, %arg12: memref<2x32x64xf32, #tpu.memory_space<vmem>>, %arg13: memref<2x1x64xf32, #tpu.memory_space<vmem>>, %arg14: memref<2x64x32xf32, #tpu.memory_space<vmem>>, %arg15: memref<2x1x32xf32, #tpu.memory_space<vmem>>, %arg16: memref<2x1x32xf32, #tpu.memory_space<vmem>>, %arg17: memref<2x1x32xf32, #tpu.memory_space<vmem>>, %arg18: memref<32x256xf32, #tpu.memory_space<vmem>>, %arg19: memref<1x256xf32, #tpu.memory_space<vmem>>, %arg20: memref<256x128xf32, #tpu.memory_space<vmem>>, %arg21: memref<1x128xf32, #tpu.memory_space<vmem>>, %arg22: memref<1x2x128xf32, #tpu.memory_space<vmem>>) attributes {dimension_semantics = [#tpu.dimension_semantics<parallel>], iteration_bounds = array<i64: 2>, scalar_prefetch = 0 : i64, scratch_operands = 0 : i64, tpu.core_type = #tpu.core_type<tc>, window_params = [{transform_indices = @transform_0, window_bounds = array<i64: 16, 32>}, {transform_indices = @transform_1, window_bounds = array<i64: 1, 16, 16>}, {pipeline_mode = #tpu.pipeline_mode<synchronous>, transform_indices = @transform_2, window_bounds = array<i64: 2, 16>}, {pipeline_mode = #tpu.pipeline_mode<synchronous>, transform_indices = @transform_3, window_bounds = array<i64: 1, 32>}, {pipeline_mode = #tpu.pipeline_mode<synchronous>, transform_indices = @transform_4, window_bounds = array<i64: 1, 32>}, {pipeline_mode = #tpu.pipeline_mode<synchronous>, transform_indices = @transform_5, window_bounds = array<i64: 2, 6, 32, 16>}, {pipeline_mode = #tpu.pipeline_mode<synchronous>, transform_indices = @transform_6, window_bounds = array<i64: 2, 6, 1, 16>}, {pipeline_mode = #tpu.pipeline_mode<synchronous>, transform_indices = @transform_7, window_bounds = array<i64: 2, 2, 16, 32>}, {pipeline_mode = #tpu.pipeline_mode<synchronous>, transform_indices = @transform_8, window_bounds = array<i64: 2, 1, 32>}, {pipeline_mode = #tpu.pipeline_mode<synchronous>, transform_indices = @transform_9, window_bounds = array<i64: 2, 1, 32>}, {pipeline_mode = #tpu.pipeline_mode<synchronous>, transform_indices = @transform_10, window_bounds = array<i64: 2, 1, 32>}, {pipeline_mode = #tpu.pipeline_mode<synchronous>, transform_indices = @transform_11, window_bounds = array<i64: 2, 32, 64>}, {pipeline_mode = #tpu.pipeline_mode<synchronous>, transform_indices = @transform_12, window_bounds = array<i64: 2, 1, 64>}, {pipeline_mode = #tpu.pipeline_mode<synchronous>, transform_indices = @transform_13, window_bounds = array<i64: 2, 64, 32>}, {pipeline_mode = #tpu.pipeline_mode<synchronous>, transform_indices = @transform_14, window_bounds = array<i64: 2, 1, 32>}, {pipeline_mode = #tpu.pipeline_mode<synchronous>, transform_indices = @transform_15, window_bounds = array<i64: 2, 1, 32>}, {pipeline_mode = #tpu.pipeline_mode<synchronous>, transform_indices = @transform_16, window_bounds = array<i64: 2, 1, 32>}, {pipeline_mode = #tpu.pipeline_mode<synchronous>, transform_indices = @transform_17, window_bounds = array<i64: 32, 256>}, {pipeline_mode = #tpu.pipeline_mode<synchronous>, transform_indices = @transform_18, window_bounds = array<i64: 1, 256>}, {pipeline_mode = #tpu.pipeline_mode<synchronous>, transform_indices = @transform_19, window_bounds = array<i64: 256, 128>}, {pipeline_mode = #tpu.pipeline_mode<synchronous>, transform_indices = @transform_20, window_bounds = array<i64: 1, 128>}, {transform_indices = @transform_21, window_bounds = array<i64: 1, 2, 128>}]} {
    %c0 = arith.constant 0 : index
    %c0_0 = arith.constant 0 : index
    %0 = vector.load %arg1[%c0, %c0_0] : memref<16x32xf32, #tpu.memory_space<vmem>>, vector<16x32xf32>
    %c0_1 = arith.constant 0 : index
    %c0_2 = arith.constant 0 : index
    %c0_3 = arith.constant 0 : index
    %1 = vector.load %arg2[%c0_1, %c0_2, %c0_3] : memref<1x16x16xf32, #tpu.memory_space<vmem>>, vector<1x16x16xf32>
    %2 = vector.shape_cast %1 : vector<1x16x16xf32> to vector<16x16xf32>
    %c0_4 = arith.constant 0 : index
    %c0_5 = arith.constant 0 : index
    %3 = vector.load %arg4[%c0_4, %c0_5] : memref<1x32xf32, #tpu.memory_space<vmem>>, vector<1x32xf32>
    %c0_6 = arith.constant 0 : index
    %c0_7 = arith.constant 0 : index
    %4 = vector.load %arg5[%c0_6, %c0_7] : memref<1x32xf32, #tpu.memory_space<vmem>>, vector<1x32xf32>
    %cst = arith.constant dense<0.000000e+00> : vector<16xf32>
    %5 = vector.multi_reduction <add>, %0, %cst [1] : vector<16x32xf32> to vector<16xf32>
    %6 = vector.shape_cast %5 : vector<16xf32> to vector<16x1xf32>
    %cst_8 = arith.constant 3.200000e+01 : f32
    %7 = vector.broadcast %cst_8 : f32 to vector<16x1xf32>
    %8 = arith.divf %6, %7 : vector<16x1xf32>
    %9 = vector.broadcast %8 : vector<16x1xf32> to vector<16x32xf32>
    %10 = arith.subf %0, %9 : vector<16x32xf32>
    %11 = arith.mulf %10, %10 : vector<16x32xf32>
    %cst_9 = arith.constant dense<0.000000e+00> : vector<16xf32>
    %12 = vector.multi_reduction <add>, %11, %cst_9 [1] : vector<16x32xf32> to vector<16xf32>
    %13 = vector.shape_cast %12 : vector<16xf32> to vector<16x1xf32>
    %cst_10 = arith.constant 3.200000e+01 : f32
    %14 = vector.broadcast %cst_10 : f32 to vector<16x1xf32>
    %15 = arith.divf %13, %14 : vector<16x1xf32>
    %16 = vector.broadcast %8 : vector<16x1xf32> to vector<16x32xf32>
    %17 = arith.subf %0, %16 : vector<16x32xf32>
    %cst_11 = arith.constant 9.99999974E-6 : f32
    %18 = vector.broadcast %cst_11 : f32 to vector<16x1xf32>
    %19 = arith.addf %15, %18 : vector<16x1xf32>
    %20 = math.rsqrt %19 : vector<16x1xf32>
    %21 = vector.broadcast %20 : vector<16x1xf32> to vector<16x32xf32>
    %22 = arith.mulf %17, %21 : vector<16x32xf32>
    %23 = vector.broadcast %3 : vector<1x32xf32> to vector<16x32xf32>
    %24 = arith.mulf %22, %23 : vector<16x32xf32>
    %25 = vector.broadcast %4 : vector<1x32xf32> to vector<16x32xf32>
    %26 = arith.addf %24, %25 : vector<16x32xf32>
    %c0_12 = arith.constant 0 : index
    %c0_13 = arith.constant 0 : index
    %c0_14 = arith.constant 0 : index
    %c0_15 = arith.constant 0 : index
    %27 = vector.load %arg6[%c0_12, %c0_13, %c0_14, %c0_15] : memref<2x6x32x16xf32, #tpu.memory_space<vmem>>, vector<1x6x32x16xf32>
    %28 = vector.shape_cast %27 : vector<1x6x32x16xf32> to vector<6x32x16xf32>
    %c0_16 = arith.constant 0 : index
    %c0_17 = arith.constant 0 : index
    %c0_18 = arith.constant 0 : index
    %c0_19 = arith.constant 0 : index
    %29 = vector.load %arg7[%c0_16, %c0_17, %c0_18, %c0_19] : memref<2x6x1x16xf32, #tpu.memory_space<vmem>>, vector<1x6x1x16xf32>
    %30 = vector.shape_cast %29 : vector<1x6x1x16xf32> to vector<6x1x16xf32>
    %c0_20 = arith.constant 0 : index
    %c0_21 = arith.constant 0 : index
    %c0_22 = arith.constant 0 : index
    %c0_23 = arith.constant 0 : index
    %31 = vector.load %arg8[%c0_20, %c0_21, %c0_22, %c0_23] : memref<2x2x16x32xf32, #tpu.memory_space<vmem>>, vector<1x2x16x32xf32>
    %32 = vector.shape_cast %31 : vector<1x2x16x32xf32> to vector<2x16x32xf32>
    %cst_24 = arith.constant 0.000000e+00 : f32
    %33 = vector.broadcast %cst_24 : f32 to vector<16x32xf32>
    %34 = vector.extract_strided_slice %28 {offsets = [0, 0, 0], sizes = [1, 32, 16], strides = [1, 1, 1]} : vector<6x32x16xf32> to vector<1x32x16xf32>
    %35 = vector.shape_cast %34 : vector<1x32x16xf32> to vector<32x16xf32>
    %cst_25 = arith.constant dense<0.000000e+00> : vector<16x16xf32>
    %36 = tpu.matmul %26, %35, %cst_25 {dimension_numbers = #tpu.dot_dimension_numbers<[1], [0], [0], [1], [0, 0, 1, 1], [], []>} : vector<16x32xf32>, vector<32x16xf32>, vector<16x16xf32> -> vector<16x16xf32>
    %37 = vector.extract_strided_slice %30 {offsets = [0, 0, 0], sizes = [1, 1, 16], strides = [1, 1, 1]} : vector<6x1x16xf32> to vector<1x1x16xf32>
    %38 = vector.shape_cast %37 : vector<1x1x16xf32> to vector<1x16xf32>
    %39 = vector.broadcast %38 : vector<1x16xf32> to vector<16x16xf32>
    %40 = arith.addf %36, %39 : vector<16x16xf32>
    %41 = vector.extract_strided_slice %28 {offsets = [2, 0, 0], sizes = [1, 32, 16], strides = [1, 1, 1]} : vector<6x32x16xf32> to vector<1x32x16xf32>
    %42 = vector.shape_cast %41 : vector<1x32x16xf32> to vector<32x16xf32>
    %cst_26 = arith.constant dense<0.000000e+00> : vector<16x16xf32>
    %43 = tpu.matmul %26, %42, %cst_26 {dimension_numbers = #tpu.dot_dimension_numbers<[1], [0], [0], [1], [0, 0, 1, 1], [], []>} : vector<16x32xf32>, vector<32x16xf32>, vector<16x16xf32> -> vector<16x16xf32>
    %44 = vector.extract_strided_slice %30 {offsets = [2, 0, 0], sizes = [1, 1, 16], strides = [1, 1, 1]} : vector<6x1x16xf32> to vector<1x1x16xf32>
    %45 = vector.shape_cast %44 : vector<1x1x16xf32> to vector<1x16xf32>
    %46 = vector.broadcast %45 : vector<1x16xf32> to vector<16x16xf32>
    %47 = arith.addf %43, %46 : vector<16x16xf32>
    %48 = vector.extract_strided_slice %28 {offsets = [4, 0, 0], sizes = [1, 32, 16], strides = [1, 1, 1]} : vector<6x32x16xf32> to vector<1x32x16xf32>
    %49 = vector.shape_cast %48 : vector<1x32x16xf32> to vector<32x16xf32>
    %cst_27 = arith.constant dense<0.000000e+00> : vector<16x16xf32>
    %50 = tpu.matmul %26, %49, %cst_27 {dimension_numbers = #tpu.dot_dimension_numbers<[1], [0], [0], [1], [0, 0, 1, 1], [], []>} : vector<16x32xf32>, vector<32x16xf32>, vector<16x16xf32> -> vector<16x16xf32>
    %51 = vector.extract_strided_slice %30 {offsets = [4, 0, 0], sizes = [1, 1, 16], strides = [1, 1, 1]} : vector<6x1x16xf32> to vector<1x1x16xf32>
    %52 = vector.shape_cast %51 : vector<1x1x16xf32> to vector<1x16xf32>
    %53 = vector.broadcast %52 : vector<1x16xf32> to vector<16x16xf32>
    %54 = arith.addf %50, %53 : vector<16x16xf32>
    %cst_28 = arith.constant dense<0.000000e+00> : vector<16x16xf32>
    %55 = tpu.matmul %40, %47, %cst_28 {dimension_numbers = #tpu.dot_dimension_numbers<[1], [1], [0], [0], [0, 0, 1, 0], [], []>} : vector<16x16xf32>, vector<16x16xf32>, vector<16x16xf32> -> vector<16x16xf32>
    %cst_29 = arith.constant 2.500000e-01 : f32
    %56 = vector.broadcast %cst_29 : f32 to vector<16x16xf32>
    %57 = arith.mulf %55, %56 : vector<16x16xf32>
    %58 = arith.addf %57, %2 : vector<16x16xf32>
    %cst_30 = arith.constant dense<0xFF800000> : vector<16xf32>
    %59 = vector.multi_reduction <maximumf>, %58, %cst_30 [1] : vector<16x16xf32> to vector<16xf32>
    %60 = vector.shape_cast %59 : vector<16xf32> to vector<16x1xf32>
    %61 = vector.broadcast %60 : vector<16x1xf32> to vector<16x16xf32>
    %62 = arith.subf %58, %61 : vector<16x16xf32>
    %63 = math.exp %62 : vector<16x16xf32>
    %cst_31 = arith.constant dense<0.000000e+00> : vector<16xf32>
    %64 = vector.multi_reduction <add>, %63, %cst_31 [1] : vector<16x16xf32> to vector<16xf32>
    %65 = vector.shape_cast %64 : vector<16xf32> to vector<16x1xf32>
    %66 = tpu.reciprocal %65 {approx = true} : vector<16x1xf32> -> vector<16x1xf32>
    %67 = vector.broadcast %66 : vector<16x1xf32> to vector<16x16xf32>
    %68 = arith.mulf %63, %67 : vector<16x16xf32>
    %cst_32 = arith.constant dense<0.000000e+00> : vector<16x16xf32>
    %69 = tpu.matmul %68, %54, %cst_32 {dimension_numbers = #tpu.dot_dimension_numbers<[1], [0], [0], [1], [0, 0, 1, 1], [], []>} : vector<16x16xf32>, vector<16x16xf32>, vector<16x16xf32> -> vector<16x16xf32>
    %70 = vector.extract_strided_slice %32 {offsets = [0, 0, 0], sizes = [1, 16, 32], strides = [1, 1, 1]} : vector<2x16x32xf32> to vector<1x16x32xf32>
    %71 = vector.shape_cast %70 : vector<1x16x32xf32> to vector<16x32xf32>
    %cst_33 = arith.constant dense<0.000000e+00> : vector<16x32xf32>
    %72 = tpu.matmul %69, %71, %cst_33 {dimension_numbers = #tpu.dot_dimension_numbers<[1], [0], [0], [1], [0, 0, 1, 1], [], []>} : vector<16x16xf32>, vector<16x32xf32>, vector<16x32xf32> -> vector<16x32xf32>
    %73 = arith.addf %33, %72 : vector<16x32xf32>
    %74 = vector.extract_strided_slice %28 {offsets = [1, 0, 0], sizes = [1, 32, 16], strides = [1, 1, 1]} : vector<6x32x16xf32> to vector<1x32x16xf32>
    %75 = vector.shape_cast %74 : vector<1x32x16xf32> to vector<32x16xf32>
    %cst_34 = arith.constant dense<0.000000e+00> : vector<16x16xf32>
    %76 = tpu.matmul %26, %75, %cst_34 {dimension_numbers = #tpu.dot_dimension_numbers<[1], [0], [0], [1], [0, 0, 1, 1], [], []>} : vector<16x32xf32>, vector<32x16xf32>, vector<16x16xf32> -> vector<16x16xf32>
    %77 = vector.extract_strided_slice %30 {offsets = [1, 0, 0], sizes = [1, 1, 16], strides = [1, 1, 1]} : vector<6x1x16xf32> to vector<1x1x16xf32>
    %78 = vector.shape_cast %77 : vector<1x1x16xf32> to vector<1x16xf32>
    %79 = vector.broadcast %78 : vector<1x16xf32> to vector<16x16xf32>
    %80 = arith.addf %76, %79 : vector<16x16xf32>
    %81 = vector.extract_strided_slice %28 {offsets = [3, 0, 0], sizes = [1, 32, 16], strides = [1, 1, 1]} : vector<6x32x16xf32> to vector<1x32x16xf32>
    %82 = vector.shape_cast %81 : vector<1x32x16xf32> to vector<32x16xf32>
    %cst_35 = arith.constant dense<0.000000e+00> : vector<16x16xf32>
    %83 = tpu.matmul %26, %82, %cst_35 {dimension_numbers = #tpu.dot_dimension_numbers<[1], [0], [0], [1], [0, 0, 1, 1], [], []>} : vector<16x32xf32>, vector<32x16xf32>, vector<16x16xf32> -> vector<16x16xf32>
    %84 = vector.extract_strided_slice %30 {offsets = [3, 0, 0], sizes = [1, 1, 16], strides = [1, 1, 1]} : vector<6x1x16xf32> to vector<1x1x16xf32>
    %85 = vector.shape_cast %84 : vector<1x1x16xf32> to vector<1x16xf32>
    %86 = vector.broadcast %85 : vector<1x16xf32> to vector<16x16xf32>
    %87 = arith.addf %83, %86 : vector<16x16xf32>
    %88 = vector.extract_strided_slice %28 {offsets = [5, 0, 0], sizes = [1, 32, 16], strides = [1, 1, 1]} : vector<6x32x16xf32> to vector<1x32x16xf32>
    %89 = vector.shape_cast %88 : vector<1x32x16xf32> to vector<32x16xf32>
    %cst_36 = arith.constant dense<0.000000e+00> : vector<16x16xf32>
    %90 = tpu.matmul %26, %89, %cst_36 {dimension_numbers = #tpu.dot_dimension_numbers<[1], [0], [0], [1], [0, 0, 1, 1], [], []>} : vector<16x32xf32>, vector<32x16xf32>, vector<16x16xf32> -> vector<16x16xf32>
    %91 = vector.extract_strided_slice %30 {offsets = [5, 0, 0], sizes = [1, 1, 16], strides = [1, 1, 1]} : vector<6x1x16xf32> to vector<1x1x16xf32>
    %92 = vector.shape_cast %91 : vector<1x1x16xf32> to vector<1x16xf32>
    %93 = vector.broadcast %92 : vector<1x16xf32> to vector<16x16xf32>
    %94 = arith.addf %90, %93 : vector<16x16xf32>
    %cst_37 = arith.constant dense<0.000000e+00> : vector<16x16xf32>
    %95 = tpu.matmul %80, %87, %cst_37 {dimension_numbers = #tpu.dot_dimension_numbers<[1], [1], [0], [0], [0, 0, 1, 0], [], []>} : vector<16x16xf32>, vector<16x16xf32>, vector<16x16xf32> -> vector<16x16xf32>
    %cst_38 = arith.constant 2.500000e-01 : f32
    %96 = vector.broadcast %cst_38 : f32 to vector<16x16xf32>
    %97 = arith.mulf %95, %96 : vector<16x16xf32>
    %98 = arith.addf %97, %2 : vector<16x16xf32>
    %cst_39 = arith.constant dense<0xFF800000> : vector<16xf32>
    %99 = vector.multi_reduction <maximumf>, %98, %cst_39 [1] : vector<16x16xf32> to vector<16xf32>
    %100 = vector.shape_cast %99 : vector<16xf32> to vector<16x1xf32>
    %101 = vector.broadcast %100 : vector<16x1xf32> to vector<16x16xf32>
    %102 = arith.subf %98, %101 : vector<16x16xf32>
    %103 = math.exp %102 : vector<16x16xf32>
    %cst_40 = arith.constant dense<0.000000e+00> : vector<16xf32>
    %104 = vector.multi_reduction <add>, %103, %cst_40 [1] : vector<16x16xf32> to vector<16xf32>
    %105 = vector.shape_cast %104 : vector<16xf32> to vector<16x1xf32>
    %106 = tpu.reciprocal %105 {approx = true} : vector<16x1xf32> -> vector<16x1xf32>
    %107 = vector.broadcast %106 : vector<16x1xf32> to vector<16x16xf32>
    %108 = arith.mulf %103, %107 : vector<16x16xf32>
    %cst_41 = arith.constant dense<0.000000e+00> : vector<16x16xf32>
    %109 = tpu.matmul %108, %94, %cst_41 {dimension_numbers = #tpu.dot_dimension_numbers<[1], [0], [0], [1], [0, 0, 1, 1], [], []>} : vector<16x16xf32>, vector<16x16xf32>, vector<16x16xf32> -> vector<16x16xf32>
    %110 = vector.extract_strided_slice %32 {offsets = [1, 0, 0], sizes = [1, 16, 32], strides = [1, 1, 1]} : vector<2x16x32xf32> to vector<1x16x32xf32>
    %111 = vector.shape_cast %110 : vector<1x16x32xf32> to vector<16x32xf32>
    %cst_42 = arith.constant dense<0.000000e+00> : vector<16x32xf32>
    %112 = tpu.matmul %109, %111, %cst_42 {dimension_numbers = #tpu.dot_dimension_numbers<[1], [0], [0], [1], [0, 0, 1, 1], [], []>} : vector<16x16xf32>, vector<16x32xf32>, vector<16x32xf32> -> vector<16x32xf32>
    %113 = arith.addf %73, %112 : vector<16x32xf32>
    %c0_43 = arith.constant 0 : index
    %c0_44 = arith.constant 0 : index
    %c0_45 = arith.constant 0 : index
    %114 = vector.load %arg9[%c0_43, %c0_44, %c0_45] : memref<2x1x32xf32, #tpu.memory_space<vmem>>, vector<1x1x32xf32>
    %115 = vector.shape_cast %114 : vector<1x1x32xf32> to vector<1x32xf32>
    %116 = vector.broadcast %115 : vector<1x32xf32> to vector<16x32xf32>
    %117 = arith.addf %113, %116 : vector<16x32xf32>
    %118 = arith.addf %117, %26 : vector<16x32xf32>
    %c0_46 = arith.constant 0 : index
    %c0_47 = arith.constant 0 : index
    %c0_48 = arith.constant 0 : index
    %119 = vector.load %arg10[%c0_46, %c0_47, %c0_48] : memref<2x1x32xf32, #tpu.memory_space<vmem>>, vector<1x1x32xf32>
    %120 = vector.shape_cast %119 : vector<1x1x32xf32> to vector<1x32xf32>
    %c0_49 = arith.constant 0 : index
    %c0_50 = arith.constant 0 : index
    %c0_51 = arith.constant 0 : index
    %121 = vector.load %arg11[%c0_49, %c0_50, %c0_51] : memref<2x1x32xf32, #tpu.memory_space<vmem>>, vector<1x1x32xf32>
    %122 = vector.shape_cast %121 : vector<1x1x32xf32> to vector<1x32xf32>
    %cst_52 = arith.constant dense<0.000000e+00> : vector<16xf32>
    %123 = vector.multi_reduction <add>, %118, %cst_52 [1] : vector<16x32xf32> to vector<16xf32>
    %124 = vector.shape_cast %123 : vector<16xf32> to vector<16x1xf32>
    %cst_53 = arith.constant 3.200000e+01 : f32
    %125 = vector.broadcast %cst_53 : f32 to vector<16x1xf32>
    %126 = arith.divf %124, %125 : vector<16x1xf32>
    %127 = vector.broadcast %126 : vector<16x1xf32> to vector<16x32xf32>
    %128 = arith.subf %118, %127 : vector<16x32xf32>
    %129 = arith.mulf %128, %128 : vector<16x32xf32>
    %cst_54 = arith.constant dense<0.000000e+00> : vector<16xf32>
    %130 = vector.multi_reduction <add>, %129, %cst_54 [1] : vector<16x32xf32> to vector<16xf32>
    %131 = vector.shape_cast %130 : vector<16xf32> to vector<16x1xf32>
    %cst_55 = arith.constant 3.200000e+01 : f32
    %132 = vector.broadcast %cst_55 : f32 to vector<16x1xf32>
    %133 = arith.divf %131, %132 : vector<16x1xf32>
    %134 = vector.broadcast %126 : vector<16x1xf32> to vector<16x32xf32>
    %135 = arith.subf %118, %134 : vector<16x32xf32>
    %cst_56 = arith.constant 9.99999974E-6 : f32
    %136 = vector.broadcast %cst_56 : f32 to vector<16x1xf32>
    %137 = arith.addf %133, %136 : vector<16x1xf32>
    %138 = math.rsqrt %137 : vector<16x1xf32>
    %139 = vector.broadcast %138 : vector<16x1xf32> to vector<16x32xf32>
    %140 = arith.mulf %135, %139 : vector<16x32xf32>
    %141 = vector.broadcast %120 : vector<1x32xf32> to vector<16x32xf32>
    %142 = arith.mulf %140, %141 : vector<16x32xf32>
    %143 = vector.broadcast %122 : vector<1x32xf32> to vector<16x32xf32>
    %144 = arith.addf %142, %143 : vector<16x32xf32>
    %c0_57 = arith.constant 0 : index
    %c0_58 = arith.constant 0 : index
    %c0_59 = arith.constant 0 : index
    %145 = vector.load %arg12[%c0_57, %c0_58, %c0_59] : memref<2x32x64xf32, #tpu.memory_space<vmem>>, vector<1x32x64xf32>
    %146 = vector.shape_cast %145 : vector<1x32x64xf32> to vector<32x64xf32>
    %cst_60 = arith.constant dense<0.000000e+00> : vector<16x64xf32>
    %147 = tpu.matmul %144, %146, %cst_60 {dimension_numbers = #tpu.dot_dimension_numbers<[1], [0], [0], [1], [0, 0, 1, 1], [], []>} : vector<16x32xf32>, vector<32x64xf32>, vector<16x64xf32> -> vector<16x64xf32>
    %c0_61 = arith.constant 0 : index
    %c0_62 = arith.constant 0 : index
    %c0_63 = arith.constant 0 : index
    %148 = vector.load %arg13[%c0_61, %c0_62, %c0_63] : memref<2x1x64xf32, #tpu.memory_space<vmem>>, vector<1x1x64xf32>
    %149 = vector.shape_cast %148 : vector<1x1x64xf32> to vector<1x64xf32>
    %150 = vector.broadcast %149 : vector<1x64xf32> to vector<16x64xf32>
    %151 = arith.addf %147, %150 : vector<16x64xf32>
    %cst_64 = arith.constant 5.000000e-01 : f32
    %152 = vector.broadcast %cst_64 : f32 to vector<16x64xf32>
    %153 = arith.mulf %152, %151 : vector<16x64xf32>
    %cst_65 = arith.constant 0.707106769 : f32
    %154 = vector.broadcast %cst_65 : f32 to vector<16x64xf32>
    %155 = arith.mulf %151, %154 : vector<16x64xf32>
    %156 = math.absf %155 : vector<16x64xf32>
    %cst_66 = arith.constant 0.327591091 : f32
    %157 = vector.broadcast %cst_66 : f32 to vector<16x64xf32>
    %158 = arith.mulf %157, %156 : vector<16x64xf32>
    %cst_67 = arith.constant 1.000000e+00 : f32
    %159 = vector.broadcast %cst_67 : f32 to vector<16x64xf32>
    %160 = arith.addf %159, %158 : vector<16x64xf32>
    %cst_68 = arith.constant 1.000000e+00 : f32
    %161 = vector.broadcast %cst_68 : f32 to vector<16x64xf32>
    %162 = arith.divf %161, %160 : vector<16x64xf32>
    %cst_69 = arith.constant 1.06140542 : f32
    %163 = vector.broadcast %cst_69 : f32 to vector<16x64xf32>
    %164 = arith.mulf %163, %162 : vector<16x64xf32>
    %cst_70 = arith.constant -1.45315206 : f32
    %165 = vector.broadcast %cst_70 : f32 to vector<16x64xf32>
    %166 = arith.addf %164, %165 : vector<16x64xf32>
    %167 = arith.mulf %166, %162 : vector<16x64xf32>
    %cst_71 = arith.constant 1.42141378 : f32
    %168 = vector.broadcast %cst_71 : f32 to vector<16x64xf32>
    %169 = arith.addf %167, %168 : vector<16x64xf32>
    %170 = arith.mulf %169, %162 : vector<16x64xf32>
    %cst_72 = arith.constant -0.284496725 : f32
    %171 = vector.broadcast %cst_72 : f32 to vector<16x64xf32>
    %172 = arith.addf %170, %171 : vector<16x64xf32>
    %173 = arith.mulf %172, %162 : vector<16x64xf32>
    %cst_73 = arith.constant 0.254829586 : f32
    %174 = vector.broadcast %cst_73 : f32 to vector<16x64xf32>
    %175 = arith.addf %173, %174 : vector<16x64xf32>
    %176 = arith.mulf %175, %162 : vector<16x64xf32>
    %177 = arith.mulf %156, %156 : vector<16x64xf32>
    %cst_74 = arith.constant 0.000000e+00 : f32
    %178 = vector.broadcast %cst_74 : f32 to vector<16x64xf32>
    %179 = arith.subf %178, %177 : vector<16x64xf32>
    %180 = math.exp %179 : vector<16x64xf32>
    %181 = arith.mulf %176, %180 : vector<16x64xf32>
    %cst_75 = arith.constant 1.000000e+00 : f32
    %182 = vector.broadcast %cst_75 : f32 to vector<16x64xf32>
    %183 = arith.subf %182, %181 : vector<16x64xf32>
    %cst_76 = arith.constant 0.000000e+00 : f32
    %184 = vector.broadcast %cst_76 : f32 to vector<16x64xf32>
    %185 = arith.cmpf oge, %155, %184 : vector<16x64xf32>
    %cst_77 = arith.constant 0.000000e+00 : f32
    %186 = vector.broadcast %cst_77 : f32 to vector<16x64xf32>
    %187 = arith.subf %186, %183 : vector<16x64xf32>
    %188 = arith.select %185, %183, %187 : vector<16x64xi1>, vector<16x64xf32>
    %cst_78 = arith.constant 1.000000e+00 : f32
    %189 = vector.broadcast %cst_78 : f32 to vector<16x64xf32>
    %190 = arith.addf %189, %188 : vector<16x64xf32>
    %191 = arith.mulf %153, %190 : vector<16x64xf32>
    %c0_79 = arith.constant 0 : index
    %c0_80 = arith.constant 0 : index
    %c0_81 = arith.constant 0 : index
    %192 = vector.load %arg14[%c0_79, %c0_80, %c0_81] : memref<2x64x32xf32, #tpu.memory_space<vmem>>, vector<1x64x32xf32>
    %193 = vector.shape_cast %192 : vector<1x64x32xf32> to vector<64x32xf32>
    %cst_82 = arith.constant dense<0.000000e+00> : vector<16x32xf32>
    %194 = tpu.matmul %191, %193, %cst_82 {dimension_numbers = #tpu.dot_dimension_numbers<[1], [0], [0], [1], [0, 0, 1, 1], [], []>} : vector<16x64xf32>, vector<64x32xf32>, vector<16x32xf32> -> vector<16x32xf32>
    %c0_83 = arith.constant 0 : index
    %c0_84 = arith.constant 0 : index
    %c0_85 = arith.constant 0 : index
    %195 = vector.load %arg15[%c0_83, %c0_84, %c0_85] : memref<2x1x32xf32, #tpu.memory_space<vmem>>, vector<1x1x32xf32>
    %196 = vector.shape_cast %195 : vector<1x1x32xf32> to vector<1x32xf32>
    %197 = vector.broadcast %196 : vector<1x32xf32> to vector<16x32xf32>
    %198 = arith.addf %194, %197 : vector<16x32xf32>
    %199 = arith.addf %198, %144 : vector<16x32xf32>
    %c0_86 = arith.constant 0 : index
    %c0_87 = arith.constant 0 : index
    %c0_88 = arith.constant 0 : index
    %200 = vector.load %arg16[%c0_86, %c0_87, %c0_88] : memref<2x1x32xf32, #tpu.memory_space<vmem>>, vector<1x1x32xf32>
    %201 = vector.shape_cast %200 : vector<1x1x32xf32> to vector<1x32xf32>
    %c0_89 = arith.constant 0 : index
    %c0_90 = arith.constant 0 : index
    %c0_91 = arith.constant 0 : index
    %202 = vector.load %arg17[%c0_89, %c0_90, %c0_91] : memref<2x1x32xf32, #tpu.memory_space<vmem>>, vector<1x1x32xf32>
    %203 = vector.shape_cast %202 : vector<1x1x32xf32> to vector<1x32xf32>
    %cst_92 = arith.constant dense<0.000000e+00> : vector<16xf32>
    %204 = vector.multi_reduction <add>, %199, %cst_92 [1] : vector<16x32xf32> to vector<16xf32>
    %205 = vector.shape_cast %204 : vector<16xf32> to vector<16x1xf32>
    %cst_93 = arith.constant 3.200000e+01 : f32
    %206 = vector.broadcast %cst_93 : f32 to vector<16x1xf32>
    %207 = arith.divf %205, %206 : vector<16x1xf32>
    %208 = vector.broadcast %207 : vector<16x1xf32> to vector<16x32xf32>
    %209 = arith.subf %199, %208 : vector<16x32xf32>
    %210 = arith.mulf %209, %209 : vector<16x32xf32>
    %cst_94 = arith.constant dense<0.000000e+00> : vector<16xf32>
    %211 = vector.multi_reduction <add>, %210, %cst_94 [1] : vector<16x32xf32> to vector<16xf32>
    %212 = vector.shape_cast %211 : vector<16xf32> to vector<16x1xf32>
    %cst_95 = arith.constant 3.200000e+01 : f32
    %213 = vector.broadcast %cst_95 : f32 to vector<16x1xf32>
    %214 = arith.divf %212, %213 : vector<16x1xf32>
    %215 = vector.broadcast %207 : vector<16x1xf32> to vector<16x32xf32>
    %216 = arith.subf %199, %215 : vector<16x32xf32>
    %cst_96 = arith.constant 9.99999974E-6 : f32
    %217 = vector.broadcast %cst_96 : f32 to vector<16x1xf32>
    %218 = arith.addf %214, %217 : vector<16x1xf32>
    %219 = math.rsqrt %218 : vector<16x1xf32>
    %220 = vector.broadcast %219 : vector<16x1xf32> to vector<16x32xf32>
    %221 = arith.mulf %216, %220 : vector<16x32xf32>
    %222 = vector.broadcast %201 : vector<1x32xf32> to vector<16x32xf32>
    %223 = arith.mulf %221, %222 : vector<16x32xf32>
    %224 = vector.broadcast %203 : vector<1x32xf32> to vector<16x32xf32>
    %225 = arith.addf %223, %224 : vector<16x32xf32>
    %c1 = arith.constant 1 : index
    %c0_97 = arith.constant 0 : index
    %c0_98 = arith.constant 0 : index
    %c0_99 = arith.constant 0 : index
    %226 = vector.load %arg6[%c1, %c0_97, %c0_98, %c0_99] : memref<2x6x32x16xf32, #tpu.memory_space<vmem>>, vector<1x6x32x16xf32>
    %227 = vector.shape_cast %226 : vector<1x6x32x16xf32> to vector<6x32x16xf32>
    %c1_100 = arith.constant 1 : index
    %c0_101 = arith.constant 0 : index
    %c0_102 = arith.constant 0 : index
    %c0_103 = arith.constant 0 : index
    %228 = vector.load %arg7[%c1_100, %c0_101, %c0_102, %c0_103] : memref<2x6x1x16xf32, #tpu.memory_space<vmem>>, vector<1x6x1x16xf32>
    %229 = vector.shape_cast %228 : vector<1x6x1x16xf32> to vector<6x1x16xf32>
    %c1_104 = arith.constant 1 : index
    %c0_105 = arith.constant 0 : index
    %c0_106 = arith.constant 0 : index
    %c0_107 = arith.constant 0 : index
    %230 = vector.load %arg8[%c1_104, %c0_105, %c0_106, %c0_107] : memref<2x2x16x32xf32, #tpu.memory_space<vmem>>, vector<1x2x16x32xf32>
    %231 = vector.shape_cast %230 : vector<1x2x16x32xf32> to vector<2x16x32xf32>
    %cst_108 = arith.constant 0.000000e+00 : f32
    %232 = vector.broadcast %cst_108 : f32 to vector<16x32xf32>
    %233 = vector.extract_strided_slice %227 {offsets = [0, 0, 0], sizes = [1, 32, 16], strides = [1, 1, 1]} : vector<6x32x16xf32> to vector<1x32x16xf32>
    %234 = vector.shape_cast %233 : vector<1x32x16xf32> to vector<32x16xf32>
    %cst_109 = arith.constant dense<0.000000e+00> : vector<16x16xf32>
    %235 = tpu.matmul %225, %234, %cst_109 {dimension_numbers = #tpu.dot_dimension_numbers<[1], [0], [0], [1], [0, 0, 1, 1], [], []>} : vector<16x32xf32>, vector<32x16xf32>, vector<16x16xf32> -> vector<16x16xf32>
    %236 = vector.extract_strided_slice %229 {offsets = [0, 0, 0], sizes = [1, 1, 16], strides = [1, 1, 1]} : vector<6x1x16xf32> to vector<1x1x16xf32>
    %237 = vector.shape_cast %236 : vector<1x1x16xf32> to vector<1x16xf32>
    %238 = vector.broadcast %237 : vector<1x16xf32> to vector<16x16xf32>
    %239 = arith.addf %235, %238 : vector<16x16xf32>
    %240 = vector.extract_strided_slice %227 {offsets = [2, 0, 0], sizes = [1, 32, 16], strides = [1, 1, 1]} : vector<6x32x16xf32> to vector<1x32x16xf32>
    %241 = vector.shape_cast %240 : vector<1x32x16xf32> to vector<32x16xf32>
    %cst_110 = arith.constant dense<0.000000e+00> : vector<16x16xf32>
    %242 = tpu.matmul %225, %241, %cst_110 {dimension_numbers = #tpu.dot_dimension_numbers<[1], [0], [0], [1], [0, 0, 1, 1], [], []>} : vector<16x32xf32>, vector<32x16xf32>, vector<16x16xf32> -> vector<16x16xf32>
    %243 = vector.extract_strided_slice %229 {offsets = [2, 0, 0], sizes = [1, 1, 16], strides = [1, 1, 1]} : vector<6x1x16xf32> to vector<1x1x16xf32>
    %244 = vector.shape_cast %243 : vector<1x1x16xf32> to vector<1x16xf32>
    %245 = vector.broadcast %244 : vector<1x16xf32> to vector<16x16xf32>
    %246 = arith.addf %242, %245 : vector<16x16xf32>
    %247 = vector.extract_strided_slice %227 {offsets = [4, 0, 0], sizes = [1, 32, 16], strides = [1, 1, 1]} : vector<6x32x16xf32> to vector<1x32x16xf32>
    %248 = vector.shape_cast %247 : vector<1x32x16xf32> to vector<32x16xf32>
    %cst_111 = arith.constant dense<0.000000e+00> : vector<16x16xf32>
    %249 = tpu.matmul %225, %248, %cst_111 {dimension_numbers = #tpu.dot_dimension_numbers<[1], [0], [0], [1], [0, 0, 1, 1], [], []>} : vector<16x32xf32>, vector<32x16xf32>, vector<16x16xf32> -> vector<16x16xf32>
    %250 = vector.extract_strided_slice %229 {offsets = [4, 0, 0], sizes = [1, 1, 16], strides = [1, 1, 1]} : vector<6x1x16xf32> to vector<1x1x16xf32>
    %251 = vector.shape_cast %250 : vector<1x1x16xf32> to vector<1x16xf32>
    %252 = vector.broadcast %251 : vector<1x16xf32> to vector<16x16xf32>
    %253 = arith.addf %249, %252 : vector<16x16xf32>
    %cst_112 = arith.constant dense<0.000000e+00> : vector<16x16xf32>
    %254 = tpu.matmul %239, %246, %cst_112 {dimension_numbers = #tpu.dot_dimension_numbers<[1], [1], [0], [0], [0, 0, 1, 0], [], []>} : vector<16x16xf32>, vector<16x16xf32>, vector<16x16xf32> -> vector<16x16xf32>
    %cst_113 = arith.constant 2.500000e-01 : f32
    %255 = vector.broadcast %cst_113 : f32 to vector<16x16xf32>
    %256 = arith.mulf %254, %255 : vector<16x16xf32>
    %257 = arith.addf %256, %2 : vector<16x16xf32>
    %cst_114 = arith.constant dense<0xFF800000> : vector<16xf32>
    %258 = vector.multi_reduction <maximumf>, %257, %cst_114 [1] : vector<16x16xf32> to vector<16xf32>
    %259 = vector.shape_cast %258 : vector<16xf32> to vector<16x1xf32>
    %260 = vector.broadcast %259 : vector<16x1xf32> to vector<16x16xf32>
    %261 = arith.subf %257, %260 : vector<16x16xf32>
    %262 = math.exp %261 : vector<16x16xf32>
    %cst_115 = arith.constant dense<0.000000e+00> : vector<16xf32>
    %263 = vector.multi_reduction <add>, %262, %cst_115 [1] : vector<16x16xf32> to vector<16xf32>
    %264 = vector.shape_cast %263 : vector<16xf32> to vector<16x1xf32>
    %265 = tpu.reciprocal %264 {approx = true} : vector<16x1xf32> -> vector<16x1xf32>
    %266 = vector.broadcast %265 : vector<16x1xf32> to vector<16x16xf32>
    %267 = arith.mulf %262, %266 : vector<16x16xf32>
    %cst_116 = arith.constant dense<0.000000e+00> : vector<16x16xf32>
    %268 = tpu.matmul %267, %253, %cst_116 {dimension_numbers = #tpu.dot_dimension_numbers<[1], [0], [0], [1], [0, 0, 1, 1], [], []>} : vector<16x16xf32>, vector<16x16xf32>, vector<16x16xf32> -> vector<16x16xf32>
    %269 = vector.extract_strided_slice %231 {offsets = [0, 0, 0], sizes = [1, 16, 32], strides = [1, 1, 1]} : vector<2x16x32xf32> to vector<1x16x32xf32>
    %270 = vector.shape_cast %269 : vector<1x16x32xf32> to vector<16x32xf32>
    %cst_117 = arith.constant dense<0.000000e+00> : vector<16x32xf32>
    %271 = tpu.matmul %268, %270, %cst_117 {dimension_numbers = #tpu.dot_dimension_numbers<[1], [0], [0], [1], [0, 0, 1, 1], [], []>} : vector<16x16xf32>, vector<16x32xf32>, vector<16x32xf32> -> vector<16x32xf32>
    %272 = arith.addf %232, %271 : vector<16x32xf32>
    %273 = vector.extract_strided_slice %227 {offsets = [1, 0, 0], sizes = [1, 32, 16], strides = [1, 1, 1]} : vector<6x32x16xf32> to vector<1x32x16xf32>
    %274 = vector.shape_cast %273 : vector<1x32x16xf32> to vector<32x16xf32>
    %cst_118 = arith.constant dense<0.000000e+00> : vector<16x16xf32>
    %275 = tpu.matmul %225, %274, %cst_118 {dimension_numbers = #tpu.dot_dimension_numbers<[1], [0], [0], [1], [0, 0, 1, 1], [], []>} : vector<16x32xf32>, vector<32x16xf32>, vector<16x16xf32> -> vector<16x16xf32>
    %276 = vector.extract_strided_slice %229 {offsets = [1, 0, 0], sizes = [1, 1, 16], strides = [1, 1, 1]} : vector<6x1x16xf32> to vector<1x1x16xf32>
    %277 = vector.shape_cast %276 : vector<1x1x16xf32> to vector<1x16xf32>
    %278 = vector.broadcast %277 : vector<1x16xf32> to vector<16x16xf32>
    %279 = arith.addf %275, %278 : vector<16x16xf32>
    %280 = vector.extract_strided_slice %227 {offsets = [3, 0, 0], sizes = [1, 32, 16], strides = [1, 1, 1]} : vector<6x32x16xf32> to vector<1x32x16xf32>
    %281 = vector.shape_cast %280 : vector<1x32x16xf32> to vector<32x16xf32>
    %cst_119 = arith.constant dense<0.000000e+00> : vector<16x16xf32>
    %282 = tpu.matmul %225, %281, %cst_119 {dimension_numbers = #tpu.dot_dimension_numbers<[1], [0], [0], [1], [0, 0, 1, 1], [], []>} : vector<16x32xf32>, vector<32x16xf32>, vector<16x16xf32> -> vector<16x16xf32>
    %283 = vector.extract_strided_slice %229 {offsets = [3, 0, 0], sizes = [1, 1, 16], strides = [1, 1, 1]} : vector<6x1x16xf32> to vector<1x1x16xf32>
    %284 = vector.shape_cast %283 : vector<1x1x16xf32> to vector<1x16xf32>
    %285 = vector.broadcast %284 : vector<1x16xf32> to vector<16x16xf32>
    %286 = arith.addf %282, %285 : vector<16x16xf32>
    %287 = vector.extract_strided_slice %227 {offsets = [5, 0, 0], sizes = [1, 32, 16], strides = [1, 1, 1]} : vector<6x32x16xf32> to vector<1x32x16xf32>
    %288 = vector.shape_cast %287 : vector<1x32x16xf32> to vector<32x16xf32>
    %cst_120 = arith.constant dense<0.000000e+00> : vector<16x16xf32>
    %289 = tpu.matmul %225, %288, %cst_120 {dimension_numbers = #tpu.dot_dimension_numbers<[1], [0], [0], [1], [0, 0, 1, 1], [], []>} : vector<16x32xf32>, vector<32x16xf32>, vector<16x16xf32> -> vector<16x16xf32>
    %290 = vector.extract_strided_slice %229 {offsets = [5, 0, 0], sizes = [1, 1, 16], strides = [1, 1, 1]} : vector<6x1x16xf32> to vector<1x1x16xf32>
    %291 = vector.shape_cast %290 : vector<1x1x16xf32> to vector<1x16xf32>
    %292 = vector.broadcast %291 : vector<1x16xf32> to vector<16x16xf32>
    %293 = arith.addf %289, %292 : vector<16x16xf32>
    %cst_121 = arith.constant dense<0.000000e+00> : vector<16x16xf32>
    %294 = tpu.matmul %279, %286, %cst_121 {dimension_numbers = #tpu.dot_dimension_numbers<[1], [1], [0], [0], [0, 0, 1, 0], [], []>} : vector<16x16xf32>, vector<16x16xf32>, vector<16x16xf32> -> vector<16x16xf32>
    %cst_122 = arith.constant 2.500000e-01 : f32
    %295 = vector.broadcast %cst_122 : f32 to vector<16x16xf32>
    %296 = arith.mulf %294, %295 : vector<16x16xf32>
    %297 = arith.addf %296, %2 : vector<16x16xf32>
    %cst_123 = arith.constant dense<0xFF800000> : vector<16xf32>
    %298 = vector.multi_reduction <maximumf>, %297, %cst_123 [1] : vector<16x16xf32> to vector<16xf32>
    %299 = vector.shape_cast %298 : vector<16xf32> to vector<16x1xf32>
    %300 = vector.broadcast %299 : vector<16x1xf32> to vector<16x16xf32>
    %301 = arith.subf %297, %300 : vector<16x16xf32>
    %302 = math.exp %301 : vector<16x16xf32>
    %cst_124 = arith.constant dense<0.000000e+00> : vector<16xf32>
    %303 = vector.multi_reduction <add>, %302, %cst_124 [1] : vector<16x16xf32> to vector<16xf32>
    %304 = vector.shape_cast %303 : vector<16xf32> to vector<16x1xf32>
    %305 = tpu.reciprocal %304 {approx = true} : vector<16x1xf32> -> vector<16x1xf32>
    %306 = vector.broadcast %305 : vector<16x1xf32> to vector<16x16xf32>
    %307 = arith.mulf %302, %306 : vector<16x16xf32>
    %cst_125 = arith.constant dense<0.000000e+00> : vector<16x16xf32>
    %308 = tpu.matmul %307, %293, %cst_125 {dimension_numbers = #tpu.dot_dimension_numbers<[1], [0], [0], [1], [0, 0, 1, 1], [], []>} : vector<16x16xf32>, vector<16x16xf32>, vector<16x16xf32> -> vector<16x16xf32>
    %309 = vector.extract_strided_slice %231 {offsets = [1, 0, 0], sizes = [1, 16, 32], strides = [1, 1, 1]} : vector<2x16x32xf32> to vector<1x16x32xf32>
    %310 = vector.shape_cast %309 : vector<1x16x32xf32> to vector<16x32xf32>
    %cst_126 = arith.constant dense<0.000000e+00> : vector<16x32xf32>
    %311 = tpu.matmul %308, %310, %cst_126 {dimension_numbers = #tpu.dot_dimension_numbers<[1], [0], [0], [1], [0, 0, 1, 1], [], []>} : vector<16x16xf32>, vector<16x32xf32>, vector<16x32xf32> -> vector<16x32xf32>
    %312 = arith.addf %272, %311 : vector<16x32xf32>
    %c1_127 = arith.constant 1 : index
    %c0_128 = arith.constant 0 : index
    %c0_129 = arith.constant 0 : index
    %313 = vector.load %arg9[%c1_127, %c0_128, %c0_129] : memref<2x1x32xf32, #tpu.memory_space<vmem>>, vector<1x1x32xf32>
    %314 = vector.shape_cast %313 : vector<1x1x32xf32> to vector<1x32xf32>
    %315 = vector.broadcast %314 : vector<1x32xf32> to vector<16x32xf32>
    %316 = arith.addf %312, %315 : vector<16x32xf32>
    %317 = arith.addf %316, %225 : vector<16x32xf32>
    %c1_130 = arith.constant 1 : index
    %c0_131 = arith.constant 0 : index
    %c0_132 = arith.constant 0 : index
    %318 = vector.load %arg10[%c1_130, %c0_131, %c0_132] : memref<2x1x32xf32, #tpu.memory_space<vmem>>, vector<1x1x32xf32>
    %319 = vector.shape_cast %318 : vector<1x1x32xf32> to vector<1x32xf32>
    %c1_133 = arith.constant 1 : index
    %c0_134 = arith.constant 0 : index
    %c0_135 = arith.constant 0 : index
    %320 = vector.load %arg11[%c1_133, %c0_134, %c0_135] : memref<2x1x32xf32, #tpu.memory_space<vmem>>, vector<1x1x32xf32>
    %321 = vector.shape_cast %320 : vector<1x1x32xf32> to vector<1x32xf32>
    %cst_136 = arith.constant dense<0.000000e+00> : vector<16xf32>
    %322 = vector.multi_reduction <add>, %317, %cst_136 [1] : vector<16x32xf32> to vector<16xf32>
    %323 = vector.shape_cast %322 : vector<16xf32> to vector<16x1xf32>
    %cst_137 = arith.constant 3.200000e+01 : f32
    %324 = vector.broadcast %cst_137 : f32 to vector<16x1xf32>
    %325 = arith.divf %323, %324 : vector<16x1xf32>
    %326 = vector.broadcast %325 : vector<16x1xf32> to vector<16x32xf32>
    %327 = arith.subf %317, %326 : vector<16x32xf32>
    %328 = arith.mulf %327, %327 : vector<16x32xf32>
    %cst_138 = arith.constant dense<0.000000e+00> : vector<16xf32>
    %329 = vector.multi_reduction <add>, %328, %cst_138 [1] : vector<16x32xf32> to vector<16xf32>
    %330 = vector.shape_cast %329 : vector<16xf32> to vector<16x1xf32>
    %cst_139 = arith.constant 3.200000e+01 : f32
    %331 = vector.broadcast %cst_139 : f32 to vector<16x1xf32>
    %332 = arith.divf %330, %331 : vector<16x1xf32>
    %333 = vector.broadcast %325 : vector<16x1xf32> to vector<16x32xf32>
    %334 = arith.subf %317, %333 : vector<16x32xf32>
    %cst_140 = arith.constant 9.99999974E-6 : f32
    %335 = vector.broadcast %cst_140 : f32 to vector<16x1xf32>
    %336 = arith.addf %332, %335 : vector<16x1xf32>
    %337 = math.rsqrt %336 : vector<16x1xf32>
    %338 = vector.broadcast %337 : vector<16x1xf32> to vector<16x32xf32>
    %339 = arith.mulf %334, %338 : vector<16x32xf32>
    %340 = vector.broadcast %319 : vector<1x32xf32> to vector<16x32xf32>
    %341 = arith.mulf %339, %340 : vector<16x32xf32>
    %342 = vector.broadcast %321 : vector<1x32xf32> to vector<16x32xf32>
    %343 = arith.addf %341, %342 : vector<16x32xf32>
    %c1_141 = arith.constant 1 : index
    %c0_142 = arith.constant 0 : index
    %c0_143 = arith.constant 0 : index
    %344 = vector.load %arg12[%c1_141, %c0_142, %c0_143] : memref<2x32x64xf32, #tpu.memory_space<vmem>>, vector<1x32x64xf32>
    %345 = vector.shape_cast %344 : vector<1x32x64xf32> to vector<32x64xf32>
    %cst_144 = arith.constant dense<0.000000e+00> : vector<16x64xf32>
    %346 = tpu.matmul %343, %345, %cst_144 {dimension_numbers = #tpu.dot_dimension_numbers<[1], [0], [0], [1], [0, 0, 1, 1], [], []>} : vector<16x32xf32>, vector<32x64xf32>, vector<16x64xf32> -> vector<16x64xf32>
    %c1_145 = arith.constant 1 : index
    %c0_146 = arith.constant 0 : index
    %c0_147 = arith.constant 0 : index
    %347 = vector.load %arg13[%c1_145, %c0_146, %c0_147] : memref<2x1x64xf32, #tpu.memory_space<vmem>>, vector<1x1x64xf32>
    %348 = vector.shape_cast %347 : vector<1x1x64xf32> to vector<1x64xf32>
    %349 = vector.broadcast %348 : vector<1x64xf32> to vector<16x64xf32>
    %350 = arith.addf %346, %349 : vector<16x64xf32>
    %cst_148 = arith.constant 5.000000e-01 : f32
    %351 = vector.broadcast %cst_148 : f32 to vector<16x64xf32>
    %352 = arith.mulf %351, %350 : vector<16x64xf32>
    %cst_149 = arith.constant 0.707106769 : f32
    %353 = vector.broadcast %cst_149 : f32 to vector<16x64xf32>
    %354 = arith.mulf %350, %353 : vector<16x64xf32>
    %355 = math.absf %354 : vector<16x64xf32>
    %cst_150 = arith.constant 0.327591091 : f32
    %356 = vector.broadcast %cst_150 : f32 to vector<16x64xf32>
    %357 = arith.mulf %356, %355 : vector<16x64xf32>
    %cst_151 = arith.constant 1.000000e+00 : f32
    %358 = vector.broadcast %cst_151 : f32 to vector<16x64xf32>
    %359 = arith.addf %358, %357 : vector<16x64xf32>
    %cst_152 = arith.constant 1.000000e+00 : f32
    %360 = vector.broadcast %cst_152 : f32 to vector<16x64xf32>
    %361 = arith.divf %360, %359 : vector<16x64xf32>
    %cst_153 = arith.constant 1.06140542 : f32
    %362 = vector.broadcast %cst_153 : f32 to vector<16x64xf32>
    %363 = arith.mulf %362, %361 : vector<16x64xf32>
    %cst_154 = arith.constant -1.45315206 : f32
    %364 = vector.broadcast %cst_154 : f32 to vector<16x64xf32>
    %365 = arith.addf %363, %364 : vector<16x64xf32>
    %366 = arith.mulf %365, %361 : vector<16x64xf32>
    %cst_155 = arith.constant 1.42141378 : f32
    %367 = vector.broadcast %cst_155 : f32 to vector<16x64xf32>
    %368 = arith.addf %366, %367 : vector<16x64xf32>
    %369 = arith.mulf %368, %361 : vector<16x64xf32>
    %cst_156 = arith.constant -0.284496725 : f32
    %370 = vector.broadcast %cst_156 : f32 to vector<16x64xf32>
    %371 = arith.addf %369, %370 : vector<16x64xf32>
    %372 = arith.mulf %371, %361 : vector<16x64xf32>
    %cst_157 = arith.constant 0.254829586 : f32
    %373 = vector.broadcast %cst_157 : f32 to vector<16x64xf32>
    %374 = arith.addf %372, %373 : vector<16x64xf32>
    %375 = arith.mulf %374, %361 : vector<16x64xf32>
    %376 = arith.mulf %355, %355 : vector<16x64xf32>
    %cst_158 = arith.constant 0.000000e+00 : f32
    %377 = vector.broadcast %cst_158 : f32 to vector<16x64xf32>
    %378 = arith.subf %377, %376 : vector<16x64xf32>
    %379 = math.exp %378 : vector<16x64xf32>
    %380 = arith.mulf %375, %379 : vector<16x64xf32>
    %cst_159 = arith.constant 1.000000e+00 : f32
    %381 = vector.broadcast %cst_159 : f32 to vector<16x64xf32>
    %382 = arith.subf %381, %380 : vector<16x64xf32>
    %cst_160 = arith.constant 0.000000e+00 : f32
    %383 = vector.broadcast %cst_160 : f32 to vector<16x64xf32>
    %384 = arith.cmpf oge, %354, %383 : vector<16x64xf32>
    %cst_161 = arith.constant 0.000000e+00 : f32
    %385 = vector.broadcast %cst_161 : f32 to vector<16x64xf32>
    %386 = arith.subf %385, %382 : vector<16x64xf32>
    %387 = arith.select %384, %382, %386 : vector<16x64xi1>, vector<16x64xf32>
    %cst_162 = arith.constant 1.000000e+00 : f32
    %388 = vector.broadcast %cst_162 : f32 to vector<16x64xf32>
    %389 = arith.addf %388, %387 : vector<16x64xf32>
    %390 = arith.mulf %352, %389 : vector<16x64xf32>
    %c1_163 = arith.constant 1 : index
    %c0_164 = arith.constant 0 : index
    %c0_165 = arith.constant 0 : index
    %391 = vector.load %arg14[%c1_163, %c0_164, %c0_165] : memref<2x64x32xf32, #tpu.memory_space<vmem>>, vector<1x64x32xf32>
    %392 = vector.shape_cast %391 : vector<1x64x32xf32> to vector<64x32xf32>
    %cst_166 = arith.constant dense<0.000000e+00> : vector<16x32xf32>
    %393 = tpu.matmul %390, %392, %cst_166 {dimension_numbers = #tpu.dot_dimension_numbers<[1], [0], [0], [1], [0, 0, 1, 1], [], []>} : vector<16x64xf32>, vector<64x32xf32>, vector<16x32xf32> -> vector<16x32xf32>
    %c1_167 = arith.constant 1 : index
    %c0_168 = arith.constant 0 : index
    %c0_169 = arith.constant 0 : index
    %394 = vector.load %arg15[%c1_167, %c0_168, %c0_169] : memref<2x1x32xf32, #tpu.memory_space<vmem>>, vector<1x1x32xf32>
    %395 = vector.shape_cast %394 : vector<1x1x32xf32> to vector<1x32xf32>
    %396 = vector.broadcast %395 : vector<1x32xf32> to vector<16x32xf32>
    %397 = arith.addf %393, %396 : vector<16x32xf32>
    %398 = arith.addf %397, %343 : vector<16x32xf32>
    %c1_170 = arith.constant 1 : index
    %c0_171 = arith.constant 0 : index
    %c0_172 = arith.constant 0 : index
    %399 = vector.load %arg16[%c1_170, %c0_171, %c0_172] : memref<2x1x32xf32, #tpu.memory_space<vmem>>, vector<1x1x32xf32>
    %400 = vector.shape_cast %399 : vector<1x1x32xf32> to vector<1x32xf32>
    %c1_173 = arith.constant 1 : index
    %c0_174 = arith.constant 0 : index
    %c0_175 = arith.constant 0 : index
    %401 = vector.load %arg17[%c1_173, %c0_174, %c0_175] : memref<2x1x32xf32, #tpu.memory_space<vmem>>, vector<1x1x32xf32>
    %402 = vector.shape_cast %401 : vector<1x1x32xf32> to vector<1x32xf32>
    %cst_176 = arith.constant dense<0.000000e+00> : vector<16xf32>
    %403 = vector.multi_reduction <add>, %398, %cst_176 [1] : vector<16x32xf32> to vector<16xf32>
    %404 = vector.shape_cast %403 : vector<16xf32> to vector<16x1xf32>
    %cst_177 = arith.constant 3.200000e+01 : f32
    %405 = vector.broadcast %cst_177 : f32 to vector<16x1xf32>
    %406 = arith.divf %404, %405 : vector<16x1xf32>
    %407 = vector.broadcast %406 : vector<16x1xf32> to vector<16x32xf32>
    %408 = arith.subf %398, %407 : vector<16x32xf32>
    %409 = arith.mulf %408, %408 : vector<16x32xf32>
    %cst_178 = arith.constant dense<0.000000e+00> : vector<16xf32>
    %410 = vector.multi_reduction <add>, %409, %cst_178 [1] : vector<16x32xf32> to vector<16xf32>
    %411 = vector.shape_cast %410 : vector<16xf32> to vector<16x1xf32>
    %cst_179 = arith.constant 3.200000e+01 : f32
    %412 = vector.broadcast %cst_179 : f32 to vector<16x1xf32>
    %413 = arith.divf %411, %412 : vector<16x1xf32>
    %414 = vector.broadcast %406 : vector<16x1xf32> to vector<16x32xf32>
    %415 = arith.subf %398, %414 : vector<16x32xf32>
    %cst_180 = arith.constant 9.99999974E-6 : f32
    %416 = vector.broadcast %cst_180 : f32 to vector<16x1xf32>
    %417 = arith.addf %413, %416 : vector<16x1xf32>
    %418 = math.rsqrt %417 : vector<16x1xf32>
    %419 = vector.broadcast %418 : vector<16x1xf32> to vector<16x32xf32>
    %420 = arith.mulf %415, %419 : vector<16x32xf32>
    %421 = vector.broadcast %400 : vector<1x32xf32> to vector<16x32xf32>
    %422 = arith.mulf %420, %421 : vector<16x32xf32>
    %423 = vector.broadcast %402 : vector<1x32xf32> to vector<16x32xf32>
    %424 = arith.addf %422, %423 : vector<16x32xf32>
    %c0_181 = arith.constant 0 : index
    %c0_182 = arith.constant 0 : index
    %425 = vector.load %arg3[%c0_181, %c0_182] : memref<2x16xf32, #tpu.memory_space<vmem>>, vector<2x16xf32>
    %cst_183 = arith.constant dense<0.000000e+00> : vector<2x32xf32>
    %426 = tpu.matmul %425, %424, %cst_183 {dimension_numbers = #tpu.dot_dimension_numbers<[1], [0], [0], [1], [0, 0, 1, 1], [], []>} : vector<2x16xf32>, vector<16x32xf32>, vector<2x32xf32> -> vector<2x32xf32>
    %c0_184 = arith.constant 0 : index
    %c0_185 = arith.constant 0 : index
    %427 = vector.load %arg18[%c0_184, %c0_185] : memref<32x256xf32, #tpu.memory_space<vmem>>, vector<32x256xf32>
    %cst_186 = arith.constant dense<0.000000e+00> : vector<2x256xf32>
    %428 = tpu.matmul %426, %427, %cst_186 {dimension_numbers = #tpu.dot_dimension_numbers<[1], [0], [0], [1], [0, 0, 1, 1], [], []>} : vector<2x32xf32>, vector<32x256xf32>, vector<2x256xf32> -> vector<2x256xf32>
    %c0_187 = arith.constant 0 : index
    %c0_188 = arith.constant 0 : index
    %429 = vector.load %arg19[%c0_187, %c0_188] : memref<1x256xf32, #tpu.memory_space<vmem>>, vector<1x256xf32>
    %430 = vector.broadcast %429 : vector<1x256xf32> to vector<2x256xf32>
    %431 = arith.addf %428, %430 : vector<2x256xf32>
    %cst_189 = arith.constant 0.000000e+00 : f32
    %432 = vector.broadcast %cst_189 : f32 to vector<2x256xf32>
    %433 = arith.maximumf %431, %432 : vector<2x256xf32>
    %c0_190 = arith.constant 0 : index
    %c0_191 = arith.constant 0 : index
    %434 = vector.load %arg20[%c0_190, %c0_191] : memref<256x128xf32, #tpu.memory_space<vmem>>, vector<256x128xf32>
    %cst_192 = arith.constant dense<0.000000e+00> : vector<2x128xf32>
    %435 = tpu.matmul %433, %434, %cst_192 {dimension_numbers = #tpu.dot_dimension_numbers<[1], [0], [0], [1], [0, 0, 1, 1], [], []>} : vector<2x256xf32>, vector<256x128xf32>, vector<2x128xf32> -> vector<2x128xf32>
    %c0_193 = arith.constant 0 : index
    %c0_194 = arith.constant 0 : index
    %436 = vector.load %arg21[%c0_193, %c0_194] : memref<1x128xf32, #tpu.memory_space<vmem>>, vector<1x128xf32>
    %437 = vector.broadcast %436 : vector<1x128xf32> to vector<2x128xf32>
    %438 = arith.addf %435, %437 : vector<2x128xf32>
    %c0_195 = arith.constant 0 : index
    %c0_196 = arith.constant 0 : index
    %c0_197 = arith.constant 0 : index
    %439 = vector.load %arg22[%c0_195, %c0_196, %c0_197] : memref<1x2x128xf32, #tpu.memory_space<vmem>>, vector<1x2x128xf32>
    %440 = vector.shape_cast %439 : vector<1x2x128xf32> to vector<2x128xf32>
    %441 = vector.shape_cast %438 : vector<2x128xf32> to vector<1x2x128xf32>
    tpu.vector_store %arg22[%c0_195, %c0_196, %c0_197], %441 {strides = array<i32>} : memref<1x2x128xf32, #tpu.memory_space<vmem>>, vector<1x2x128xf32>,
    return
  }
  func.func @transform_0(%arg0: i32) -> (i32, i32) {
    %c0_i32 = arith.constant 0 : i32
    %c0_i32_0 = arith.constant 0 : i32
    return %arg0, %c0_i32 : i32, i32
  }
  func.func @transform_1(%arg0: i32) -> (i32, i32, i32) {
    %c0_i32 = arith.constant 0 : i32
    %c0_i32_0 = arith.constant 0 : i32
    %c0_i32_1 = arith.constant 0 : i32
    return %arg0, %c0_i32, %c0_i32_0 : i32, i32, i32
  }
  func.func @transform_2(%arg0: i32) -> (i32, i32) {
    %c0_i32 = arith.constant 0 : i32
    %c0_i32_0 = arith.constant 0 : i32
    %c0_i32_1 = arith.constant 0 : i32
    return %c0_i32, %c0_i32_0 : i32, i32
  }
  func.func @transform_3(%arg0: i32) -> (i32, i32) {
    %c0_i32 = arith.constant 0 : i32
    %c0_i32_0 = arith.constant 0 : i32
    %c0_i32_1 = arith.constant 0 : i32
    return %c0_i32, %c0_i32_0 : i32, i32
  }
  func.func @transform_4(%arg0: i32) -> (i32, i32) {
    %c0_i32 = arith.constant 0 : i32
    %c0_i32_0 = arith.constant 0 : i32
    %c0_i32_1 = arith.constant 0 : i32
    return %c0_i32, %c0_i32_0 : i32, i32
  }
  func.func @transform_5(%arg0: i32) -> (i32, i32, i32, i32) {
    %c0_i32 = arith.constant 0 : i32
    %c0_i32_0 = arith.constant 0 : i32
    %c0_i32_1 = arith.constant 0 : i32
    %c0_i32_2 = arith.constant 0 : i32
    %c0_i32_3 = arith.constant 0 : i32
    return %c0_i32, %c0_i32_0, %c0_i32_1, %c0_i32_2 : i32, i32, i32, i32
  }
  func.func @transform_6(%arg0: i32) -> (i32, i32, i32, i32) {
    %c0_i32 = arith.constant 0 : i32
    %c0_i32_0 = arith.constant 0 : i32
    %c0_i32_1 = arith.constant 0 : i32
    %c0_i32_2 = arith.constant 0 : i32
    %c0_i32_3 = arith.constant 0 : i32
    return %c0_i32, %c0_i32_0, %c0_i32_1, %c0_i32_2 : i32, i32, i32, i32
  }
  func.func @transform_7(%arg0: i32) -> (i32, i32, i32, i32) {
    %c0_i32 = arith.constant 0 : i32
    %c0_i32_0 = arith.constant 0 : i32
    %c0_i32_1 = arith.constant 0 : i32
    %c0_i32_2 = arith.constant 0 : i32
    %c0_i32_3 = arith.constant 0 : i32
    return %c0_i32, %c0_i32_0, %c0_i32_1, %c0_i32_2 : i32, i32, i32, i32
  }
  func.func @transform_8(%arg0: i32) -> (i32, i32, i32) {
    %c0_i32 = arith.constant 0 : i32
    %c0_i32_0 = arith.constant 0 : i32
    %c0_i32_1 = arith.constant 0 : i32
    %c0_i32_2 = arith.constant 0 : i32
    return %c0_i32, %c0_i32_0, %c0_i32_1 : i32, i32, i32
  }
  func.func @transform_9(%arg0: i32) -> (i32, i32, i32) {
    %c0_i32 = arith.constant 0 : i32
    %c0_i32_0 = arith.constant 0 : i32
    %c0_i32_1 = arith.constant 0 : i32
    %c0_i32_2 = arith.constant 0 : i32
    return %c0_i32, %c0_i32_0, %c0_i32_1 : i32, i32, i32
  }
  func.func @transform_10(%arg0: i32) -> (i32, i32, i32) {
    %c0_i32 = arith.constant 0 : i32
    %c0_i32_0 = arith.constant 0 : i32
    %c0_i32_1 = arith.constant 0 : i32
    %c0_i32_2 = arith.constant 0 : i32
    return %c0_i32, %c0_i32_0, %c0_i32_1 : i32, i32, i32
  }
  func.func @transform_11(%arg0: i32) -> (i32, i32, i32) {
    %c0_i32 = arith.constant 0 : i32
    %c0_i32_0 = arith.constant 0 : i32
    %c0_i32_1 = arith.constant 0 : i32
    %c0_i32_2 = arith.constant 0 : i32
    return %c0_i32, %c0_i32_0, %c0_i32_1 : i32, i32, i32
  }
  func.func @transform_12(%arg0: i32) -> (i32, i32, i32) {
    %c0_i32 = arith.constant 0 : i32
    %c0_i32_0 = arith.constant 0 : i32
    %c0_i32_1 = arith.constant 0 : i32
    %c0_i32_2 = arith.constant 0 : i32
    return %c0_i32, %c0_i32_0, %c0_i32_1 : i32, i32, i32
  }
  func.func @transform_13(%arg0: i32) -> (i32, i32, i32) {
    %c0_i32 = arith.constant 0 : i32
    %c0_i32_0 = arith.constant 0 : i32
    %c0_i32_1 = arith.constant 0 : i32
    %c0_i32_2 = arith.constant 0 : i32
    return %c0_i32, %c0_i32_0, %c0_i32_1 : i32, i32, i32
  }
  func.func @transform_14(%arg0: i32) -> (i32, i32, i32) {
    %c0_i32 = arith.constant 0 : i32
    %c0_i32_0 = arith.constant 0 : i32
    %c0_i32_1 = arith.constant 0 : i32
    %c0_i32_2 = arith.constant 0 : i32
    return %c0_i32, %c0_i32_0, %c0_i32_1 : i32, i32, i32
  }
  func.func @transform_15(%arg0: i32) -> (i32, i32, i32) {
    %c0_i32 = arith.constant 0 : i32
    %c0_i32_0 = arith.constant 0 : i32
    %c0_i32_1 = arith.constant 0 : i32
    %c0_i32_2 = arith.constant 0 : i32
    return %c0_i32, %c0_i32_0, %c0_i32_1 : i32, i32, i32
  }
  func.func @transform_16(%arg0: i32) -> (i32, i32, i32) {
    %c0_i32 = arith.constant 0 : i32
    %c0_i32_0 = arith.constant 0 : i32
    %c0_i32_1 = arith.constant 0 : i32
    %c0_i32_2 = arith.constant 0 : i32
    return %c0_i32, %c0_i32_0, %c0_i32_1 : i32, i32, i32
  }
  func.func @transform_17(%arg0: i32) -> (i32, i32) {
    %c0_i32 = arith.constant 0 : i32
    %c0_i32_0 = arith.constant 0 : i32
    %c0_i32_1 = arith.constant 0 : i32
    return %c0_i32, %c0_i32_0 : i32, i32
  }
  func.func @transform_18(%arg0: i32) -> (i32, i32) {
    %c0_i32 = arith.constant 0 : i32
    %c0_i32_0 = arith.constant 0 : i32
    %c0_i32_1 = arith.constant 0 : i32
    return %c0_i32, %c0_i32_0 : i32, i32
  }
  func.func @transform_19(%arg0: i32) -> (i32, i32) {
    %c0_i32 = arith.constant 0 : i32
    %c0_i32_0 = arith.constant 0 : i32
    %c0_i32_1 = arith.constant 0 : i32
    return %c0_i32, %c0_i32_0 : i32, i32
  }
  func.func @transform_20(%arg0: i32) -> (i32, i32) {
    %c0_i32 = arith.constant 0 : i32
    %c0_i32_0 = arith.constant 0 : i32
    %c0_i32_1 = arith.constant 0 : i32
    return %c0_i32, %c0_i32_0 : i32, i32
  }
  func.func @transform_21(%arg0: i32) -> (i32, i32, i32) {
    %c0_i32 = arith.constant 0 : i32
    %c0_i32_0 = arith.constant 0 : i32
    %c0_i32_1 = arith.constant 0 : i32
    return %arg0, %c0_i32, %c0_i32_0 : i32, i32, i32
  }
}

</mosaic_0001>

<llo_original>
// kernel: pallas_contrastive_forward.1
$region0: #{pallas_contrastive_forward.1}
  #allocation0 [shape = 'u32[]', space=smem, size = 0x4, offset = 0x4, fixed_abs, tag = 'smem constant byte address 0x4 - core index']
  #allocation1 [shape = 'u32[144,128]{1,0:T(1,128)}', space=vmem, size = 0x12000, scoped, tag = 'internal scratch']
  %s0 = inlined_call_operand.vmem [shape: f32[32,32], index: 0, kind: input, shape index: {}]
  %s1 = inlined_call_operand.vmem [shape: f32[2,16,16], index: 1, kind: input, shape index: {}]
  %s2 = inlined_call_operand.vmem [shape: f32[2,16], index: 2, kind: input, shape index: {}]
  %s3 = inlined_call_operand.vmem [shape: f32[1,32], index: 3, kind: input, shape index: {}]
  %s4 = inlined_call_operand.vmem [shape: f32[1,32], index: 4, kind: input, shape index: {}]
  %s5 = inlined_call_operand.vmem [shape: f32[2,6,32,16], index: 5, kind: input, shape index: {}]
  %s6 = inlined_call_operand.vmem [shape: f32[2,6,1,16], index: 6, kind: input, shape index: {}]
  %s7 = inlined_call_operand.hbm [shape: f32[2,2,16,32], index: 7, kind: input, shape index: {}]
  %s8 = inlined_call_operand.vmem [shape: f32[2,1,32], index: 8, kind: input, shape index: {}, may-alias: {8,10,14,16}]
  %s9 = inlined_call_operand.vmem [shape: f32[2,1,32], index: 9, kind: input, shape index: {}, may-alias: {9,15}]
  %s10 = inlined_call_operand.vmem [shape: f32[2,1,32], index: 10, kind: input, shape index: {}, may-alias: {8,10,14,16}]
  %s11 = inlined_call_operand.hbm [shape: f32[2,32,64], index: 11, kind: input, shape index: {}]
  %s12 = inlined_call_operand.vmem [shape: f32[2,1,64], index: 12, kind: input, shape index: {}]
  %s13 = inlined_call_operand.vmem [shape: f32[2,64,32], index: 13, kind: input, shape index: {}]
  %s14 = inlined_call_operand.vmem [shape: f32[2,1,32], index: 14, kind: input, shape index: {}, may-alias: {8,10,14,16}]
  %s15 = inlined_call_operand.vmem [shape: f32[2,1,32], index: 15, kind: input, shape index: {}, may-alias: {9,15}]
  %s16 = inlined_call_operand.vmem [shape: f32[2,1,32], index: 16, kind: input, shape index: {}, may-alias: {8,10,14,16}]
  %s17 = inlined_call_operand.hbm [shape: f32[32,256], index: 17, kind: input, shape index: {}]
  %s18 = inlined_call_operand.vmem [shape: f32[1,256], index: 18, kind: input, shape index: {}]
  %s19 = inlined_call_operand.hbm [shape: f32[256,128], index: 19, kind: input, shape index: {}]
  %s20 = inlined_call_operand.vmem [shape: f32[1,128], index: 20, kind: input, shape index: {}]
  %s21 = inlined_call_operand.vmem [shape: f32[2,2,128], index: 21, kind: output, shape index: {}]
  %s22 = sld [smem:[#allocation0]]
  $region133: #{pallas_contrastive_forward.1} parent=0
    _
  %s24 = ssub.s32 1, %s22
  %s25 = scalar_select 0, %s24, %s22
  $region1: #{pallas_contrastive_forward.1} parent=0
    #allocation2 [shape = 'u8[32768]{0}', space=vmem, size = 0x8000, scoped, tag = 'input window, operand 7, single buffered']
    #allocation3 [shape = 's32[2]{0}', space=sflag, size = 0x8, scoped, tag = 'scoped memory for pallas_contrastive_forward.1']
    #allocation4 [shape = 'u8[32768]{0}', space=vmem, size = 0x8000, scoped, tag = 'input window, operand 11, single buffered']
    #allocation5 [shape = 's32[1]{0}', space=sflag, size = 0x4, scoped, tag = 'scoped memory for pallas_contrastive_forward.1']
    #allocation6 [shape = 'u8[32768]{0}', space=vmem, size = 0x8000, scoped, tag = 'input window, operand 17, single buffered']
    #allocation7 [shape = 'u8[131072]{0}', space=vmem, size = 0x20000, scoped, tag = 'input window, operand 19, single buffered']
    #allocation8 [shape = 's32[1]{0}', space=sflag, size = 0x4, scoped, tag = 'scoped memory for pallas_contrastive_forward.1']
    %26 = vsyncpa [#allocation3], 0
    %27 = vsyncpa [#allocation5], 0
    %28 = vsyncpa [#allocation8], 0
    loop: start=0, step=1, limit=4
    $region2: #{pallas_contrastive_forward.1} parent=1 // loop_pre_header
      _
    $region3: #{pallas_contrastive_forward.1} parent=1 // loop_header
      %s30 = sphi 0, %s34
      %p31 = scmp.ge.s32.totalorder %s30, 4
      %s40 = sphi 0, %s42
      %s43 = sphi 0, %s40
      %s44 = sphi 0, %s43
      %s60 = sphi 0, %s44
      %s66 = sphi 0, %s68
      %s69 = sphi 0, %s66
      %s70 = sphi 0, %s69
      %s86 = sphi 0, %s70
      %s90 = sphi 0, %s90
      %s92 = sphi 0, %s90
      %s93 = sphi 0, %s92
      %s107 = sphi 0, %s93
      %s111 = sphi 0, %s111
      %s113 = sphi 0, %s111
      %s114 = sphi 0, %s113
      %s128 = sphi 0, %s114
      %s132 = sphi 0, %s132
      %s134 = sphi 0, %s132
      %s135 = sphi 0, %s134
      %s149 = sphi 0, %s135
      %s153 = sphi 0, %s153
      %s155 = sphi 0, %s153
      %s156 = sphi 0, %s155
      %s170 = sphi 0, %s156
      %s174 = sphi 0, %s174
      %s176 = sphi 0, %s174
      %s177 = sphi 0, %s176
      %s191 = sphi 0, %s177
      %s195 = sphi 0, %s195
      %s197 = sphi 0, %s195
      %s198 = sphi 0, %s197
      %s212 = sphi 0, %s198
      %s216 = sphi 0, %s216
      %s218 = sphi 0, %s216
      %s219 = sphi 0, %s218
      %s233 = sphi 0, %s219
      %s237 = sphi 0, %s237
      %s239 = sphi 0, %s237
      %s240 = sphi 0, %s239
      %s254 = sphi 0, %s240
      %s258 = sphi 0, %s258
      %s260 = sphi 0, %s258
      %s261 = sphi 0, %s260
      %s275 = sphi 0, %s261
      %s279 = sphi 0, %s279
      %s281 = sphi 0, %s279
      %s282 = sphi 0, %s281
      %s296 = sphi 0, %s282
      %s300 = sphi 0, %s300
      %s302 = sphi 0, %s300
      %s303 = sphi 0, %s302
      %s317 = sphi 0, %s303
      %s321 = sphi 0, %s321
      %s323 = sphi 0, %s321
      %s324 = sphi 0, %s323
      %s338 = sphi 0, %s324
      %s342 = sphi 0, %s342
      %s344 = sphi 0, %s342
      %s345 = sphi 0, %s344
      %s359 = sphi 0, %s345
      %s363 = sphi 0, %s363
      %s365 = sphi 0, %s363
      %s366 = sphi 0, %s365
      %s380 = sphi 0, %s366
      %s384 = sphi 0, %s384
      %s386 = sphi 0, %s384
      %s387 = sphi 0, %s386
      %s401 = sphi 0, %s387
      %s405 = sphi 0, %s405
      %s407 = sphi 0, %s405
      %s408 = sphi 0, %s407
      %s422 = sphi 0, %s408
      %s426 = sphi 0, %s426
      %s428 = sphi 0, %s426
      %s429 = sphi 0, %s428
      %s443 = sphi 0, %s429
      %s447 = sphi 0, %s447
      %s449 = sphi 0, %s447
      %s450 = sphi 0, %s449
      %s464 = sphi 0, %s450
      %s468 = sphi 0, %s468
      %s470 = sphi 0, %s468
      %s471 = sphi 0, %s470
      %s485 = sphi 0, %s471
      %s491 = sphi 0, %s493
      %s494 = sphi 0, %s491
      %s495 = sphi 0, %s494
      %s511 = sphi 0, %s495
    $region4: #{pallas_contrastive_forward.1} parent=1 // loop_header_branch
      %33 = sbr.rel (%p31) target = $region8
    $region5: #{pallas_contrastive_forward.1} parent=1 // loop_body
      %s35 = ssub.s32 %s30, 1
      %s36 = ssub.s32 %s30, 2
      %s37 = sadd.s32 %s30, 1
      %s38 = ssub.s32 %s30, %s37
      %p39 = scmp.eq.s32.totalorder %s38, 0
      %s41 = sadd.s32 %s40, 1
      %s42 = scalar_select %p39, %s40, %s41
      %p45 = pneg %p39
      %p46 = scmp.eq.s32.totalorder %s30, 1
      %p47 = por %p45, %p46
      %p48 = scmp.ne.s32.totalorder %s40, %s43
      %p49 = scmp.eq.s32.totalorder %s30, 0
      %p50 = por %p48, %p49
      %p51 = scmp.ne.s32.totalorder %s40, %s43
      %p52 = scmp.eq.s32.totalorder %s35, 1
      %p53 = por %p51, %p52
      %p54 = scmp.ne.s32.totalorder %s43, %s44
      %p55 = scmp.eq.s32.totalorder %s35, 0
      %p56 = por %p54, %p55
      %p57 = scmp.ne.s32.totalorder %s43, %s44
      %p58 = scmp.eq.s32.totalorder %s36, 1
      %p59 = por %p57, %p58
      %p61 = scmp.ne.s32.totalorder %s44, %s60
      %p62 = scmp.eq.s32.totalorder %s36, 0
      %p63 = por %p61, %p62
      %s64 = ssub.s32 %s30, %s37
      %p65 = scmp.eq.s32.totalorder %s64, 0
      %s67 = sadd.s32 %s66, 1
      %s68 = scalar_select %p65, %s66, %s67
      %p71 = pneg %p65
      %p72 = scmp.eq.s32.totalorder %s30, 1
      %p73 = por %p71, %p72
      %p74 = scmp.ne.s32.totalorder %s66, %s69
      %p75 = scmp.eq.s32.totalorder %s30, 0
      %p76 = por %p74, %p75
      %p77 = scmp.ne.s32.totalorder %s66, %s69
      %p78 = scmp.eq.s32.totalorder %s35, 1
      %p79 = por %p77, %p78
      %p80 = scmp.ne.s32.totalorder %s69, %s70
      %p81 = scmp.eq.s32.totalorder %s35, 0
      %p82 = por %p80, %p81
      %p83 = scmp.ne.s32.totalorder %s69, %s70
      %p84 = scmp.eq.s32.totalorder %s36, 1
      %p85 = por %p83, %p84
      %p87 = scmp.ne.s32.totalorder %s70, %s86
      %p88 = scmp.eq.s32.totalorder %s36, 0
      %p89 = por %p87, %p88
      %s91 = sadd.s32 %s90, 1
      %p94 = scmp.eq.s32.totalorder %s30, 1
      %p95 = scmp.ne.s32.totalorder %s90, %s92
      %p96 = scmp.eq.s32.totalorder %s30, 0
      %p97 = por %p95, %p96
      %p98 = scmp.ne.s32.totalorder %s90, %s92
      %p99 = scmp.eq.s32.totalorder %s35, 1
      %p100 = por %p98, %p99
      %p101 = scmp.ne.s32.totalorder %s92, %s93
      %p102 = scmp.eq.s32.totalorder %s35, 0
      %p103 = por %p101, %p102
      %p104 = scmp.ne.s32.totalorder %s92, %s93
      %p105 = scmp.eq.s32.totalorder %s36, 1
      %p106 = por %p104, %p105
      %p108 = scmp.ne.s32.totalorder %s93, %s107
      %p109 = scmp.eq.s32.totalorder %s36, 0
      %p110 = por %p108, %p109
      %s112 = sadd.s32 %s111, 1
      %p115 = scmp.eq.s32.totalorder %s30, 1
      %p116 = scmp.ne.s32.totalorder %s111, %s113
      %p117 = scmp.eq.s32.totalorder %s30, 0
      %p118 = por %p116, %p117
      %p119 = scmp.ne.s32.totalorder %s111, %s113
      %p120 = scmp.eq.s32.totalorder %s35, 1
      %p121 = por %p119, %p120
      %p122 = scmp.ne.s32.totalorder %s113, %s114
      %p123 = scmp.eq.s32.totalorder %s35, 0
      %p124 = por %p122, %p123
      %p125 = scmp.ne.s32.totalorder %s113, %s114
      %p126 = scmp.eq.s32.totalorder %s36, 1
      %p127 = por %p125, %p126
      %p129 = scmp.ne.s32.totalorder %s114, %s128
      %p130 = scmp.eq.s32.totalorder %s36, 0
      %p131 = por %p129, %p130
      %s133 = sadd.s32 %s132, 1
      %p136 = scmp.eq.s32.totalorder %s30, 1
      %p137 = scmp.ne.s32.totalorder %s132, %s134
      %p138 = scmp.eq.s32.totalorder %s30, 0
      %p139 = por %p137, %p138
      %p140 = scmp.ne.s32.totalorder %s132, %s134
      %p141 = scmp.eq.s32.totalorder %s35, 1
      %p142 = por %p140, %p141
      %p143 = scmp.ne.s32.totalorder %s134, %s135
      %p144 = scmp.eq.s32.totalorder %s35, 0
      %p145 = por %p143, %p144
      %p146 = scmp.ne.s32.totalorder %s134, %s135
      %p147 = scmp.eq.s32.totalorder %s36, 1
      %p148 = por %p146, %p147
      %p150 = scmp.ne.s32.totalorder %s135, %s149
      %p151 = scmp.eq.s32.totalorder %s36, 0
      %p152 = por %p150, %p151
      %s154 = sadd.s32 %s153, 1
      %p157 = scmp.eq.s32.totalorder %s30, 1
      %p158 = scmp.ne.s32.totalorder %s153, %s155
      %p159 = scmp.eq.s32.totalorder %s30, 0
      %p160 = por %p158, %p159
      %p161 = scmp.ne.s32.totalorder %s153, %s155
      %p162 = scmp.eq.s32.totalorder %s35, 1
      %p163 = por %p161, %p162
      %p164 = scmp.ne.s32.totalorder %s155, %s156
      %p165 = scmp.eq.s32.totalorder %s35, 0
      %p166 = por %p164, %p165
      %p167 = scmp.ne.s32.totalorder %s155, %s156
      %p168 = scmp.eq.s32.totalorder %s36, 1
      %p169 = por %p167, %p168
      %p171 = scmp.ne.s32.totalorder %s156, %s170
      %p172 = scmp.eq.s32.totalorder %s36, 0
      %p173 = por %p171, %p172
      %s175 = sadd.s32 %s174, 1
      %p178 = scmp.eq.s32.totalorder %s30, 1
      %p179 = scmp.ne.s32.totalorder %s174, %s176
      %p180 = scmp.eq.s32.totalorder %s30, 0
      %p181 = por %p179, %p180
      %p182 = scmp.ne.s32.totalorder %s174, %s176
      %p183 = scmp.eq.s32.totalorder %s35, 1
      %p184 = por %p182, %p183
      %p185 = scmp.ne.s32.totalorder %s176, %s177
      %p186 = scmp.eq.s32.totalorder %s35, 0
      %p187 = por %p185, %p186
      %p188 = scmp.ne.s32.totalorder %s176, %s177
      %p189 = scmp.eq.s32.totalorder %s36, 1
      %p190 = por %p188, %p189
      %p192 = scmp.ne.s32.totalorder %s177, %s191
      %p193 = scmp.eq.s32.totalorder %s36, 0
      %p194 = por %p192, %p193
      %s196 = sadd.s32 %s195, 1
      %p199 = scmp.eq.s32.totalorder %s30, 1
      %p200 = scmp.ne.s32.totalorder %s195, %s197
      %p201 = scmp.eq.s32.totalorder %s30, 0
      %p202 = por %p200, %p201
      %p203 = scmp.ne.s32.totalorder %s195, %s197
      %p204 = scmp.eq.s32.totalorder %s35, 1
      %p205 = por %p203, %p204
      %p206 = scmp.ne.s32.totalorder %s197, %s198
      %p207 = scmp.eq.s32.totalorder %s35, 0
      %p208 = por %p206, %p207
      %p209 = scmp.ne.s32.totalorder %s197, %s198
      %p210 = scmp.eq.s32.totalorder %s36, 1
      %p211 = por %p209, %p210
      %p213 = scmp.ne.s32.totalorder %s198, %s212
      %p214 = scmp.eq.s32.totalorder %s36, 0
      %p215 = por %p213, %p214
      %s217 = sadd.s32 %s216, 1
      %p220 = scmp.eq.s32.totalorder %s30, 1
      %p221 = scmp.ne.s32.totalorder %s216, %s218
      %p222 = scmp.eq.s32.totalorder %s30, 0
      %p223 = por %p221, %p222
      %p224 = scmp.ne.s32.totalorder %s216, %s218
      %p225 = scmp.eq.s32.totalorder %s35, 1
      %p226 = por %p224, %p225
      %p227 = scmp.ne.s32.totalorder %s218, %s219
      %p228 = scmp.eq.s32.totalorder %s35, 0
      %p229 = por %p227, %p228
      %p230 = scmp.ne.s32.totalorder %s218, %s219
      %p231 = scmp.eq.s32.totalorder %s36, 1
      %p232 = por %p230, %p231
      %p234 = scmp.ne.s32.totalorder %s219, %s233
      %p235 = scmp.eq.s32.totalorder %s36, 0
      %p236 = por %p234, %p235
      %s238 = sadd.s32 %s237, 1
      %p241 = scmp.eq.s32.totalorder %s30, 1
      %p242 = scmp.ne.s32.totalorder %s237, %s239
      %p243 = scmp.eq.s32.totalorder %s30, 0
      %p244 = por %p242, %p243
      %p245 = scmp.ne.s32.totalorder %s237, %s239
      %p246 = scmp.eq.s32.totalorder %s35, 1
      %p247 = por %p245, %p246
      %p248 = scmp.ne.s32.totalorder %s239, %s240
      %p249 = scmp.eq.s32.totalorder %s35, 0
      %p250 = por %p248, %p249
      %p251 = scmp.ne.s32.totalorder %s239, %s240
      %p252 = scmp.eq.s32.totalorder %s36, 1
      %p253 = por %p251, %p252
      %p255 = scmp.ne.s32.totalorder %s240, %s254
      %p256 = scmp.eq.s32.totalorder %s36, 0
      %p257 = por %p255, %p256
      %s259 = sadd.s32 %s258, 1
      %p262 = scmp.eq.s32.totalorder %s30, 1
      %p263 = scmp.ne.s32.totalorder %s258, %s260
      %p264 = scmp.eq.s32.totalorder %s30, 0
      %p265 = por %p263, %p264
      %p266 = scmp.ne.s32.totalorder %s258, %s260
      %p267 = scmp.eq.s32.totalorder %s35, 1
      %p268 = por %p266, %p267
      %p269 = scmp.ne.s32.totalorder %s260, %s261
      %p270 = scmp.eq.s32.totalorder %s35, 0
      %p271 = por %p269, %p270
      %p272 = scmp.ne.s32.totalorder %s260, %s261
      %p273 = scmp.eq.s32.totalorder %s36, 1
      %p274 = por %p272, %p273
      %p276 = scmp.ne.s32.totalorder %s261, %s275
      %p277 = scmp.eq.s32.totalorder %s36, 0
      %p278 = por %p276, %p277
      %s280 = sadd.s32 %s279, 1
      %p283 = scmp.eq.s32.totalorder %s30, 1
      %p284 = scmp.ne.s32.totalorder %s279, %s281
      %p285 = scmp.eq.s32.totalorder %s30, 0
      %p286 = por %p284, %p285
      %p287 = scmp.ne.s32.totalorder %s279, %s281
      %p288 = scmp.eq.s32.totalorder %s35, 1
      %p289 = por %p287, %p288
      %p290 = scmp.ne.s32.totalorder %s281, %s282
      %p291 = scmp.eq.s32.totalorder %s35, 0
      %p292 = por %p290, %p291
      %p293 = scmp.ne.s32.totalorder %s281, %s282
      %p294 = scmp.eq.s32.totalorder %s36, 1
      %p295 = por %p293, %p294
      %p297 = scmp.ne.s32.totalorder %s282, %s296
      %p298 = scmp.eq.s32.totalorder %s36, 0
      %p299 = por %p297, %p298
      %s301 = sadd.s32 %s300, 1
      %p304 = scmp.eq.s32.totalorder %s30, 1
      %p305 = scmp.ne.s32.totalorder %s300, %s302
      %p306 = scmp.eq.s32.totalorder %s30, 0
      %p307 = por %p305, %p306
      %p308 = scmp.ne.s32.totalorder %s300, %s302
      %p309 = scmp.eq.s32.totalorder %s35, 1
      %p310 = por %p308, %p309
      %p311 = scmp.ne.s32.totalorder %s302, %s303
      %p312 = scmp.eq.s32.totalorder %s35, 0
      %p313 = por %p311, %p312
      %p314 = scmp.ne.s32.totalorder %s302, %s303
      %p315 = scmp.eq.s32.totalorder %s36, 1
      %p316 = por %p314, %p315
      %p318 = scmp.ne.s32.totalorder %s303, %s317
      %p319 = scmp.eq.s32.totalorder %s36, 0
      %p320 = por %p318, %p319
      %s322 = sadd.s32 %s321, 1
      %p325 = scmp.eq.s32.totalorder %s30, 1
      %p326 = scmp.ne.s32.totalorder %s321, %s323
      %p327 = scmp.eq.s32.totalorder %s30, 0
      %p328 = por %p326, %p327
      %p329 = scmp.ne.s32.totalorder %s321, %s323
      %p330 = scmp.eq.s32.totalorder %s35, 1
      %p331 = por %p329, %p330
      %p332 = scmp.ne.s32.totalorder %s323, %s324
      %p333 = scmp.eq.s32.totalorder %s35, 0
      %p334 = por %p332, %p333
      %p335 = scmp.ne.s32.totalorder %s323, %s324
      %p336 = scmp.eq.s32.totalorder %s36, 1
      %p337 = por %p335, %p336
      %p339 = scmp.ne.s32.totalorder %s324, %s338
      %p340 = scmp.eq.s32.totalorder %s36, 0
      %p341 = por %p339, %p340
      %s343 = sadd.s32 %s342, 1
      %p346 = scmp.eq.s32.totalorder %s30, 1
      %p347 = scmp.ne.s32.totalorder %s342, %s344
      %p348 = scmp.eq.s32.totalorder %s30, 0
      %p349 = por %p347, %p348
      %p350 = scmp.ne.s32.totalorder %s342, %s344
      %p351 = scmp.eq.s32.totalorder %s35, 1
      %p352 = por %p350, %p351
      %p353 = scmp.ne.s32.totalorder %s344, %s345
      %p354 = scmp.eq.s32.totalorder %s35, 0
      %p355 = por %p353, %p354
      %p356 = scmp.ne.s32.totalorder %s344, %s345
      %p357 = scmp.eq.s32.totalorder %s36, 1
      %p358 = por %p356, %p357
      %p360 = scmp.ne.s32.totalorder %s345, %s359
      %p361 = scmp.eq.s32.totalorder %s36, 0
      %p362 = por %p360, %p361
      %s364 = sadd.s32 %s363, 1
      %p367 = scmp.eq.s32.totalorder %s30, 1
      %p368 = scmp.ne.s32.totalorder %s363, %s365
      %p369 = scmp.eq.s32.totalorder %s30, 0
      %p370 = por %p368, %p369
      %p371 = scmp.ne.s32.totalorder %s363, %s365
      %p372 = scmp.eq.s32.totalorder %s35, 1
      %p373 = por %p371, %p372
      %p374 = scmp.ne.s32.totalorder %s365, %s366
      %p375 = scmp.eq.s32.totalorder %s35, 0
      %p376 = por %p374, %p375
      %p377 = scmp.ne.s32.totalorder %s365, %s366
      %p378 = scmp.eq.s32.totalorder %s36, 1
      %p379 = por %p377, %p378
      %p381 = scmp.ne.s32.totalorder %s366, %s380
      %p382 = scmp.eq.s32.totalorder %s36, 0
      %p383 = por %p381, %p382
      %s385 = sadd.s32 %s384, 1
      %p388 = scmp.eq.s32.totalorder %s30, 1
      %p389 = scmp.ne.s32.totalorder %s384, %s386
      %p390 = scmp.eq.s32.totalorder %s30, 0
      %p391 = por %p389, %p390
      %p392 = scmp.ne.s32.totalorder %s384, %s386
      %p393 = scmp.eq.s32.totalorder %s35, 1
      %p394 = por %p392, %p393
      %p395 = scmp.ne.s32.totalorder %s386, %s387
      %p396 = scmp.eq.s32.totalorder %s35, 0
      %p397 = por %p395, %p396
      %p398 = scmp.ne.s32.totalorder %s386, %s387
      %p399 = scmp.eq.s32.totalorder %s36, 1
      %p400 = por %p398, %p399
      %p402 = scmp.ne.s32.totalorder %s387, %s401
      %p403 = scmp.eq.s32.totalorder %s36, 0
      %p404 = por %p402, %p403
      %s406 = sadd.s32 %s405, 1
      %p409 = scmp.eq.s32.totalorder %s30, 1
      %p410 = scmp.ne.s32.totalorder %s405, %s407
      %p411 = scmp.eq.s32.totalorder %s30, 0
      %p412 = por %p410, %p411
      %p413 = scmp.ne.s32.totalorder %s405, %s407
      %p414 = scmp.eq.s32.totalorder %s35, 1
      %p415 = por %p413, %p414
      %p416 = scmp.ne.s32.totalorder %s407, %s408
      %p417 = scmp.eq.s32.totalorder %s35, 0
      %p418 = por %p416, %p417
      %p419 = scmp.ne.s32.totalorder %s407, %s408
      %p420 = scmp.eq.s32.totalorder %s36, 1
      %p421 = por %p419, %p420
      %p423 = scmp.ne.s32.totalorder %s408, %s422
      %p424 = scmp.eq.s32.totalorder %s36, 0
      %p425 = por %p423, %p424
      %s427 = sadd.s32 %s426, 1
      %p430 = scmp.eq.s32.totalorder %s30, 1
      %p431 = scmp.ne.s32.totalorder %s426, %s428
      %p432 = scmp.eq.s32.totalorder %s30, 0
      %p433 = por %p431, %p432
      %p434 = scmp.ne.s32.totalorder %s426, %s428
      %p435 = scmp.eq.s32.totalorder %s35, 1
      %p436 = por %p434, %p435
      %p437 = scmp.ne.s32.totalorder %s428, %s429
      %p438 = scmp.eq.s32.totalorder %s35, 0
      %p439 = por %p437, %p438
      %p440 = scmp.ne.s32.totalorder %s428, %s429
      %p441 = scmp.eq.s32.totalorder %s36, 1
      %p442 = por %p440, %p441
      %p444 = scmp.ne.s32.totalorder %s429, %s443
      %p445 = scmp.eq.s32.totalorder %s36, 0
      %p446 = por %p444, %p445
      %s448 = sadd.s32 %s447, 1
      %p451 = scmp.eq.s32.totalorder %s30, 1
      %p452 = scmp.ne.s32.totalorder %s447, %s449
      %p453 = scmp.eq.s32.totalorder %s30, 0
      %p454 = por %p452, %p453
      %p455 = scmp.ne.s32.totalorder %s447, %s449
      %p456 = scmp.eq.s32.totalorder %s35, 1
      %p457 = por %p455, %p456
      %p458 = scmp.ne.s32.totalorder %s449, %s450
      %p459 = scmp.eq.s32.totalorder %s35, 0
      %p460 = por %p458, %p459
      %p461 = scmp.ne.s32.totalorder %s449, %s450
      %p462 = scmp.eq.s32.totalorder %s36, 1
      %p463 = por %p461, %p462
      %p465 = scmp.ne.s32.totalorder %s450, %s464
      %p466 = scmp.eq.s32.totalorder %s36, 0
      %p467 = por %p465, %p466
      %s469 = sadd.s32 %s468, 1
      %p472 = scmp.eq.s32.totalorder %s30, 1
      %p473 = scmp.ne.s32.totalorder %s468, %s470
      %p474 = scmp.eq.s32.totalorder %s30, 0
      %p475 = por %p473, %p474
      %p476 = scmp.ne.s32.totalorder %s468, %s470
      %p477 = scmp.eq.s32.totalorder %s35, 1
      %p478 = por %p476, %p477
      %p479 = scmp.ne.s32.totalorder %s470, %s471
      %p480 = scmp.eq.s32.totalorder %s35, 0
      %p481 = por %p479, %p480
      %p482 = scmp.ne.s32.totalorder %s470, %s471
      %p483 = scmp.eq.s32.totalorder %s36, 1
      %p484 = por %p482, %p483
      %p486 = scmp.ne.s32.totalorder %s471, %s485
      %p487 = scmp.eq.s32.totalorder %s36, 0
      %p488 = por %p486, %p487
      %s489 = ssub.s32 %s30, %s37
      %p490 = scmp.eq.s32.totalorder %s489, 0
      %s492 = sadd.s32 %s491, 1
      %s493 = scalar_select %p490, %s491, %s492
      %p496 = pneg %p490
      %p497 = scmp.eq.s32.totalorder %s30, 1
      %p498 = por %p496, %p497
      %p499 = scmp.ne.s32.totalorder %s491, %s494
      %p500 = scmp.eq.s32.totalorder %s30, 0
      %p501 = por %p499, %p500
      %p502 = scmp.ne.s32.totalorder %s491, %s494
      %p503 = scmp.eq.s32.totalorder %s35, 1
      %p504 = por %p502, %p503
      %p505 = scmp.ne.s32.totalorder %s494, %s495
      %p506 = scmp.eq.s32.totalorder %s35, 0
      %p507 = por %p505, %p506
      %p508 = scmp.ne.s32.totalorder %s494, %s495
      %p509 = scmp.eq.s32.totalorder %s36, 1
      %p510 = por %p508, %p509
      %p512 = scmp.ne.s32.totalorder %s495, %s511
      %p513 = scmp.eq.s32.totalorder %s36, 0
      %p514 = por %p512, %p513
      %p515 = scmp.le.s32.totalorder 1, %s30
      %p516 = scmp.lt.s32.totalorder %s30, 3
      %p517 = pnand %p515, %p516
      %p518 = pneg %p517
      // Predicated region
      $region9: #{pallas_contrastive_forward.1} parent=5 // pred_check
        _
      $region10: #{pallas_contrastive_forward.1} parent=5 // pred_check_branch
        %520 = sbr.rel (%p517) target = $region12
      $region11: #{pallas_contrastive_forward.1} parent=5 // pred_region
        %s521 = ssub.s32 %s30, 1
        // Predicated region
        $region13: #{pallas_contrastive_forward.1} parent=11 // pred_check
          %p522 = pneg %p103
        $region14: #{pallas_contrastive_forward.1} parent=11 // pred_check_branch
          %524 = sbr.rel (%p522) target = $region16
        $region15: #{pallas_contrastive_forward.1} parent=11 // pred_region
          _
        $region16: #{pallas_contrastive_forward.1} parent=11 // pred_fallthru
          _
        // Predicated region
        $region17: #{pallas_contrastive_forward.1} parent=11 // pred_check
          %p525 = pneg %p124
        $region18: #{pallas_contrastive_forward.1} parent=11 // pred_check_branch
          %527 = sbr.rel (%p525) target = $region20
        $region19: #{pallas_contrastive_forward.1} parent=11 // pred_region
          _
        $region20: #{pallas_contrastive_forward.1} parent=11 // pred_fallthru
          _
        // Predicated region
        $region21: #{pallas_contrastive_forward.1} parent=11 // pred_check
          %p528 = pneg %p145
        $region22: #{pallas_contrastive_forward.1} parent=11 // pred_check_branch
          %530 = sbr.rel (%p528) target = $region24
        $region23: #{pallas_contrastive_forward.1} parent=11 // pred_region
          _
        $region24: #{pallas_contrastive_forward.1} parent=11 // pred_fallthru
          _
        // Predicated region
        $region25: #{pallas_contrastive_forward.1} parent=11 // pred_check
          %p531 = pneg %p166
        $region26: #{pallas_contrastive_forward.1} parent=11 // pred_check_branch
          %533 = sbr.rel (%p531) target = $region28
        $region27: #{pallas_contrastive_forward.1} parent=11 // pred_region
          _
        $region28: #{pallas_contrastive_forward.1} parent=11 // pred_fallthru
          _
        // Predicated region
        $region29: #{pallas_contrastive_forward.1} parent=11 // pred_check
          %p534 = pneg %p187
        $region30: #{pallas_contrastive_forward.1} parent=11 // pred_check_branch
          %536 = sbr.rel (%p534) target = $region32
        $region31: #{pallas_contrastive_forward.1} parent=11 // pred_region
          _
        $region32: #{pallas_contrastive_forward.1} parent=11 // pred_fallthru
          _
        // Predicated region
        $region33: #{pallas_contrastive_forward.1} parent=11 // pred_check
          %p537 = pneg %p208
        $region34: #{pallas_contrastive_forward.1} parent=11 // pred_check_branch
          %539 = sbr.rel (%p537) target = $region36
        $region35: #{pallas_contrastive_forward.1} parent=11 // pred_region
          %s541 = ssub.s32 1024, 1024
          %542 = vsyncadd [#allocation3], %s541
          %s543 = sshll.u32 [#allocation2], 4
          %s544 = int_to_ptr.vmem [resolvable:$true] %s543
          %549 = dma.hbm_to_vmem [thread:$0]  %s7, 1024, %s544, [#allocation3], 128, 128, 8
        $region36: #{pallas_contrastive_forward.1} parent=11 // pred_fallthru
          _
        // Predicated region
        $region37: #{pallas_contrastive_forward.1} parent=11 // pred_check
          %p550 = pneg %p229
        $region38: #{pallas_contrastive_forward.1} parent=11 // pred_check_branch
          %552 = sbr.rel (%p550) target = $region40
        $region39: #{pallas_contrastive_forward.1} parent=11 // pred_region
          _
        $region40: #{pallas_contrastive_forward.1} parent=11 // pred_fallthru
          _
        // Predicated region
        $region41: #{pallas_contrastive_forward.1} parent=11 // pred_check
          %p553 = pneg %p250
        $region42: #{pallas_contrastive_forward.1} parent=11 // pred_check_branch
          %555 = sbr.rel (%p553) target = $region44
        $region43: #{pallas_contrastive_forward.1} parent=11 // pred_region
          _
        $region44: #{pallas_contrastive_forward.1} parent=11 // pred_fallthru
          _
        // Predicated region
        $region45: #{pallas_contrastive_forward.1} parent=11 // pred_check
          %p556 = pneg %p271
        $region46: #{pallas_contrastive_forward.1} parent=11 // pred_check_branch
          %558 = sbr.rel (%p556) target = $region48
        $region47: #{pallas_contrastive_forward.1} parent=11 // pred_region
          _
        $region48: #{pallas_contrastive_forward.1} parent=11 // pred_fallthru
          _
        // Predicated region
        $region49: #{pallas_contrastive_forward.1} parent=11 // pred_check
          %p559 = pneg %p292
        $region50: #{pallas_contrastive_forward.1} parent=11 // pred_check_branch
          %561 = sbr.rel (%p559) target = $region52
        $region51: #{pallas_contrastive_forward.1} parent=11 // pred_region
          %s563 = ssub.s32 1024, 1024
          %564 = vsyncadd [#allocation5], %s563
          %s565 = sshll.u32 [#allocation4], 4
          %s566 = int_to_ptr.vmem [resolvable:$true] %s565
          %571 = dma.hbm_to_vmem [thread:$0]  %s11, 1024, %s566, [#allocation5], 128, 128, 8
        $region52: #{pallas_contrastive_forward.1} parent=11 // pred_fallthru
          _
        // Predicated region
        $region53: #{pallas_contrastive_forward.1} parent=11 // pred_check
          %p572 = pneg %p313
        $region54: #{pallas_contrastive_forward.1} parent=11 // pred_check_branch
          %574 = sbr.rel (%p572) target = $region56
        $region55: #{pallas_contrastive_forward.1} parent=11 // pred_region
          _
        $region56: #{pallas_contrastive_forward.1} parent=11 // pred_fallthru
          _
        // Predicated region
        $region57: #{pallas_contrastive_forward.1} parent=11 // pred_check
          %p575 = pneg %p334
        $region58: #{pallas_contrastive_forward.1} parent=11 // pred_check_branch
          %577 = sbr.rel (%p575) target = $region60
        $region59: #{pallas_contrastive_forward.1} parent=11 // pred_region
          _
        $region60: #{pallas_contrastive_forward.1} parent=11 // pred_fallthru
          _
        // Predicated region
        $region61: #{pallas_contrastive_forward.1} parent=11 // pred_check
          %p578 = pneg %p355
        $region62: #{pallas_contrastive_forward.1} parent=11 // pred_check_branch
          %580 = sbr.rel (%p578) target = $region64
        $region63: #{pallas_contrastive_forward.1} parent=11 // pred_region
          _
        $region64: #{pallas_contrastive_forward.1} parent=11 // pred_fallthru
          _
        // Predicated region
        $region65: #{pallas_contrastive_forward.1} parent=11 // pred_check
          %p581 = pneg %p376
        $region66: #{pallas_contrastive_forward.1} parent=11 // pred_check_branch
          %583 = sbr.rel (%p581) target = $region68
        $region67: #{pallas_contrastive_forward.1} parent=11 // pred_region
          _
        $region68: #{pallas_contrastive_forward.1} parent=11 // pred_fallthru
          _
        // Predicated region
        $region69: #{pallas_contrastive_forward.1} parent=11 // pred_check
          %p584 = pneg %p397
        $region70: #{pallas_contrastive_forward.1} parent=11 // pred_check_branch
          %586 = sbr.rel (%p584) target = $region72
        $region71: #{pallas_contrastive_forward.1} parent=11 // pred_region
          _
        $region72: #{pallas_contrastive_forward.1} parent=11 // pred_fallthru
          _
        // Predicated region
        $region73: #{pallas_contrastive_forward.1} parent=11 // pred_check
          %p587 = pneg %p418
        $region74: #{pallas_contrastive_forward.1} parent=11 // pred_check_branch
          %589 = sbr.rel (%p587) target = $region76
        $region75: #{pallas_contrastive_forward.1} parent=11 // pred_region
          %s591 = ssub.s32 1024, 1024
          %592 = vsyncadd [#allocation5], %s591
          %s593 = sshll.u32 [#allocation6], 4
          %s594 = int_to_ptr.vmem [resolvable:$true] %s593
          %599 = dma.hbm_to_vmem [thread:$0]  %s17, 1024, %s594, [#allocation5], 256, 256, 16
        $region76: #{pallas_contrastive_forward.1} parent=11 // pred_fallthru
          _
        // Predicated region
        $region77: #{pallas_contrastive_forward.1} parent=11 // pred_check
          %p600 = pneg %p439
        $region78: #{pallas_contrastive_forward.1} parent=11 // pred_check_branch
          %602 = sbr.rel (%p600) target = $region80
        $region79: #{pallas_contrastive_forward.1} parent=11 // pred_region
          _
        $region80: #{pallas_contrastive_forward.1} parent=11 // pred_fallthru
          _
        // Predicated region
        $region81: #{pallas_contrastive_forward.1} parent=11 // pred_check
          %p603 = pneg %p460
        $region82: #{pallas_contrastive_forward.1} parent=11 // pred_check_branch
          %605 = sbr.rel (%p603) target = $region84
        $region83: #{pallas_contrastive_forward.1} parent=11 // pred_region
          %s607 = ssub.s32 4096, 4096
          %608 = vsyncadd [#allocation8], %s607
          %s609 = sshll.u32 [#allocation7], 4
          %s610 = int_to_ptr.vmem [resolvable:$true] %s609
          %615 = dma.hbm_to_vmem [thread:$0]  %s19, 4096, %s610, [#allocation8], 128, 128, 8
        $region84: #{pallas_contrastive_forward.1} parent=11 // pred_fallthru
          _
        // Predicated region
        $region85: #{pallas_contrastive_forward.1} parent=11 // pred_check
          %p616 = pneg %p481
        $region86: #{pallas_contrastive_forward.1} parent=11 // pred_check_branch
          %618 = sbr.rel (%p616) target = $region88
        $region87: #{pallas_contrastive_forward.1} parent=11 // pred_region
          _
        $region88: #{pallas_contrastive_forward.1} parent=11 // pred_fallthru
          _
      $region12: #{pallas_contrastive_forward.1} parent=5 // pred_fallthru
        _
      %p619 = scmp.lt.s32.totalorder %s30, 2
      // Predicated region
      $region89: #{pallas_contrastive_forward.1} parent=5 // pred_check
        %p620 = pneg %p619
      $region90: #{pallas_contrastive_forward.1} parent=5 // pred_check_branch
        %622 = sbr.rel (%p620) target = $region92
      $region91: #{pallas_contrastive_forward.1} parent=5 // pred_region
        // Predicated region
        $region93: #{pallas_contrastive_forward.1} parent=91 // pred_check
          %p623 = pneg %p50
        $region94: #{pallas_contrastive_forward.1} parent=91 // pred_check_branch
          %625 = sbr.rel (%p623) target = $region96
        $region95: #{pallas_contrastive_forward.1} parent=91 // pred_region
          %s626 = smul.u32 2, %s30
          %p627 = scmp.lt.s32.totalorder %s626, 3
          %s628 = scalar_select %p627, %s626, 3
          %s629 = smul.addr %s628, 8
          %s630 = scalar_lea.vmem %s0, %s629
          %s631 = smul.u32 2, %s30
        $region96: #{pallas_contrastive_forward.1} parent=91 // pred_fallthru
          _
        // Predicated region
        $region97: #{pallas_contrastive_forward.1} parent=91 // pred_check
          %p632 = pneg %p76
        $region98: #{pallas_contrastive_forward.1} parent=91 // pred_check_branch
          %634 = sbr.rel (%p632) target = $region100
        $region99: #{pallas_contrastive_forward.1} parent=91 // pred_region
          %p635 = scmp.lt.s32.totalorder %s30, 1
          %s636 = scalar_select %p635, %s30, 1
          %s637 = smul.addr %s636, 2
          %s638 = smul.addr %s637, 8
          %s639 = scalar_lea.vmem %s1, %s638
        $region100: #{pallas_contrastive_forward.1} parent=91 // pred_fallthru
          _
      $region92: #{pallas_contrastive_forward.1} parent=5 // pred_fallthru
        _
      %p640 = scmp.le.s32.totalorder 1, %s30
      %p641 = scmp.lt.s32.totalorder %s30, 3
      %p642 = pnand %p640, %p641
      %p643 = pneg %p642
      // Predicated region
      $region101: #{pallas_contrastive_forward.1} parent=5 // pred_check
        _
      $region102: #{pallas_contrastive_forward.1} parent=5 // pred_check_branch
        %645 = sbr.rel (%p642) target = $region104
      $region103: #{pallas_contrastive_forward.1} parent=5 // pred_region
        %s646 = ssub.s32 %s30, 1
        // Predicated region
        $region105: #{pallas_contrastive_forward.1} parent=103 // pred_check
          %p647 = pneg %p208
        $region106: #{pallas_contrastive_forward.1} parent=103 // pred_check_branch
          %649 = sbr.rel (%p647) target = $region108
        $region107: #{pallas_contrastive_forward.1} parent=103 // pred_region
          %650 = dma.done [#allocation3], 1024
        $region108: #{pallas_contrastive_forward.1} parent=103 // pred_fallthru
          _
        // Predicated region
        $region109: #{pallas_contrastive_forward.1} parent=103 // pred_check
          %p651 = pneg %p292
        $region110: #{pallas_contrastive_forward.1} parent=103 // pred_check_branch
          %653 = sbr.rel (%p651) target = $region112
        $region111: #{pallas_contrastive_forward.1} parent=103 // pred_region
          %654 = dma.done [#allocation5], 1024
        $region112: #{pallas_contrastive_forward.1} parent=103 // pred_fallthru
          _
        // Predicated region
        $region113: #{pallas_contrastive_forward.1} parent=103 // pred_check
          %p655 = pneg %p418
        $region114: #{pallas_contrastive_forward.1} parent=103 // pred_check_branch
          %657 = sbr.rel (%p655) target = $region116
        $region115: #{pallas_contrastive_forward.1} parent=103 // pred_region
          %658 = dma.done [#allocation5], 1024
        $region116: #{pallas_contrastive_forward.1} parent=103 // pred_fallthru
          _
        // Predicated region
        $region117: #{pallas_contrastive_forward.1} parent=103 // pred_check
          %p659 = pneg %p460
        $region118: #{pallas_contrastive_forward.1} parent=103 // pred_check_branch
          %661 = sbr.rel (%p659) target = $region120
        $region119: #{pallas_contrastive_forward.1} parent=103 // pred_region
          %662 = dma.done [#allocation8], 4096
        $region120: #{pallas_contrastive_forward.1} parent=103 // pred_fallthru
          _
        %s663 = smul.u32 2, %s35
        %p664 = scmp.lt.s32.totalorder %s663, 3
        %s665 = scalar_select %p664, %s663, 3
        %s666 = smul.addr %s665, 8
        %s667 = scalar_lea.vmem %s0, %s666
        %p668 = pneg %p56
        %p669 = pneg %p53
        %p670 = scmp.lt.s32.totalorder %s35, 1
        %s671 = scalar_select %p670, %s35, 1
        %s672 = smul.addr %s671, 2
        %s673 = smul.addr %s672, 8
        %s674 = scalar_lea.vmem %s1, %s673
        %p675 = pneg %p82
        %p676 = pneg %p79
        %p677 = pneg %p103
        %p678 = pneg %p100
        %p679 = pneg %p124
        %p680 = pneg %p121
        %p681 = pneg %p145
        %p682 = pneg %p142
        %p683 = pneg %p166
        %p684 = pneg %p163
        %p685 = pneg %p187
        %p686 = pneg %p184
        %p687 = pneg %p208
        %p688 = pneg %p205
        %p689 = pneg %p229
        %p690 = pneg %p226
        %p691 = pneg %p250
        %p692 = pneg %p247
        %p693 = pneg %p271
        %p694 = pneg %p268
        %p695 = pneg %p292
        %p696 = pneg %p289
        %p697 = pneg %p313
        %p698 = pneg %p310
        %p699 = pneg %p334
        %p700 = pneg %p331
        %p701 = pneg %p355
        %p702 = pneg %p352
        %p703 = pneg %p376
        %p704 = pneg %p373
        %p705 = pneg %p397
        %p706 = pneg %p394
        %p707 = pneg %p418
        %p708 = pneg %p415
        %p709 = pneg %p439
        %p710 = pneg %p436
        %p711 = pneg %p460
        %p712 = pneg %p457
        %p713 = pneg %p481
        %p714 = pneg %p478
        %p715 = pneg %p507
        %p716 = pneg %p504
        %p717 = scmp.lt.s32.totalorder %s35, 1
        %s718 = scalar_select %p717, %s35, 1
        %s719 = smul.addr %s718, 2
        %s720 = scalar_lea.vmem %s21, %s719
        %s721 = smul.u32 2, %s35
        %p722 = scmp.lt.s32.totalorder %s721, 3
        %s723 = scalar_select %p722, %s721, 3
        %s724 = smul.addr %s723, 8
        %s725 = scalar_lea.vmem %s0, %s724
        %s726 = smul.u32 2, %s35
        %p727 = scmp.lt.s32.totalorder %s35, 1
        %s728 = scalar_select %p727, %s35, 1
        %s729 = smul.addr %s728, 2
        %s730 = smul.addr %s729, 8
        %s731 = scalar_lea.vmem %s1, %s730
        %p732 = scmp.lt.s32.totalorder %s35, 1
        %s733 = scalar_select %p732, %s35, 1
        %s734 = smul.addr %s733, 2
        %s735 = scalar_lea.vmem %s21, %s734
        %v736 = vld [vmem:[%s725] sm:$0xff]
        %v737 = vld [vmem:[%s725 + $0x8] sm:$0xff]
        %v738 = vld [vmem:[%s731] sm:$0xff]
        %v739 = vld [vmem:[%s731 + $0x8] sm:$0xff]
        %v740 = vld [vmem:[%s3] sm:$0x1]
        %v741 = vld [vmem:[%s4] sm:$0x1]
        %vm742 = vcmask 261120
        %v743 = vsel %vm742, %v736, 0.0
        %744 = vadd.xlane.f32.xlu0 %v743
        %v745 = vpop.xlane.xlu0 %744
        %v746 = vsel %vm742, %v737, 0.0
        %747 = vadd.xlane.f32.xlu0 %v746
        %v748 = vpop.xlane.xlu0 %747
        %v749 = vrcp.pop 32.0
        %v750 = vmul.f32 %v745, %v749
        %v751 = vmul.f32 %v748, %v749
        %v752 = vsub.f32 %v736, %v750
        %v753 = vsub.f32 %v737, %v751
        %v754 = vmul.f32 %v752, %v752
        %v755 = vmul.f32 %v753, %v753
        %v756 = vsel %vm742, %v754, 0.0
        %757 = vadd.xlane.f32.xlu0 %v756
        %v758 = vpop.xlane.xlu0 %757
        %v759 = vsel %vm742, %v755, 0.0
        %760 = vadd.xlane.f32.xlu0 %v759
        %v761 = vpop.xlane.xlu0 %760
        %v762 = vmul.f32 %v758, %v749
        %v763 = vmul.f32 %v761, %v749
        %v764 = vadd.f32 %v762, 1e-05
        %v765 = vadd.f32 %v763, 1e-05
        %v766 = vrsqrt.pop %v764
        %v767 = vrsqrt.pop %v765
        %v768 = vmul.f32 %v752, %v766
        %v769 = vmul.f32 %v753, %v767
        %v771 = vlaneseq
        %v772 = vshrl.u32 %v771, 7
        %v773 = vsub.s32 0, %v772
        %v774 = vrot.slane %v740, %v773
        %v776 = vmul.f32 %v768, %v774
        %v777 = vmul.f32 %v769, %v774
        %v779 = vlaneseq
        %v780 = vshrl.u32 %v779, 7
        %v781 = vsub.s32 0, %v780
        %v782 = vrot.slane %v741, %v781
        %v784 = vadd.f32 %v776, %v782
        %v785 = vadd.f32 %v777, %v782
        %v786 = vld [vmem:[%s5] sm:$0xff]
        %v787 = vld [vmem:[%s5 + $0x8] sm:$0xff]
        %v788 = vld [vmem:[%s5 + $0x10] sm:$0xff]
        %v789 = vld [vmem:[%s5 + $0x18] sm:$0xff]
        %v790 = vld [vmem:[%s5 + $0x20] sm:$0xff]
        %v791 = vld [vmem:[%s5 + $0x28] sm:$0xff]
        %v792 = vld [vmem:[%s5 + $0x30] sm:$0xff]
        %v793 = vld [vmem:[%s5 + $0x38] sm:$0xff]
        %v794 = vld [vmem:[%s5 + $0x40] sm:$0xff]
        %v795 = vld [vmem:[%s5 + $0x48] sm:$0xff]
        %v796 = vld [vmem:[%s5 + $0x50] sm:$0xff]
        %v797 = vld [vmem:[%s5 + $0x58] sm:$0xff]
        %v798 = vld [vmem:[%s5 + $0x60] sm:$0xff]
        %v799 = vld [vmem:[%s5 + $0x68] sm:$0xff]
        %v800 = vld [vmem:[%s5 + $0x70] sm:$0xff]
        %v801 = vld [vmem:[%s5 + $0x78] sm:$0xff]
        %v802 = vld [vmem:[%s5 + $0x80] sm:$0xff]
        %v803 = vld [vmem:[%s5 + $0x88] sm:$0xff]
        %v804 = vld [vmem:[%s5 + $0x90] sm:$0xff]
        %v805 = vld [vmem:[%s5 + $0x98] sm:$0xff]
        %v806 = vld [vmem:[%s5 + $0xa0] sm:$0xff]
        %v807 = vld [vmem:[%s5 + $0xa8] sm:$0xff]
        %v808 = vld [vmem:[%s5 + $0xb0] sm:$0xff]
        %v809 = vld [vmem:[%s5 + $0xb8] sm:$0xff]
        %v810 = vld [vmem:[%s6] sm:$0x1]
        %v811 = vld [vmem:[%s6 + $0x1] sm:$0x1]
        %v812 = vld [vmem:[%s6 + $0x2] sm:$0x1]
        %v813 = vld [vmem:[%s6 + $0x3] sm:$0x1]
        %v814 = vld [vmem:[%s6 + $0x4] sm:$0x1]
        %v815 = vld [vmem:[%s6 + $0x5] sm:$0x1]
        %v816 = vld [vmem:[#allocation2] sm:$0xff]
        %v817 = vld [vmem:[#allocation2 + $0x8] sm:$0xff]
        %v818 = vld [vmem:[#allocation2 + $0x10] sm:$0xff]
        %v819 = vld [vmem:[#allocation2 + $0x18] sm:$0xff]
        %v821 = vlaneseq
        %v822 = vshrl.u32 %v821, 7
        %v823 = vsub.s32 0, %v822
        %v824 = vrot.slane %v810, %v823
        %v827 = vsel %vm742, %v784, 0
        %v830 = vsel %vm742, %v785, 0
        %832 = vmatprep.subr.mxu0 0.0
        %833 = vmatpush1.msra.mxu0 %v786
        %834 = vmatprep.subr.mxu0 0.0
        %835 = vmatpush1.msra.mxu0 %v787
        %836 = vmatprep.subr.mxu0 0.0
        %837 = vmatpush1.msra.mxu0 %v788
        %838 = vmatprep.subr.mxu0 0.0
        %839 = vmatpush1.msra.mxu0 %v789
        %840 = vmatprep.subr.mxu0 0.0
        %841 = vmatpush1.msra.mxu0 0.0
        %842 = vmatprep.subr.mxu0 0.0
        %843 = vmatpush1.msra.mxu0 0.0
        %844 = vmatprep.subr.mxu0 0.0
        %845 = vmatpush1.msra.mxu0 0.0
        %846 = vmatprep.subr.mxu0 0.0
        %847 = vmatpush1.msra.mxu0 0.0
        %848 = vmatprep.subr.mxu0 0.0
        %849 = vmatpush1.msra.mxu0 0.0
        %850 = vmatprep.subr.mxu0 0.0
        %851 = vmatpush1.msra.mxu0 0.0
        %852 = vmatprep.subr.mxu0 0.0
        %853 = vmatpush1.msra.mxu0 0.0
        %854 = vmatprep.subr.mxu0 0.0
        %855 = vmatpush1.msra.mxu0 0.0
        %856 = vmatprep.subr.mxu0 0.0
        %857 = vmatpush1.msra.mxu0 0.0
        %858 = vmatprep.subr.mxu0 0.0
        %859 = vmatpush1.msra.mxu0 0.0
        %860 = vmatprep.subr.mxu0 0.0
        %861 = vmatpush1.msra.mxu0 0.0
        %862 = vmatprep.subr.mxu0 0.0
        %863 = vmatpush1.msra.mxu0 0.0
        %864 = vmatprep.subr.mxu0 0.0
        %865 = vmatpush1.msra.mxu0 0.0
        %866 = vmatprep.subr.mxu0 0.0
        %867 = vmatpush1.msra.mxu0 0.0
        %868 = vmatprep.subr.mxu0 0.0
        %869 = vmatpush1.msra.mxu0 0.0
        %870 = vmatprep.subr.mxu0 0.0
        %871 = vmatpush1.msra.mxu0 0.0
        %872 = vmatprep.subr.mxu0 0.0
        %873 = vmatpush1.msra.mxu0 0.0
        %874 = vmatprep.subr.mxu0 0.0
        %875 = vmatpush1.msra.mxu0 0.0
        %876 = vmatprep.subr.mxu0 0.0
        %877 = vmatpush1.msra.mxu0 0.0
        %878 = vmatprep.subr.mxu0 0.0
        %879 = vmatpush1.msra.mxu0 0.0
        %880 = vmatprep.subr.mxu0 0.0
        %881 = vmatpush1.msra.mxu0 0.0
        %882 = vmatprep.subr.mxu0 0.0
        %883 = vmatpush1.msra.mxu0 0.0
        %884 = vmatprep.subr.mxu0 0.0
        %885 = vmatpush1.msra.mxu0 0.0
        %886 = vmatprep.subr.mxu0 0.0
        %887 = vmatpush1.msra.mxu0 0.0
        %888 = vmatprep.subr.mxu0 0.0
        %889 = vmatpush1.msra.mxu0 0.0
        %890 = vmatprep.subr.mxu0 0.0
        %891 = vmatpush1.msra.mxu0 0.0
        %892 = vmatprep.subr.mxu0 0.0
        %893 = vmatpush1.msra.mxu0 0.0
        %894 = vmatprep.subr.mxu0 0.0
        %895 = vmatpush1.msra.mxu0 0.0
        %896 = vmatprep.mubr.f32.mxu0 0.0
        %897 = vmatmul.mubr.f32.gmra.mrb[0].mxu0 %v827
        %v898 = vpop.f32.mrb[0].mxu0
        %v899 = vadd.f32 %v824, %v898
        %v900 = vpop.f32.mrb[0].mxu0
        %901 = vmatprep.mubr.f32.mxu0 0.0
        %902 = vmatmul.mubr.f32.gmra.mrb[0].mxu0 %v830
        %v903 = vpop.f32.mrb[0].mxu0
        %v904 = vadd.f32 %v824, %v903
        %v905 = vpop.f32.mrb[0].mxu0
        %906 = vdwg.mxu0
        %v908 = vlaneseq
        %v909 = vshrl.u32 %v908, 7
        %v910 = vsub.s32 0, %v909
        %v911 = vrot.slane %v812, %v910
        %913 = vmatprep.subr.mxu0 0.0
        %914 = vmatpush1.msra.mxu0 %v794
        %915 = vmatprep.subr.mxu0 0.0
        %916 = vmatpush1.msra.mxu0 %v795
        %917 = vmatprep.subr.mxu0 0.0
        %918 = vmatpush1.msra.mxu0 %v796
        %919 = vmatprep.subr.mxu0 0.0
        %920 = vmatpush1.msra.mxu0 %v797
        %921 = vmatprep.subr.mxu0 0.0
        %922 = vmatpush1.msra.mxu0 0.0
        %923 = vmatprep.subr.mxu0 0.0
        %924 = vmatpush1.msra.mxu0 0.0
        %925 = vmatprep.subr.mxu0 0.0
        %926 = vmatpush1.msra.mxu0 0.0
        %927 = vmatprep.subr.mxu0 0.0
        %928 = vmatpush1.msra.mxu0 0.0
        %929 = vmatprep.subr.mxu0 0.0
        %930 = vmatpush1.msra.mxu0 0.0
        %931 = vmatprep.subr.mxu0 0.0
        %932 = vmatpush1.msra.mxu0 0.0
        %933 = vmatprep.subr.mxu0 0.0
        %934 = vmatpush1.msra.mxu0 0.0
        %935 = vmatprep.subr.mxu0 0.0
        %936 = vmatpush1.msra.mxu0 0.0
        %937 = vmatprep.subr.mxu0 0.0
        %938 = vmatpush1.msra.mxu0 0.0
        %939 = vmatprep.subr.mxu0 0.0
        %940 = vmatpush1.msra.mxu0 0.0
        %941 = vmatprep.subr.mxu0 0.0
        %942 = vmatpush1.msra.mxu0 0.0
        %943 = vmatprep.subr.mxu0 0.0
        %944 = vmatpush1.msra.mxu0 0.0
        %945 = vmatprep.subr.mxu0 0.0
        %946 = vmatpush1.msra.mxu0 0.0
        %947 = vmatprep.subr.mxu0 0.0
        %948 = vmatpush1.msra.mxu0 0.0
        %949 = vmatprep.subr.mxu0 0.0
        %950 = vmatpush1.msra.mxu0 0.0
        %951 = vmatprep.subr.mxu0 0.0
        %952 = vmatpush1.msra.mxu0 0.0
        %953 = vmatprep.subr.mxu0 0.0
        %954 = vmatpush1.msra.mxu0 0.0
        %955 = vmatprep.subr.mxu0 0.0
        %956 = vmatpush1.msra.mxu0 0.0
        %957 = vmatprep.subr.mxu0 0.0
        %958 = vmatpush1.msra.mxu0 0.0
        %959 = vmatprep.subr.mxu0 0.0
        %960 = vmatpush1.msra.mxu0 0.0
        %961 = vmatprep.subr.mxu0 0.0
        %962 = vmatpush1.msra.mxu0 0.0
        %963 = vmatprep.subr.mxu0 0.0
        %964 = vmatpush1.msra.mxu0 0.0
        %965 = vmatprep.subr.mxu0 0.0
        %966 = vmatpush1.msra.mxu0 0.0
        %967 = vmatprep.subr.mxu0 0.0
        %968 = vmatpush1.msra.mxu0 0.0
        %969 = vmatprep.subr.mxu0 0.0
        %970 = vmatpush1.msra.mxu0 0.0
        %971 = vmatprep.subr.mxu0 0.0
        %972 = vmatpush1.msra.mxu0 0.0
        %973 = vmatprep.subr.mxu0 0.0
        %974 = vmatpush1.msra.mxu0 0.0
        %975 = vmatprep.subr.mxu0 0.0
        %976 = vmatpush1.msra.mxu0 0.0
        %977 = vmatprep.mubr.f32.mxu0 0.0
        %978 = vmatmul.mubr.f32.gmra.mrb[0].mxu0 %v827
        %v979 = vpop.f32.mrb[0].mxu0
        %v980 = vadd.f32 %v911, %v979
        %v981 = vpop.f32.mrb[0].mxu0
        %982 = vmatprep.mubr.f32.mxu0 0.0
        %983 = vmatmul.mubr.f32.gmra.mrb[0].mxu0 %v830
        %v984 = vpop.f32.mrb[0].mxu0
        %v985 = vadd.f32 %v911, %v984
        %v986 = vpop.f32.mrb[0].mxu0
        %987 = vdwg.mxu0
        %v989 = vlaneseq
        %v990 = vshrl.u32 %v989, 7
        %v991 = vsub.s32 0, %v990
        %v992 = vrot.slane %v814, %v991
        %994 = vmatprep.subr.mxu0 0.0
        %995 = vmatpush1.msra.mxu0 %v802
        %996 = vmatprep.subr.mxu0 0.0
        %997 = vmatpush1.msra.mxu0 %v803
        %998 = vmatprep.subr.mxu0 0.0
        %999 = vmatpush1.msra.mxu0 %v804
        %1000 = vmatprep.subr.mxu0 0.0
        %1001 = vmatpush1.msra.mxu0 %v805
        %1002 = vmatprep.subr.mxu0 0.0
        %1003 = vmatpush1.msra.mxu0 0.0
        %1004 = vmatprep.subr.mxu0 0.0
        %1005 = vmatpush1.msra.mxu0 0.0
        %1006 = vmatprep.subr.mxu0 0.0
        %1007 = vmatpush1.msra.mxu0 0.0
        %1008 = vmatprep.subr.mxu0 0.0
        %1009 = vmatpush1.msra.mxu0 0.0
        %1010 = vmatprep.subr.mxu0 0.0
        %1011 = vmatpush1.msra.mxu0 0.0
        %1012 = vmatprep.subr.mxu0 0.0
        %1013 = vmatpush1.msra.mxu0 0.0
        %1014 = vmatprep.subr.mxu0 0.0
        %1015 = vmatpush1.msra.mxu0 0.0
        %1016 = vmatprep.subr.mxu0 0.0
        %1017 = vmatpush1.msra.mxu0 0.0
        %1018 = vmatprep.subr.mxu0 0.0
        %1019 = vmatpush1.msra.mxu0 0.0
        %1020 = vmatprep.subr.mxu0 0.0
        %1021 = vmatpush1.msra.mxu0 0.0
        %1022 = vmatprep.subr.mxu0 0.0
        %1023 = vmatpush1.msra.mxu0 0.0
        %1024 = vmatprep.subr.mxu0 0.0
        %1025 = vmatpush1.msra.mxu0 0.0
        %1026 = vmatprep.subr.mxu0 0.0
        %1027 = vmatpush1.msra.mxu0 0.0
        %1028 = vmatprep.subr.mxu0 0.0
        %1029 = vmatpush1.msra.mxu0 0.0
        %1030 = vmatprep.subr.mxu0 0.0
        %1031 = vmatpush1.msra.mxu0 0.0
        %1032 = vmatprep.subr.mxu0 0.0
        %1033 = vmatpush1.msra.mxu0 0.0
        %1034 = vmatprep.subr.mxu0 0.0
        %1035 = vmatpush1.msra.mxu0 0.0
        %1036 = vmatprep.subr.mxu0 0.0
        %1037 = vmatpush1.msra.mxu0 0.0
        %1038 = vmatprep.subr.mxu0 0.0
        %1039 = vmatpush1.msra.mxu0 0.0
        %1040 = vmatprep.subr.mxu0 0.0
        %1041 = vmatpush1.msra.mxu0 0.0
        %1042 = vmatprep.subr.mxu0 0.0
        %1043 = vmatpush1.msra.mxu0 0.0
        %1044 = vmatprep.subr.mxu0 0.0
        %1045 = vmatpush1.msra.mxu0 0.0
        %1046 = vmatprep.subr.mxu0 0.0
        %1047 = vmatpush1.msra.mxu0 0.0
        %1048 = vmatprep.subr.mxu0 0.0
        %1049 = vmatpush1.msra.mxu0 0.0
        %1050 = vmatprep.subr.mxu0 0.0
        %1051 = vmatpush1.msra.mxu0 0.0
        %1052 = vmatprep.subr.mxu0 0.0
        %1053 = vmatpush1.msra.mxu0 0.0
        %1054 = vmatprep.subr.mxu0 0.0
        %1055 = vmatpush1.msra.mxu0 0.0
        %1056 = vmatprep.subr.mxu0 0.0
        %1057 = vmatpush1.msra.mxu0 0.0
        %1058 = vmatprep.mubr.f32.mxu0 0.0
        %1059 = vmatmul.mubr.f32.gmra.mrb[0].mxu0 %v827
        %v1060 = vpop.f32.mrb[0].mxu0
        %v1061 = vadd.f32 %v992, %v1060
        %v1062 = vpop.f32.mrb[0].mxu0
        %1063 = vmatprep.mubr.f32.mxu0 0.0
        %1064 = vmatmul.mubr.f32.gmra.mrb[0].mxu0 %v830
        %v1065 = vpop.f32.mrb[0].mxu0
        %v1066 = vadd.f32 %v992, %v1065
        %v1067 = vpop.f32.mrb[0].mxu0
        %1068 = vdwg.mxu0
        %vm1069 = vcmask 130048
        %v1071 = vsel %vm1069, %v899, 0
        %v1074 = vsel %vm1069, %v904, 0
        %v1077 = vsel %vm1069, %v980, 0
        %v1080 = vsel %vm1069, %v985, 0
        %1082 = vmatprep.subr.mxu0 0.0
        %1083 = vmatpush1.xpose.msra.mxu0 %v1077
        %1084 = vmatprep.subr.mxu0 0.0
        %1085 = vmatpush1.xpose.msra.mxu0 %v1080
        %1086 = vmatprep.subr.mxu0 0.0
        %1087 = vmatpush1.xpose.msra.mxu0 0.0
        %1088 = vmatprep.subr.mxu0 0.0
        %1089 = vmatpush1.xpose.msra.mxu0 0.0
        %1090 = vmatprep.subr.mxu0 0.0
        %1091 = vmatpush1.xpose.msra.mxu0 0.0
        %1092 = vmatprep.subr.mxu0 0.0
        %1093 = vmatpush1.xpose.msra.mxu0 0.0
        %1094 = vmatprep.subr.mxu0 0.0
        %1095 = vmatpush1.xpose.msra.mxu0 0.0
        %1096 = vmatprep.subr.mxu0 0.0
        %1097 = vmatpush1.xpose.msra.mxu0 0.0
        %1098 = vmatprep.subr.mxu0 0.0
        %1099 = vmatpush1.xpose.msra.mxu0 0.0
        %1100 = vmatprep.subr.mxu0 0.0
        %1101 = vmatpush1.xpose.msra.mxu0 0.0
        %1102 = vmatprep.subr.mxu0 0.0
        %1103 = vmatpush1.xpose.msra.mxu0 0.0
        %1104 = vmatprep.subr.mxu0 0.0
        %1105 = vmatpush1.xpose.msra.mxu0 0.0
        %1106 = vmatprep.subr.mxu0 0.0
        %1107 = vmatpush1.xpose.msra.mxu0 0.0
        %1108 = vmatprep.subr.mxu0 0.0
        %1109 = vmatpush1.xpose.msra.mxu0 0.0
        %1110 = vmatprep.subr.mxu0 0.0
        %1111 = vmatpush1.xpose.msra.mxu0 0.0
        %1112 = vmatprep.subr.mxu0 0.0
        %1113 = vmatpush1.xpose.msra.mxu0 0.0
        %1114 = vmatprep.subr.mxu0 0.0
        %1115 = vmatpush1.xpose.msra.mxu0 0.0
        %1116 = vmatprep.subr.mxu0 0.0
        %1117 = vmatpush1.xpose.msra.mxu0 0.0
        %1118 = vmatprep.subr.mxu0 0.0
        %1119 = vmatpush1.xpose.msra.mxu0 0.0
        %1120 = vmatprep.subr.mxu0 0.0
        %1121 = vmatpush1.xpose.msra.mxu0 0.0
        %1122 = vmatprep.subr.mxu0 0.0
        %1123 = vmatpush1.xpose.msra.mxu0 0.0
        %1124 = vmatprep.subr.mxu0 0.0
        %1125 = vmatpush1.xpose.msra.mxu0 0.0
        %1126 = vmatprep.subr.mxu0 0.0
        %1127 = vmatpush1.xpose.msra.mxu0 0.0
        %1128 = vmatprep.subr.mxu0 0.0
        %1129 = vmatpush1.xpose.msra.mxu0 0.0
        %1130 = vmatprep.subr.mxu0 0.0
        %1131 = vmatpush1.xpose.msra.mxu0 0.0
        %1132 = vmatprep.subr.mxu0 0.0
        %1133 = vmatpush1.xpose.msra.mxu0 0.0
        %1134 = vmatprep.subr.mxu0 0.0
        %1135 = vmatpush1.xpose.msra.mxu0 0.0
        %1136 = vmatprep.subr.mxu0 0.0
        %1137 = vmatpush1.xpose.msra.mxu0 0.0
        %1138 = vmatprep.subr.mxu0 0.0
        %1139 = vmatpush1.xpose.msra.mxu0 0.0
        %1140 = vmatprep.subr.mxu0 0.0
        %1141 = vmatpush1.xpose.msra.mxu0 0.0
        %1142 = vmatprep.subr.mxu0 0.0
        %1143 = vmatpush1.xpose.msra.mxu0 0.0
        %1144 = vmatprep.subr.mxu0 0.0
        %1145 = vmatpush1.xpose.msra.mxu0 0.0
        %1146 = vmatprep.mubr.f32.mxu0 0.0
        %1147 = vmatmul.mubr.f32.gmra.mrb[0].mxu0 %v1071
        %v1148 = vpop.f32.mrb[0].mxu0
        %v1149 = vadd.f32 0.0, %v1148
        %v1150 = vpop.f32.mrb[0].mxu0
        %1151 = vmatprep.mubr.f32.mxu0 0.0
        %1152 = vmatmul.mubr.f32.gmra.mrb[0].mxu0 %v1074
        %v1153 = vpop.f32.mrb[0].mxu0
        %v1154 = vadd.f32 0.0, %v1153
        %v1155 = vpop.f32.mrb[0].mxu0
        %1156 = vdwg.mxu0
        %v1157 = vmul.f32 %v1149, 0.25
        %v1158 = vmul.f32 %v1154, 0.25
        %v1159 = vadd.f32 %v1157, %v738
        %v1160 = vadd.f32 %v1158, %v739
        %v1161 = vsel %vm1069, %v1159, -inf
        %1162 = vmax.xlane.f32.xlu0 %v1161
        %v1163 = vpop.xlane.xlu0 %1162
        %v1164 = vsel %vm1069, %v1160, -inf
        %1165 = vmax.xlane.f32.xlu0 %v1164
        %v1166 = vpop.xlane.xlu0 %1165
        %v1167 = vsub.f32 %v1159, %v1163
        %v1168 = vsub.f32 %v1160, %v1166
        %v1169 = vmul.f32 %v1167, 1.442695
        %v1170 = vpow.pop %v1169
        %v1171 = vmul.f32 %v1168, 1.442695
        %v1172 = vpow.pop %v1171
        %v1173 = vsel %vm1069, %v1170, 0.0
        %1174 = vadd.xlane.f32.xlu0 %v1173
        %v1175 = vpop.xlane.xlu0 %1174
        %v1176 = vsel %vm1069, %v1172, 0.0
        %1177 = vadd.xlane.f32.xlu0 %v1176
        %v1178 = vpop.xlane.xlu0 %1177
        %v1179 = vrcp.pop %v1175
        %v1180 = vrcp.pop %v1178
        %v1181 = vmul.f32 %v1170, %v1179
        %v1182 = vmul.f32 %v1172, %v1180
        %v1184 = vsel %vm1069, %v1181, 0
        %v1187 = vsel %vm1069, %v1182, 0
        %1189 = vmatprep.subr.mxu0 0.0
        %1190 = vmatpush1.msra.mxu0 %v1061
        %1191 = vmatprep.subr.mxu0 0.0
        %1192 = vmatpush1.msra.mxu0 %v1066
        %1193 = vmatprep.subr.mxu0 0.0
        %1194 = vmatpush1.msra.mxu0 0.0
        %1195 = vmatprep.subr.mxu0 0.0
        %1196 = vmatpush1.msra.mxu0 0.0
        %1197 = vmatprep.subr.mxu0 0.0
        %1198 = vmatpush1.msra.mxu0 0.0
        %1199 = vmatprep.subr.mxu0 0.0
        %1200 = vmatpush1.msra.mxu0 0.0
        %1201 = vmatprep.subr.mxu0 0.0
        %1202 = vmatpush1.msra.mxu0 0.0
        %1203 = vmatprep.subr.mxu0 0.0
        %1204 = vmatpush1.msra.mxu0 0.0
        %1205 = vmatprep.subr.mxu0 0.0
        %1206 = vmatpush1.msra.mxu0 0.0
        %1207 = vmatprep.subr.mxu0 0.0
        %1208 = vmatpush1.msra.mxu0 0.0
        %1209 = vmatprep.subr.mxu0 0.0
        %1210 = vmatpush1.msra.mxu0 0.0
        %1211 = vmatprep.subr.mxu0 0.0
        %1212 = vmatpush1.msra.mxu0 0.0
        %1213 = vmatprep.subr.mxu0 0.0
        %1214 = vmatpush1.msra.mxu0 0.0
        %1215 = vmatprep.subr.mxu0 0.0
        %1216 = vmatpush1.msra.mxu0 0.0
        %1217 = vmatprep.subr.mxu0 0.0
        %1218 = vmatpush1.msra.mxu0 0.0
        %1219 = vmatprep.subr.mxu0 0.0
        %1220 = vmatpush1.msra.mxu0 0.0
        %1221 = vmatprep.subr.mxu0 0.0
        %1222 = vmatpush1.msra.mxu0 0.0
        %1223 = vmatprep.subr.mxu0 0.0
        %1224 = vmatpush1.msra.mxu0 0.0
        %1225 = vmatprep.subr.mxu0 0.0
        %1226 = vmatpush1.msra.mxu0 0.0
        %1227 = vmatprep.subr.mxu0 0.0
        %1228 = vmatpush1.msra.mxu0 0.0
        %1229 = vmatprep.subr.mxu0 0.0
        %1230 = vmatpush1.msra.mxu0 0.0
        %1231 = vmatprep.subr.mxu0 0.0
        %1232 = vmatpush1.msra.mxu0 0.0
        %1233 = vmatprep.subr.mxu0 0.0
        %1234 = vmatpush1.msra.mxu0 0.0
        %1235 = vmatprep.subr.mxu0 0.0
        %1236 = vmatpush1.msra.mxu0 0.0
        %1237 = vmatprep.subr.mxu0 0.0
        %1238 = vmatpush1.msra.mxu0 0.0
        %1239 = vmatprep.subr.mxu0 0.0
        %1240 = vmatpush1.msra.mxu0 0.0
        %1241 = vmatprep.subr.mxu0 0.0
        %1242 = vmatpush1.msra.mxu0 0.0
        %1243 = vmatprep.subr.mxu0 0.0
        %1244 = vmatpush1.msra.mxu0 0.0
        %1245 = vmatprep.subr.mxu0 0.0
        %1246 = vmatpush1.msra.mxu0 0.0
        %1247 = vmatprep.subr.mxu0 0.0
        %1248 = vmatpush1.msra.mxu0 0.0
        %1249 = vmatprep.subr.mxu0 0.0
        %1250 = vmatpush1.msra.mxu0 0.0
        %1251 = vmatprep.subr.mxu0 0.0
        %1252 = vmatpush1.msra.mxu0 0.0
        %1253 = vmatprep.mubr.f32.mxu0 0.0
        %1254 = vmatmul.mubr.f32.gmra.mrb[0].mxu0 %v1184
        %v1255 = vpop.f32.mrb[0].mxu0
        %v1256 = vadd.f32 0.0, %v1255
        %v1257 = vpop.f32.mrb[0].mxu0
        %1258 = vmatprep.mubr.f32.mxu0 0.0
        %1259 = vmatmul.mubr.f32.gmra.mrb[0].mxu0 %v1187
        %v1260 = vpop.f32.mrb[0].mxu0
        %v1261 = vadd.f32 0.0, %v1260
        %v1262 = vpop.f32.mrb[0].mxu0
        %1263 = vdwg.mxu0
        %v1265 = vlaneseq
        %v1266 = vshrl.u32 %v1265, 7
        %v1267 = vsub.s32 0, %v1266
        %v1268 = vrot.slane %v811, %v1267
        %1270 = vmatprep.subr.mxu0 0.0
        %1271 = vmatpush1.msra.mxu0 %v790
        %1272 = vmatprep.subr.mxu0 0.0
        %1273 = vmatpush1.msra.mxu0 %v791
        %1274 = vmatprep.subr.mxu0 0.0
        %1275 = vmatpush1.msra.mxu0 %v792
        %1276 = vmatprep.subr.mxu0 0.0
        %1277 = vmatpush1.msra.mxu0 %v793
        %1278 = vmatprep.subr.mxu0 0.0
        %1279 = vmatpush1.msra.mxu0 0.0
        %1280 = vmatprep.subr.mxu0 0.0
        %1281 = vmatpush1.msra.mxu0 0.0
        %1282 = vmatprep.subr.mxu0 0.0
        %1283 = vmatpush1.msra.mxu0 0.0
        %1284 = vmatprep.subr.mxu0 0.0
        %1285 = vmatpush1.msra.mxu0 0.0
        %1286 = vmatprep.subr.mxu0 0.0
        %1287 = vmatpush1.msra.mxu0 0.0
        %1288 = vmatprep.subr.mxu0 0.0
        %1289 = vmatpush1.msra.mxu0 0.0
        %1290 = vmatprep.subr.mxu0 0.0
        %1291 = vmatpush1.msra.mxu0 0.0
        %1292 = vmatprep.subr.mxu0 0.0
        %1293 = vmatpush1.msra.mxu0 0.0
        %1294 = vmatprep.subr.mxu0 0.0
        %1295 = vmatpush1.msra.mxu0 0.0
        %1296 = vmatprep.subr.mxu0 0.0
        %1297 = vmatpush1.msra.mxu0 0.0
        %1298 = vmatprep.subr.mxu0 0.0
        %1299 = vmatpush1.msra.mxu0 0.0
        %1300 = vmatprep.subr.mxu0 0.0
        %1301 = vmatpush1.msra.mxu0 0.0
        %1302 = vmatprep.subr.mxu0 0.0
        %1303 = vmatpush1.msra.mxu0 0.0
        %1304 = vmatprep.subr.mxu0 0.0
        %1305 = vmatpush1.msra.mxu0 0.0
        %1306 = vmatprep.subr.mxu0 0.0
        %1307 = vmatpush1.msra.mxu0 0.0
        %1308 = vmatprep.subr.mxu0 0.0
        %1309 = vmatpush1.msra.mxu0 0.0
        %1310 = vmatprep.subr.mxu0 0.0
        %1311 = vmatpush1.msra.mxu0 0.0
        %1312 = vmatprep.subr.mxu0 0.0
        %1313 = vmatpush1.msra.mxu0 0.0
        %1314 = vmatprep.subr.mxu0 0.0
        %1315 = vmatpush1.msra.mxu0 0.0
        %1316 = vmatprep.subr.mxu0 0.0
        %1317 = vmatpush1.msra.mxu0 0.0
        %1318 = vmatprep.subr.mxu0 0.0
        %1319 = vmatpush1.msra.mxu0 0.0
        %1320 = vmatprep.subr.mxu0 0.0
        %1321 = vmatpush1.msra.mxu0 0.0
        %1322 = vmatprep.subr.mxu0 0.0
        %1323 = vmatpush1.msra.mxu0 0.0
        %1324 = vmatprep.subr.mxu0 0.0
        %1325 = vmatpush1.msra.mxu0 0.0
        %1326 = vmatprep.subr.mxu0 0.0
        %1327 = vmatpush1.msra.mxu0 0.0
        %1328 = vmatprep.subr.mxu0 0.0
        %1329 = vmatpush1.msra.mxu0 0.0
        %1330 = vmatprep.subr.mxu0 0.0
        %1331 = vmatpush1.msra.mxu0 0.0
        %1332 = vmatprep.subr.mxu0 0.0
        %1333 = vmatpush1.msra.mxu0 0.0
        %1334 = vmatprep.mubr.f32.mxu0 0.0
        %1335 = vmatmul.mubr.f32.gmra.mrb[0].mxu0 %v827
        %v1336 = vpop.f32.mrb[0].mxu0
        %v1337 = vadd.f32 %v1268, %v1336
        %v1338 = vpop.f32.mrb[0].mxu0
        %1339 = vmatprep.mubr.f32.mxu0 0.0
        %1340 = vmatmul.mubr.f32.gmra.mrb[0].mxu0 %v830
        %v1341 = vpop.f32.mrb[0].mxu0
        %v1342 = vadd.f32 %v1268, %v1341
        %v1343 = vpop.f32.mrb[0].mxu0
        %1344 = vdwg.mxu0
        %v1346 = vlaneseq
        %v1347 = vshrl.u32 %v1346, 7
        %v1348 = vsub.s32 0, %v1347
        %v1349 = vrot.slane %v813, %v1348
        %1351 = vmatprep.subr.mxu0 0.0
        %1352 = vmatpush1.msra.mxu0 %v798
        %1353 = vmatprep.subr.mxu0 0.0
        %1354 = vmatpush1.msra.mxu0 %v799
        %1355 = vmatprep.subr.mxu0 0.0
        %1356 = vmatpush1.msra.mxu0 %v800
        %1357 = vmatprep.subr.mxu0 0.0
        %1358 = vmatpush1.msra.mxu0 %v801
        %1359 = vmatprep.subr.mxu0 0.0
        %1360 = vmatpush1.msra.mxu0 0.0
        %1361 = vmatprep.subr.mxu0 0.0
        %1362 = vmatpush1.msra.mxu0 0.0
        %1363 = vmatprep.subr.mxu0 0.0
        %1364 = vmatpush1.msra.mxu0 0.0
        %1365 = vmatprep.subr.mxu0 0.0
        %1366 = vmatpush1.msra.mxu0 0.0
        %1367 = vmatprep.subr.mxu0 0.0
        %1368 = vmatpush1.msra.mxu0 0.0
        %1369 = vmatprep.subr.mxu0 0.0
        %1370 = vmatpush1.msra.mxu0 0.0
        %1371 = vmatprep.subr.mxu0 0.0
        %1372 = vmatpush1.msra.mxu0 0.0
        %1373 = vmatprep.subr.mxu0 0.0
        %1374 = vmatpush1.msra.mxu0 0.0
        %1375 = vmatprep.subr.mxu0 0.0
        %1376 = vmatpush1.msra.mxu0 0.0
        %1377 = vmatprep.subr.mxu0 0.0
        %1378 = vmatpush1.msra.mxu0 0.0
        %1379 = vmatprep.subr.mxu0 0.0
        %1380 = vmatpush1.msra.mxu0 0.0
        %1381 = vmatprep.subr.mxu0 0.0
        %1382 = vmatpush1.msra.mxu0 0.0
        %1383 = vmatprep.subr.mxu0 0.0
        %1384 = vmatpush1.msra.mxu0 0.0
        %1385 = vmatprep.subr.mxu0 0.0
        %1386 = vmatpush1.msra.mxu0 0.0
        %1387 = vmatprep.subr.mxu0 0.0
        %1388 = vmatpush1.msra.mxu0 0.0
        %1389 = vmatprep.subr.mxu0 0.0
        %1390 = vmatpush1.msra.mxu0 0.0
        %1391 = vmatprep.subr.mxu0 0.0
        %1392 = vmatpush1.msra.mxu0 0.0
        %1393 = vmatprep.subr.mxu0 0.0
        %1394 = vmatpush1.msra.mxu0 0.0
        %1395 = vmatprep.subr.mxu0 0.0
        %1396 = vmatpush1.msra.mxu0 0.0
        %1397 = vmatprep.subr.mxu0 0.0
        %1398 = vmatpush1.msra.mxu0 0.0
        %1399 = vmatprep.subr.mxu0 0.0
        %1400 = vmatpush1.msra.mxu0 0.0
        %1401 = vmatprep.subr.mxu0 0.0
        %1402 = vmatpush1.msra.mxu0 0.0
        %1403 = vmatprep.subr.mxu0 0.0
        %1404 = vmatpush1.msra.mxu0 0.0
        %1405 = vmatprep.subr.mxu0 0.0
        %1406 = vmatpush1.msra.mxu0 0.0
        %1407 = vmatprep.subr.mxu0 0.0
        %1408 = vmatpush1.msra.mxu0 0.0
        %1409 = vmatprep.subr.mxu0 0.0
        %1410 = vmatpush1.msra.mxu0 0.0
        %1411 = vmatprep.subr.mxu0 0.0
        %1412 = vmatpush1.msra.mxu0 0.0
        %1413 = vmatprep.subr.mxu0 0.0
        %1414 = vmatpush1.msra.mxu0 0.0
        %1415 = vmatprep.mubr.f32.mxu0 0.0
        %1416 = vmatmul.mubr.f32.gmra.mrb[0].mxu0 %v827
        %v1417 = vpop.f32.mrb[0].mxu0
        %v1418 = vadd.f32 %v1349, %v1417
        %v1419 = vpop.f32.mrb[0].mxu0
        %1420 = vmatprep.mubr.f32.mxu0 0.0
        %1421 = vmatmul.mubr.f32.gmra.mrb[0].mxu0 %v830
        %v1422 = vpop.f32.mrb[0].mxu0
        %v1423 = vadd.f32 %v1349, %v1422
        %v1424 = vpop.f32.mrb[0].mxu0
        %1425 = vdwg.mxu0
        %v1427 = vlaneseq
        %v1428 = vshrl.u32 %v1427, 7
        %v1429 = vsub.s32 0, %v1428
        %v1430 = vrot.slane %v815, %v1429
        %1432 = vmatprep.subr.mxu0 0.0
        %1433 = vmatpush1.msra.mxu0 %v806
        %1434 = vmatprep.subr.mxu0 0.0
        %1435 = vmatpush1.msra.mxu0 %v807
        %1436 = vmatprep.subr.mxu0 0.0
        %1437 = vmatpush1.msra.mxu0 %v808
        %1438 = vmatprep.subr.mxu0 0.0
        %1439 = vmatpush1.msra.mxu0 %v809
        %1440 = vmatprep.subr.mxu0 0.0
        %1441 = vmatpush1.msra.mxu0 0.0
        %1442 = vmatprep.subr.mxu0 0.0
        %1443 = vmatpush1.msra.mxu0 0.0
        %1444 = vmatprep.subr.mxu0 0.0
        %1445 = vmatpush1.msra.mxu0 0.0
        %1446 = vmatprep.subr.mxu0 0.0
        %1447 = vmatpush1.msra.mxu0 0.0
        %1448 = vmatprep.subr.mxu0 0.0
        %1449 = vmatpush1.msra.mxu0 0.0
        %1450 = vmatprep.subr.mxu0 0.0
        %1451 = vmatpush1.msra.mxu0 0.0
        %1452 = vmatprep.subr.mxu0 0.0
        %1453 = vmatpush1.msra.mxu0 0.0
        %1454 = vmatprep.subr.mxu0 0.0
        %1455 = vmatpush1.msra.mxu0 0.0
        %1456 = vmatprep.subr.mxu0 0.0
        %1457 = vmatpush1.msra.mxu0 0.0
        %1458 = vmatprep.subr.mxu0 0.0
        %1459 = vmatpush1.msra.mxu0 0.0
        %1460 = vmatprep.subr.mxu0 0.0
        %1461 = vmatpush1.msra.mxu0 0.0
        %1462 = vmatprep.subr.mxu0 0.0
        %1463 = vmatpush1.msra.mxu0 0.0
        %1464 = vmatprep.subr.mxu0 0.0
        %1465 = vmatpush1.msra.mxu0 0.0
        %1466 = vmatprep.subr.mxu0 0.0
        %1467 = vmatpush1.msra.mxu0 0.0
        %1468 = vmatprep.subr.mxu0 0.0
        %1469 = vmatpush1.msra.mxu0 0.0
        %1470 = vmatprep.subr.mxu0 0.0
        %1471 = vmatpush1.msra.mxu0 0.0
        %1472 = vmatprep.subr.mxu0 0.0
        %1473 = vmatpush1.msra.mxu0 0.0
        %1474 = vmatprep.subr.mxu0 0.0
        %1475 = vmatpush1.msra.mxu0 0.0
        %1476 = vmatprep.subr.mxu0 0.0
        %1477 = vmatpush1.msra.mxu0 0.0
        %1478 = vmatprep.subr.mxu0 0.0
        %1479 = vmatpush1.msra.mxu0 0.0
        %1480 = vmatprep.subr.mxu0 0.0
        %1481 = vmatpush1.msra.mxu0 0.0
        %1482 = vmatprep.subr.mxu0 0.0
        %1483 = vmatpush1.msra.mxu0 0.0
        %1484 = vmatprep.subr.mxu0 0.0
        %1485 = vmatpush1.msra.mxu0 0.0
        %1486 = vmatprep.subr.mxu0 0.0
        %1487 = vmatpush1.msra.mxu0 0.0
        %1488 = vmatprep.subr.mxu0 0.0
        %1489 = vmatpush1.msra.mxu0 0.0
        %1490 = vmatprep.subr.mxu0 0.0
        %1491 = vmatpush1.msra.mxu0 0.0
        %1492 = vmatprep.subr.mxu0 0.0
        %1493 = vmatpush1.msra.mxu0 0.0
        %1494 = vmatprep.subr.mxu0 0.0
        %1495 = vmatpush1.msra.mxu0 0.0
        %1496 = vmatprep.mubr.f32.mxu0 0.0
        %1497 = vmatmul.mubr.f32.gmra.mrb[0].mxu0 %v827
        %v1498 = vpop.f32.mrb[0].mxu0
        %v1499 = vadd.f32 %v1430, %v1498
        %v1500 = vpop.f32.mrb[0].mxu0
        %1501 = vmatprep.mubr.f32.mxu0 0.0
        %1502 = vmatmul.mubr.f32.gmra.mrb[0].mxu0 %v830
        %v1503 = vpop.f32.mrb[0].mxu0
        %v1504 = vadd.f32 %v1430, %v1503
        %v1505 = vpop.f32.mrb[0].mxu0
        %1506 = vdwg.mxu0
        %v1508 = vsel %vm1069, %v1337, 0
        %v1511 = vsel %vm1069, %v1342, 0
        %v1514 = vsel %vm1069, %v1418, 0
        %v1517 = vsel %vm1069, %v1423, 0
        %1519 = vmatprep.subr.mxu0 0.0
        %1520 = vmatpush1.xpose.msra.mxu0 %v1514
        %1521 = vmatprep.subr.mxu0 0.0
        %1522 = vmatpush1.xpose.msra.mxu0 %v1517
        %1523 = vmatprep.subr.mxu0 0.0
        %1524 = vmatpush1.xpose.msra.mxu0 0.0
        %1525 = vmatprep.subr.mxu0 0.0
        %1526 = vmatpush1.xpose.msra.mxu0 0.0
        %1527 = vmatprep.subr.mxu0 0.0
        %1528 = vmatpush1.xpose.msra.mxu0 0.0
        %1529 = vmatprep.subr.mxu0 0.0
        %1530 = vmatpush1.xpose.msra.mxu0 0.0
        %1531 = vmatprep.subr.mxu0 0.0
        %1532 = vmatpush1.xpose.msra.mxu0 0.0
        %1533 = vmatprep.subr.mxu0 0.0
        %1534 = vmatpush1.xpose.msra.mxu0 0.0
        %1535 = vmatprep.subr.mxu0 0.0
        %1536 = vmatpush1.xpose.msra.mxu0 0.0
        %1537 = vmatprep.subr.mxu0 0.0
        %1538 = vmatpush1.xpose.msra.mxu0 0.0
        %1539 = vmatprep.subr.mxu0 0.0
        %1540 = vmatpush1.xpose.msra.mxu0 0.0
        %1541 = vmatprep.subr.mxu0 0.0
        %1542 = vmatpush1.xpose.msra.mxu0 0.0
        %1543 = vmatprep.subr.mxu0 0.0
        %1544 = vmatpush1.xpose.msra.mxu0 0.0
        %1545 = vmatprep.subr.mxu0 0.0
        %1546 = vmatpush1.xpose.msra.mxu0 0.0
        %1547 = vmatprep.subr.mxu0 0.0
        %1548 = vmatpush1.xpose.msra.mxu0 0.0
        %1549 = vmatprep.subr.mxu0 0.0
        %1550 = vmatpush1.xpose.msra.mxu0 0.0
        %1551 = vmatprep.subr.mxu0 0.0
        %1552 = vmatpush1.xpose.msra.mxu0 0.0
        %1553 = vmatprep.subr.mxu0 0.0
        %1554 = vmatpush1.xpose.msra.mxu0 0.0
        %1555 = vmatprep.subr.mxu0 0.0
        %1556 = vmatpush1.xpose.msra.mxu0 0.0
        %1557 = vmatprep.subr.mxu0 0.0
        %1558 = vmatpush1.xpose.msra.mxu0 0.0
        %1559 = vmatprep.subr.mxu0 0.0
        %1560 = vmatpush1.xpose.msra.mxu0 0.0
        %1561 = vmatprep.subr.mxu0 0.0
        %1562 = vmatpush1.xpose.msra.mxu0 0.0
        %1563 = vmatprep.subr.mxu0 0.0
        %1564 = vmatpush1.xpose.msra.mxu0 0.0
        %1565 = vmatprep.subr.mxu0 0.0
        %1566 = vmatpush1.xpose.msra.mxu0 0.0
        %1567 = vmatprep.subr.mxu0 0.0
        %1568 = vmatpush1.xpose.msra.mxu0 0.0
        %1569 = vmatprep.subr.mxu0 0.0
        %1570 = vmatpush1.xpose.msra.mxu0 0.0
        %1571 = vmatprep.subr.mxu0 0.0
        %1572 = vmatpush1.xpose.msra.mxu0 0.0
        %1573 = vmatprep.subr.mxu0 0.0
        %1574 = vmatpush1.xpose.msra.mxu0 0.0
        %1575 = vmatprep.subr.mxu0 0.0
        %1576 = vmatpush1.xpose.msra.mxu0 0.0
        %1577 = vmatprep.subr.mxu0 0.0
        %1578 = vmatpush1.xpose.msra.mxu0 0.0
        %1579 = vmatprep.subr.mxu0 0.0
        %1580 = vmatpush1.xpose.msra.mxu0 0.0
        %1581 = vmatprep.subr.mxu0 0.0
        %1582 = vmatpush1.xpose.msra.mxu0 0.0
        %1583 = vmatprep.mubr.f32.mxu0 0.0
        %1584 = vmatmul.mubr.f32.gmra.mrb[0].mxu0 %v1508
        %v1585 = vpop.f32.mrb[0].mxu0
        %v1586 = vadd.f32 0.0, %v1585
        %v1587 = vpop.f32.mrb[0].mxu0
        %1588 = vmatprep.mubr.f32.mxu0 0.0
        %1589 = vmatmul.mubr.f32.gmra.mrb[0].mxu0 %v1511
        %v1590 = vpop.f32.mrb[0].mxu0
        %v1591 = vadd.f32 0.0, %v1590
        %v1592 = vpop.f32.mrb[0].mxu0
        %1593 = vdwg.mxu0
        %v1594 = vmul.f32 %v1586, 0.25
        %v1595 = vmul.f32 %v1591, 0.25
        %v1596 = vadd.f32 %v1594, %v738
        %v1597 = vadd.f32 %v1595, %v739
        %v1598 = vsel %vm1069, %v1596, -inf
        %1599 = vmax.xlane.f32.xlu0 %v1598
        %v1600 = vpop.xlane.xlu0 %1599
        %v1601 = vsel %vm1069, %v1597, -inf
        %1602 = vmax.xlane.f32.xlu0 %v1601
        %v1603 = vpop.xlane.xlu0 %1602
        %v1604 = vsub.f32 %v1596, %v1600
        %v1605 = vsub.f32 %v1597, %v1603
        %v1606 = vmul.f32 %v1604, 1.442695
        %v1607 = vpow.pop %v1606
        %v1608 = vmul.f32 %v1605, 1.442695
        %v1609 = vpow.pop %v1608
        %v1610 = vsel %vm1069, %v1607, 0.0
        %1611 = vadd.xlane.f32.xlu0 %v1610
        %v1612 = vpop.xlane.xlu0 %1611
        %v1613 = vsel %vm1069, %v1609, 0.0
        %1614 = vadd.xlane.f32.xlu0 %v1613
        %v1615 = vpop.xlane.xlu0 %1614
        %v1616 = vrcp.pop %v1612
        %v1617 = vrcp.pop %v1615
        %v1618 = vmul.f32 %v1607, %v1616
        %v1619 = vmul.f32 %v1609, %v1617
        %v1621 = vsel %vm1069, %v1618, 0
        %v1624 = vsel %vm1069, %v1619, 0
        %1626 = vmatprep.subr.mxu0 0.0
        %1627 = vmatpush1.msra.mxu0 %v1499
        %1628 = vmatprep.subr.mxu0 0.0
        %1629 = vmatpush1.msra.mxu0 %v1504
        %1630 = vmatprep.subr.mxu0 0.0
        %1631 = vmatpush1.msra.mxu0 0.0
        %1632 = vmatprep.subr.mxu0 0.0
        %1633 = vmatpush1.msra.mxu0 0.0
        %1634 = vmatprep.subr.mxu0 0.0
        %1635 = vmatpush1.msra.mxu0 0.0
        %1636 = vmatprep.subr.mxu0 0.0
        %1637 = vmatpush1.msra.mxu0 0.0
        %1638 = vmatprep.subr.mxu0 0.0
        %1639 = vmatpush1.msra.mxu0 0.0
        %1640 = vmatprep.subr.mxu0 0.0
        %1641 = vmatpush1.msra.mxu0 0.0
        %1642 = vmatprep.subr.mxu0 0.0
        %1643 = vmatpush1.msra.mxu0 0.0
        %1644 = vmatprep.subr.mxu0 0.0
        %1645 = vmatpush1.msra.mxu0 0.0
        %1646 = vmatprep.subr.mxu0 0.0
        %1647 = vmatpush1.msra.mxu0 0.0
        %1648 = vmatprep.subr.mxu0 0.0
        %1649 = vmatpush1.msra.mxu0 0.0
        %1650 = vmatprep.subr.mxu0 0.0
        %1651 = vmatpush1.msra.mxu0 0.0
        %1652 = vmatprep.subr.mxu0 0.0
        %1653 = vmatpush1.msra.mxu0 0.0
        %1654 = vmatprep.subr.mxu0 0.0
        %1655 = vmatpush1.msra.mxu0 0.0
        %1656 = vmatprep.subr.mxu0 0.0
        %1657 = vmatpush1.msra.mxu0 0.0
        %1658 = vmatprep.subr.mxu0 0.0
        %1659 = vmatpush1.msra.mxu0 0.0
        %1660 = vmatprep.subr.mxu0 0.0
        %1661 = vmatpush1.msra.mxu0 0.0
        %1662 = vmatprep.subr.mxu0 0.0
        %1663 = vmatpush1.msra.mxu0 0.0
        %1664 = vmatprep.subr.mxu0 0.0
        %1665 = vmatpush1.msra.mxu0 0.0
        %1666 = vmatprep.subr.mxu0 0.0
        %1667 = vmatpush1.msra.mxu0 0.0
        %1668 = vmatprep.subr.mxu0 0.0
        %1669 = vmatpush1.msra.mxu0 0.0
        %1670 = vmatprep.subr.mxu0 0.0
        %1671 = vmatpush1.msra.mxu0 0.0
        %1672 = vmatprep.subr.mxu0 0.0
        %1673 = vmatpush1.msra.mxu0 0.0
        %1674 = vmatprep.subr.mxu0 0.0
        %1675 = vmatpush1.msra.mxu0 0.0
        %1676 = vmatprep.subr.mxu0 0.0
        %1677 = vmatpush1.msra.mxu0 0.0
        %1678 = vmatprep.subr.mxu0 0.0
        %1679 = vmatpush1.msra.mxu0 0.0
        %1680 = vmatprep.subr.mxu0 0.0
        %1681 = vmatpush1.msra.mxu0 0.0
        %1682 = vmatprep.subr.mxu0 0.0
        %1683 = vmatpush1.msra.mxu0 0.0
        %1684 = vmatprep.subr.mxu0 0.0
        %1685 = vmatpush1.msra.mxu0 0.0
        %1686 = vmatprep.subr.mxu0 0.0
        %1687 = vmatpush1.msra.mxu0 0.0
        %1688 = vmatprep.subr.mxu0 0.0
        %1689 = vmatpush1.msra.mxu0 0.0
        %1690 = vmatprep.mubr.f32.mxu0 0.0
        %1691 = vmatmul.mubr.f32.gmra.mrb[0].mxu0 %v1621
        %v1692 = vpop.f32.mrb[0].mxu0
        %v1693 = vadd.f32 0.0, %v1692
        %v1694 = vpop.f32.mrb[0].mxu0
        %1695 = vmatprep.mubr.f32.mxu0 0.0
        %1696 = vmatmul.mubr.f32.gmra.mrb[0].mxu0 %v1624
        %v1697 = vpop.f32.mrb[0].mxu0
        %v1698 = vadd.f32 0.0, %v1697
        %v1699 = vpop.f32.mrb[0].mxu0
        %1700 = vdwg.mxu0
        %v1702 = vsel %vm1069, %v1693, 0
        %v1705 = vsel %vm1069, %v1698, 0
        %1707 = vmatprep.subr.mxu0 0.0
        %1708 = vmatpush1.msra.mxu0 %v818
        %1709 = vmatprep.subr.mxu0 0.0
        %1710 = vmatpush1.msra.mxu0 %v819
        %1711 = vmatprep.subr.mxu0 0.0
        %1712 = vmatpush1.msra.mxu0 0.0
        %1713 = vmatprep.subr.mxu0 0.0
        %1714 = vmatpush1.msra.mxu0 0.0
        %1715 = vmatprep.subr.mxu0 0.0
        %1716 = vmatpush1.msra.mxu0 0.0
        %1717 = vmatprep.subr.mxu0 0.0
        %1718 = vmatpush1.msra.mxu0 0.0
        %1719 = vmatprep.subr.mxu0 0.0
        %1720 = vmatpush1.msra.mxu0 0.0
        %1721 = vmatprep.subr.mxu0 0.0
        %1722 = vmatpush1.msra.mxu0 0.0
        %1723 = vmatprep.subr.mxu0 0.0
        %1724 = vmatpush1.msra.mxu0 0.0
        %1725 = vmatprep.subr.mxu0 0.0
        %1726 = vmatpush1.msra.mxu0 0.0
        %1727 = vmatprep.subr.mxu0 0.0
        %1728 = vmatpush1.msra.mxu0 0.0
        %1729 = vmatprep.subr.mxu0 0.0
        %1730 = vmatpush1.msra.mxu0 0.0
        %1731 = vmatprep.subr.mxu0 0.0
        %1732 = vmatpush1.msra.mxu0 0.0
        %1733 = vmatprep.subr.mxu0 0.0
        %1734 = vmatpush1.msra.mxu0 0.0
        %1735 = vmatprep.subr.mxu0 0.0
        %1736 = vmatpush1.msra.mxu0 0.0
        %1737 = vmatprep.subr.mxu0 0.0
        %1738 = vmatpush1.msra.mxu0 0.0
        %1739 = vmatprep.subr.mxu0 0.0
        %1740 = vmatpush1.msra.mxu0 0.0
        %1741 = vmatprep.subr.mxu0 0.0
        %1742 = vmatpush1.msra.mxu0 0.0
        %1743 = vmatprep.subr.mxu0 0.0
        %1744 = vmatpush1.msra.mxu0 0.0
        %1745 = vmatprep.subr.mxu0 0.0
        %1746 = vmatpush1.msra.mxu0 0.0
        %1747 = vmatprep.subr.mxu0 0.0
        %1748 = vmatpush1.msra.mxu0 0.0
        %1749 = vmatprep.subr.mxu0 0.0
        %1750 = vmatpush1.msra.mxu0 0.0
        %1751 = vmatprep.subr.mxu0 0.0
        %1752 = vmatpush1.msra.mxu0 0.0
        %1753 = vmatprep.subr.mxu0 0.0
        %1754 = vmatpush1.msra.mxu0 0.0
        %1755 = vmatprep.subr.mxu0 0.0
        %1756 = vmatpush1.msra.mxu0 0.0
        %1757 = vmatprep.subr.mxu0 0.0
        %1758 = vmatpush1.msra.mxu0 0.0
        %1759 = vmatprep.subr.mxu0 0.0
        %1760 = vmatpush1.msra.mxu0 0.0
        %1761 = vmatprep.subr.mxu0 0.0
        %1762 = vmatpush1.msra.mxu0 0.0
        %1763 = vmatprep.subr.mxu0 0.0
        %1764 = vmatpush1.msra.mxu0 0.0
        %1765 = vmatprep.subr.mxu0 0.0
        %1766 = vmatpush1.msra.mxu0 0.0
        %1767 = vmatprep.subr.mxu0 0.0
        %1768 = vmatpush1.msra.mxu0 0.0
        %1769 = vmatprep.subr.mxu0 0.0
        %1770 = vmatpush1.msra.mxu0 0.0
        %1771 = vmatprep.mubr.f32.mxu0 0.0
        %1772 = vmatmul.mubr.f32.gmra.mrb[0].mxu0 %v1702
        %v1773 = vpop.f32.mrb[0].mxu0
        %v1774 = vadd.f32 0.0, %v1773
        %v1775 = vpop.f32.mrb[0].mxu0
        %1776 = vmatprep.mubr.f32.mxu0 0.0
        %1777 = vmatmul.mubr.f32.gmra.mrb[0].mxu0 %v1705
        %v1778 = vpop.f32.mrb[0].mxu0
        %v1779 = vadd.f32 0.0, %v1778
        %v1780 = vpop.f32.mrb[0].mxu0
        %1781 = vdwg.mxu0
        %v1783 = vsel %vm1069, %v1256, 0
        %v1786 = vsel %vm1069, %v1261, 0
        %1788 = vmatprep.subr.mxu0 0.0
        %1789 = vmatpush1.msra.mxu0 %v816
        %1790 = vmatprep.subr.mxu0 0.0
        %1791 = vmatpush1.msra.mxu0 %v817
        %1792 = vmatprep.subr.mxu0 0.0
        %1793 = vmatpush1.msra.mxu0 0.0
        %1794 = vmatprep.subr.mxu0 0.0
        %1795 = vmatpush1.msra.mxu0 0.0
        %1796 = vmatprep.subr.mxu0 0.0
        %1797 = vmatpush1.msra.mxu0 0.0
        %1798 = vmatprep.subr.mxu0 0.0
        %1799 = vmatpush1.msra.mxu0 0.0
        %1800 = vmatprep.subr.mxu0 0.0
        %1801 = vmatpush1.msra.mxu0 0.0
        %1802 = vmatprep.subr.mxu0 0.0
        %1803 = vmatpush1.msra.mxu0 0.0
        %1804 = vmatprep.subr.mxu0 0.0
        %1805 = vmatpush1.msra.mxu0 0.0
        %1806 = vmatprep.subr.mxu0 0.0
        %1807 = vmatpush1.msra.mxu0 0.0
        %1808 = vmatprep.subr.mxu0 0.0
        %1809 = vmatpush1.msra.mxu0 0.0
        %1810 = vmatprep.subr.mxu0 0.0
        %1811 = vmatpush1.msra.mxu0 0.0
        %1812 = vmatprep.subr.mxu0 0.0
        %1813 = vmatpush1.msra.mxu0 0.0
        %1814 = vmatprep.subr.mxu0 0.0
        %1815 = vmatpush1.msra.mxu0 0.0
        %1816 = vmatprep.subr.mxu0 0.0
        %1817 = vmatpush1.msra.mxu0 0.0
        %1818 = vmatprep.subr.mxu0 0.0
        %1819 = vmatpush1.msra.mxu0 0.0
        %1820 = vmatprep.subr.mxu0 0.0
        %1821 = vmatpush1.msra.mxu0 0.0
        %1822 = vmatprep.subr.mxu0 0.0
        %1823 = vmatpush1.msra.mxu0 0.0
        %1824 = vmatprep.subr.mxu0 0.0
        %1825 = vmatpush1.msra.mxu0 0.0
        %1826 = vmatprep.subr.mxu0 0.0
        %1827 = vmatpush1.msra.mxu0 0.0
        %1828 = vmatprep.subr.mxu0 0.0
        %1829 = vmatpush1.msra.mxu0 0.0
        %1830 = vmatprep.subr.mxu0 0.0
        %1831 = vmatpush1.msra.mxu0 0.0
        %1832 = vmatprep.subr.mxu0 0.0
        %1833 = vmatpush1.msra.mxu0 0.0
        %1834 = vmatprep.subr.mxu0 0.0
        %1835 = vmatpush1.msra.mxu0 0.0
        %1836 = vmatprep.subr.mxu0 0.0
        %1837 = vmatpush1.msra.mxu0 0.0
        %1838 = vmatprep.subr.mxu0 0.0
        %1839 = vmatpush1.msra.mxu0 0.0
        %1840 = vmatprep.subr.mxu0 0.0
        %1841 = vmatpush1.msra.mxu0 0.0
        %1842 = vmatprep.subr.mxu0 0.0
        %1843 = vmatpush1.msra.mxu0 0.0
        %1844 = vmatprep.subr.mxu0 0.0
        %1845 = vmatpush1.msra.mxu0 0.0
        %1846 = vmatprep.subr.mxu0 0.0
        %1847 = vmatpush1.msra.mxu0 0.0
        %1848 = vmatprep.subr.mxu0 0.0
        %1849 = vmatpush1.msra.mxu0 0.0
        %1850 = vmatprep.subr.mxu0 0.0
        %1851 = vmatpush1.msra.mxu0 0.0
        %1852 = vmatprep.mubr.f32.mxu0 0.0
        %1853 = vmatmul.mubr.f32.gmra.mrb[0].mxu0 %v1783
        %v1854 = vpop.f32.mrb[0].mxu0
        %v1855 = vadd.f32 %v1774, %v1854
        %v1856 = vpop.f32.mrb[0].mxu0
        %1857 = vmatprep.mubr.f32.mxu0 0.0
        %1858 = vmatmul.mubr.f32.gmra.mrb[0].mxu0 %v1786
        %v1859 = vpop.f32.mrb[0].mxu0
        %v1860 = vadd.f32 %v1779, %v1859
        %v1861 = vpop.f32.mrb[0].mxu0
        %1862 = vdwg.mxu0
        %v1863 = vld [vmem:[%s8] sm:$0x1]
        %v1865 = vlaneseq
        %v1866 = vshrl.u32 %v1865, 7
        %v1867 = vsub.s32 0, %v1866
        %v1868 = vrot.slane %v1863, %v1867
        %v1870 = vadd.f32 %v1855, %v1868
        %v1871 = vadd.f32 %v1860, %v1868
        %v1872 = vadd.f32 %v1870, %v784
        %v1873 = vadd.f32 %v1871, %v785
        %v1874 = vld [vmem:[%s9] sm:$0x1]
        %v1875 = vld [vmem:[%s10] sm:$0x1]
        %v1876 = vsel %vm742, %v1872, 0.0
        %1877 = vadd.xlane.f32.xlu0 %v1876
        %v1878 = vpop.xlane.xlu0 %1877
        %v1879 = vsel %vm742, %v1873, 0.0
        %1880 = vadd.xlane.f32.xlu0 %v1879
        %v1881 = vpop.xlane.xlu0 %1880
        %v1882 = vmul.f32 %v1878, %v749
        %v1883 = vmul.f32 %v1881, %v749
        %v1884 = vsub.f32 %v1872, %v1882
        %v1885 = vsub.f32 %v1873, %v1883
        %v1886 = vmul.f32 %v1884, %v1884
        %v1887 = vmul.f32 %v1885, %v1885
        %v1888 = vsel %vm742, %v1886, 0.0
        %1889 = vadd.xlane.f32.xlu0 %v1888
        %v1890 = vpop.xlane.xlu0 %1889
        %v1891 = vsel %vm742, %v1887, 0.0
        %1892 = vadd.xlane.f32.xlu0 %v1891
        %v1893 = vpop.xlane.xlu0 %1892
        %v1894 = vmul.f32 %v1890, %v749
        %v1895 = vmul.f32 %v1893, %v749
        %v1896 = vadd.f32 %v1894, 1e-05
        %v1897 = vadd.f32 %v1895, 1e-05
        %v1898 = vrsqrt.pop %v1896
        %v1899 = vrsqrt.pop %v1897
        %v1900 = vmul.f32 %v1884, %v1898
        %v1901 = vmul.f32 %v1885, %v1899
        %v1903 = vlaneseq
        %v1904 = vshrl.u32 %v1903, 7
        %v1905 = vsub.s32 0, %v1904
        %v1906 = vrot.slane %v1874, %v1905
        %v1908 = vmul.f32 %v1900, %v1906
        %v1909 = vmul.f32 %v1901, %v1906
        %v1911 = vlaneseq
        %v1912 = vshrl.u32 %v1911, 7
        %v1913 = vsub.s32 0, %v1912
        %v1914 = vrot.slane %v1875, %v1913
        %v1916 = vadd.f32 %v1908, %v1914
        %v1917 = vadd.f32 %v1909, %v1914
        %v1918 = vld [vmem:[#allocation4] sm:$0xff]
        %v1919 = vld [vmem:[#allocation4 + $0x8] sm:$0xff]
        %v1920 = vld [vmem:[#allocation4 + $0x10] sm:$0xff]
        %v1921 = vld [vmem:[#allocation4 + $0x18] sm:$0xff]
        %v1922 = vld [vmem:[%s12] sm:$0x1]
        %v1924 = vlaneseq
        %v1925 = vshrl.u32 %v1924, 7
        %v1926 = vsub.s32 0, %v1925
        %v1927 = vrot.slane %v1922, %v1926
        %v1930 = vsel %vm742, %v1916, 0
        %v1933 = vsel %vm742, %v1917, 0
        %1935 = vmatprep.subr.mxu0 0.0
        %1936 = vmatpush1.msra.mxu0 %v1918
        %1937 = vmatprep.subr.mxu0 0.0
        %1938 = vmatpush1.msra.mxu0 %v1919
        %1939 = vmatprep.subr.mxu0 0.0
        %1940 = vmatpush1.msra.mxu0 %v1920
        %1941 = vmatprep.subr.mxu0 0.0
        %1942 = vmatpush1.msra.mxu0 %v1921
        %1943 = vmatprep.subr.mxu0 0.0
        %1944 = vmatpush1.msra.mxu0 0.0
        %1945 = vmatprep.subr.mxu0 0.0
        %1946 = vmatpush1.msra.mxu0 0.0
        %1947 = vmatprep.subr.mxu0 0.0
        %1948 = vmatpush1.msra.mxu0 0.0
        %1949 = vmatprep.subr.mxu0 0.0
        %1950 = vmatpush1.msra.mxu0 0.0
        %1951 = vmatprep.subr.mxu0 0.0
        %1952 = vmatpush1.msra.mxu0 0.0
        %1953 = vmatprep.subr.mxu0 0.0
        %1954 = vmatpush1.msra.mxu0 0.0
        %1955 = vmatprep.subr.mxu0 0.0
        %1956 = vmatpush1.msra.mxu0 0.0
        %1957 = vmatprep.subr.mxu0 0.0
        %1958 = vmatpush1.msra.mxu0 0.0
        %1959 = vmatprep.subr.mxu0 0.0
        %1960 = vmatpush1.msra.mxu0 0.0
        %1961 = vmatprep.subr.mxu0 0.0
        %1962 = vmatpush1.msra.mxu0 0.0
        %1963 = vmatprep.subr.mxu0 0.0
        %1964 = vmatpush1.msra.mxu0 0.0
        %1965 = vmatprep.subr.mxu0 0.0
        %1966 = vmatpush1.msra.mxu0 0.0
        %1967 = vmatprep.subr.mxu0 0.0
        %1968 = vmatpush1.msra.mxu0 0.0
        %1969 = vmatprep.subr.mxu0 0.0
        %1970 = vmatpush1.msra.mxu0 0.0
        %1971 = vmatprep.subr.mxu0 0.0
        %1972 = vmatpush1.msra.mxu0 0.0
        %1973 = vmatprep.subr.mxu0 0.0
        %1974 = vmatpush1.msra.mxu0 0.0
        %1975 = vmatprep.subr.mxu0 0.0
        %1976 = vmatpush1.msra.mxu0 0.0
        %1977 = vmatprep.subr.mxu0 0.0
        %1978 = vmatpush1.msra.mxu0 0.0
        %1979 = vmatprep.subr.mxu0 0.0
        %1980 = vmatpush1.msra.mxu0 0.0
        %1981 = vmatprep.subr.mxu0 0.0
        %1982 = vmatpush1.msra.mxu0 0.0
        %1983 = vmatprep.subr.mxu0 0.0
        %1984 = vmatpush1.msra.mxu0 0.0
        %1985 = vmatprep.subr.mxu0 0.0
        %1986 = vmatpush1.msra.mxu0 0.0
        %1987 = vmatprep.subr.mxu0 0.0
        %1988 = vmatpush1.msra.mxu0 0.0
        %1989 = vmatprep.subr.mxu0 0.0
        %1990 = vmatpush1.msra.mxu0 0.0
        %1991 = vmatprep.subr.mxu0 0.0
        %1992 = vmatpush1.msra.mxu0 0.0
        %1993 = vmatprep.subr.mxu0 0.0
        %1994 = vmatpush1.msra.mxu0 0.0
        %1995 = vmatprep.subr.mxu0 0.0
        %1996 = vmatpush1.msra.mxu0 0.0
        %1997 = vmatprep.subr.mxu0 0.0
        %1998 = vmatpush1.msra.mxu0 0.0
        %1999 = vmatprep.mubr.f32.mxu0 0.0
        %2000 = vmatmul.mubr.f32.gmra.mrb[0].mxu0 %v1930
        %v2001 = vpop.f32.mrb[0].mxu0
        %v2002 = vadd.f32 %v1927, %v2001
        %v2003 = vpop.f32.mrb[0].mxu0
        %2004 = vmatprep.mubr.f32.mxu0 0.0
        %2005 = vmatmul.mubr.f32.gmra.mrb[0].mxu0 %v1933
        %v2006 = vpop.f32.mrb[0].mxu0
        %v2007 = vadd.f32 %v1927, %v2006
        %v2008 = vpop.f32.mrb[0].mxu0
        %2009 = vdwg.mxu0
        %v2010 = vmul.f32 %v2002, 0.5
        %v2011 = vmul.f32 %v2007, 0.5
        %v2012 = vmul.f32 %v2002, 0.70710677
        %v2013 = vmul.f32 %v2007, 0.70710677
        %v2014 = vand.u32 2147483647, %v2012
        %v2015 = vand.u32 2147483647, %v2013
        %v2016 = vmul.f32 %v2014, 0.3275911
        %v2017 = vmul.f32 %v2015, 0.3275911
        %v2018 = vadd.f32 %v2016, 1.0
        %v2019 = vadd.f32 %v2017, 1.0
        %v2020 = vrcp.pop %v2018
        %v2021 = vmul.f32 1.0, %v2020
        %v2022 = vrcp.pop %v2019
        %v2023 = vmul.f32 1.0, %v2022
        %v2024 = vmul.f32 %v2021, 1.0614054
        %v2025 = vmul.f32 %v2023, 1.0614054
        %v2026 = vadd.f32 %v2024, -1.4531521
        %v2027 = vadd.f32 %v2025, -1.4531521
        %v2028 = vmul.f32 %v2026, %v2021
        %v2029 = vmul.f32 %v2027, %v2023
        %v2030 = vadd.f32 %v2028, 1.4214138
        %v2031 = vadd.f32 %v2029, 1.4214138
        %v2032 = vmul.f32 %v2030, %v2021
        %v2033 = vmul.f32 %v2031, %v2023
        %v2034 = vadd.f32 %v2032, -0.28449672
        %v2035 = vadd.f32 %v2033, -0.28449672
        %v2036 = vmul.f32 %v2034, %v2021
        %v2037 = vmul.f32 %v2035, %v2023
        %v2038 = vadd.f32 %v2036, 0.2548296
        %v2039 = vadd.f32 %v2037, 0.2548296
        %v2040 = vmul.f32 %v2038, %v2021
        %v2041 = vmul.f32 %v2039, %v2023
        %v2042 = vmul.f32 %v2014, %v2014
        %v2043 = vmul.f32 %v2015, %v2015
        %v2044 = vsub.f32 0.0, %v2042
        %v2045 = vsub.f32 0.0, %v2043
        %v2046 = vmul.f32 %v2044, 1.442695
        %v2047 = vpow.pop %v2046
        %v2048 = vmul.f32 %v2045, 1.442695
        %v2049 = vpow.pop %v2048
        %v2050 = vmul.f32 %v2040, %v2047
        %v2051 = vmul.f32 %v2041, %v2049
        %v2052 = vsub.f32 1.0, %v2050
        %v2053 = vsub.f32 1.0, %v2051
        %vm2054 = vcmp.ge.f32.partialorder %v2012, 0.0
        %vm2055 = vcmp.ge.f32.partialorder %v2013, 0.0
        %v2056 = vsub.f32 0.0, %v2052
        %v2057 = vsub.f32 0.0, %v2053
        %v2058 = vsel %vm2054, %v2052, %v2056
        %v2059 = vsel %vm2055, %v2053, %v2057
        %v2060 = vadd.f32 %v2058, 1.0
        %v2061 = vadd.f32 %v2059, 1.0
        %v2062 = vmul.f32 %v2010, %v2060
        %v2063 = vmul.f32 %v2011, %v2061
        %v2064 = vld [vmem:[%s13] sm:$0xff]
        %v2065 = vld [vmem:[%s13 + $0x8] sm:$0xff]
        %v2066 = vld [vmem:[%s13 + $0x10] sm:$0xff]
        %v2067 = vld [vmem:[%s13 + $0x18] sm:$0xff]
        %v2068 = vld [vmem:[%s13 + $0x20] sm:$0xff]
        %v2069 = vld [vmem:[%s13 + $0x28] sm:$0xff]
        %v2070 = vld [vmem:[%s13 + $0x30] sm:$0xff]
        %v2071 = vld [vmem:[%s13 + $0x38] sm:$0xff]
        %v2072 = vld [vmem:[%s14] sm:$0x1]
        %v2074 = vlaneseq
        %v2075 = vshrl.u32 %v2074, 7
        %v2076 = vsub.s32 0, %v2075
        %v2077 = vrot.slane %v2072, %v2076
        %vm2079 = vcmask 523264
        %v2081 = vsel %vm2079, %v2062, 0
        %v2084 = vsel %vm2079, %v2063, 0
        %2086 = vmatprep.subr.mxu0 0.0
        %2087 = vmatpush1.msra.mxu0 %v2064
        %2088 = vmatprep.subr.mxu0 0.0
        %2089 = vmatpush1.msra.mxu0 %v2065
        %2090 = vmatprep.subr.mxu0 0.0
        %2091 = vmatpush1.msra.mxu0 %v2066
        %2092 = vmatprep.subr.mxu0 0.0
        %2093 = vmatpush1.msra.mxu0 %v2067
        %2094 = vmatprep.subr.mxu0 0.0
        %2095 = vmatpush1.msra.mxu0 %v2068
        %2096 = vmatprep.subr.mxu0 0.0
        %2097 = vmatpush1.msra.mxu0 %v2069
        %2098 = vmatprep.subr.mxu0 0.0
        %2099 = vmatpush1.msra.mxu0 %v2070
        %2100 = vmatprep.subr.mxu0 0.0
        %2101 = vmatpush1.msra.mxu0 %v2071
        %2102 = vmatprep.subr.mxu0 0.0
        %2103 = vmatpush1.msra.mxu0 0.0
        %2104 = vmatprep.subr.mxu0 0.0
        %2105 = vmatpush1.msra.mxu0 0.0
        %2106 = vmatprep.subr.mxu0 0.0
        %2107 = vmatpush1.msra.mxu0 0.0
        %2108 = vmatprep.subr.mxu0 0.0
        %2109 = vmatpush1.msra.mxu0 0.0
        %2110 = vmatprep.subr.mxu0 0.0
        %2111 = vmatpush1.msra.mxu0 0.0
        %2112 = vmatprep.subr.mxu0 0.0
        %2113 = vmatpush1.msra.mxu0 0.0
        %2114 = vmatprep.subr.mxu0 0.0
        %2115 = vmatpush1.msra.mxu0 0.0
        %2116 = vmatprep.subr.mxu0 0.0
        %2117 = vmatpush1.msra.mxu0 0.0
        %2118 = vmatprep.subr.mxu0 0.0
        %2119 = vmatpush1.msra.mxu0 0.0
        %2120 = vmatprep.subr.mxu0 0.0
        %2121 = vmatpush1.msra.mxu0 0.0
        %2122 = vmatprep.subr.mxu0 0.0
        %2123 = vmatpush1.msra.mxu0 0.0
        %2124 = vmatprep.subr.mxu0 0.0
        %2125 = vmatpush1.msra.mxu0 0.0
        %2126 = vmatprep.subr.mxu0 0.0
        %2127 = vmatpush1.msra.mxu0 0.0
        %2128 = vmatprep.subr.mxu0 0.0
        %2129 = vmatpush1.msra.mxu0 0.0
        %2130 = vmatprep.subr.mxu0 0.0
        %2131 = vmatpush1.msra.mxu0 0.0
        %2132 = vmatprep.subr.mxu0 0.0
        %2133 = vmatpush1.msra.mxu0 0.0
        %2134 = vmatprep.subr.mxu0 0.0
        %2135 = vmatpush1.msra.mxu0 0.0
        %2136 = vmatprep.subr.mxu0 0.0
        %2137 = vmatpush1.msra.mxu0 0.0
        %2138 = vmatprep.subr.mxu0 0.0
        %2139 = vmatpush1.msra.mxu0 0.0
        %2140 = vmatprep.subr.mxu0 0.0
        %2141 = vmatpush1.msra.mxu0 0.0
        %2142 = vmatprep.subr.mxu0 0.0
        %2143 = vmatpush1.msra.mxu0 0.0
        %2144 = vmatprep.subr.mxu0 0.0
        %2145 = vmatpush1.msra.mxu0 0.0
        %2146 = vmatprep.subr.mxu0 0.0
        %2147 = vmatpush1.msra.mxu0 0.0
        %2148 = vmatprep.subr.mxu0 0.0
        %2149 = vmatpush1.msra.mxu0 0.0
        %2150 = vmatprep.mubr.f32.mxu0 0.0
        %2151 = vmatmul.mubr.f32.gmra.mrb[0].mxu0 %v2081
        %v2152 = vpop.f32.mrb[0].mxu0
        %v2153 = vadd.f32 %v2077, %v2152
        %v2154 = vpop.f32.mrb[0].mxu0
        %2155 = vmatprep.mubr.f32.mxu0 0.0
        %2156 = vmatmul.mubr.f32.gmra.mrb[0].mxu0 %v2084
        %v2157 = vpop.f32.mrb[0].mxu0
        %v2158 = vadd.f32 %v2077, %v2157
        %v2159 = vpop.f32.mrb[0].mxu0
        %2160 = vdwg.mxu0
        %v2161 = vadd.f32 %v2153, %v1916
        %v2162 = vadd.f32 %v2158, %v1917
        %v2163 = vld [vmem:[%s15] sm:$0x1]
        %v2164 = vld [vmem:[%s16] sm:$0x1]
        %v2165 = vsel %vm742, %v2161, 0.0
        %2166 = vadd.xlane.f32.xlu0 %v2165
        %v2167 = vpop.xlane.xlu0 %2166
        %v2168 = vsel %vm742, %v2162, 0.0
        %2169 = vadd.xlane.f32.xlu0 %v2168
        %v2170 = vpop.xlane.xlu0 %2169
        %v2171 = vmul.f32 %v2167, %v749
        %v2172 = vmul.f32 %v2170, %v749
        %v2173 = vsub.f32 %v2161, %v2171
        %v2174 = vsub.f32 %v2162, %v2172
        %v2175 = vmul.f32 %v2173, %v2173
        %v2176 = vmul.f32 %v2174, %v2174
        %v2177 = vsel %vm742, %v2175, 0.0
        %2178 = vadd.xlane.f32.xlu0 %v2177
        %v2179 = vpop.xlane.xlu0 %2178
        %v2180 = vsel %vm742, %v2176, 0.0
        %2181 = vadd.xlane.f32.xlu0 %v2180
        %v2182 = vpop.xlane.xlu0 %2181
        %v2183 = vmul.f32 %v2179, %v749
        %v2184 = vmul.f32 %v2182, %v749
        %v2185 = vadd.f32 %v2183, 1e-05
        %v2186 = vadd.f32 %v2184, 1e-05
        %v2187 = vrsqrt.pop %v2185
        %v2188 = vrsqrt.pop %v2186
        %v2189 = vmul.f32 %v2173, %v2187
        %v2190 = vmul.f32 %v2174, %v2188
        %v2192 = vlaneseq
        %v2193 = vshrl.u32 %v2192, 7
        %v2194 = vsub.s32 0, %v2193
        %v2195 = vrot.slane %v2163, %v2194
        %v2197 = vmul.f32 %v2189, %v2195
        %v2198 = vmul.f32 %v2190, %v2195
        %v2200 = vlaneseq
        %v2201 = vshrl.u32 %v2200, 7
        %v2202 = vsub.s32 0, %v2201
        %v2203 = vrot.slane %v2164, %v2202
        %v2205 = vadd.f32 %v2197, %v2203
        %v2206 = vadd.f32 %v2198, %v2203
        %s2207 = scalar_lea.vmem %s5, 192
        %v2208 = vld [vmem:[%s2207] sm:$0xff]
        %v2209 = vld [vmem:[%s2207 + $0x8] sm:$0xff]
        %v2210 = vld [vmem:[%s2207 + $0x10] sm:$0xff]
        %v2211 = vld [vmem:[%s2207 + $0x18] sm:$0xff]
        %v2212 = vld [vmem:[%s2207 + $0x20] sm:$0xff]
        %v2213 = vld [vmem:[%s2207 + $0x28] sm:$0xff]
        %v2214 = vld [vmem:[%s2207 + $0x30] sm:$0xff]
        %v2215 = vld [vmem:[%s2207 + $0x38] sm:$0xff]
        %v2216 = vld [vmem:[%s2207 + $0x40] sm:$0xff]
        %v2217 = vld [vmem:[%s2207 + $0x48] sm:$0xff]
        %v2218 = vld [vmem:[%s2207 + $0x50] sm:$0xff]
        %v2219 = vld [vmem:[%s2207 + $0x58] sm:$0xff]
        %v2220 = vld [vmem:[%s2207 + $0x60] sm:$0xff]
        %v2221 = vld [vmem:[%s2207 + $0x68] sm:$0xff]
        %v2222 = vld [vmem:[%s2207 + $0x70] sm:$0xff]
        %v2223 = vld [vmem:[%s2207 + $0x78] sm:$0xff]
        %v2224 = vld [vmem:[%s2207 + $0x80] sm:$0xff]
        %v2225 = vld [vmem:[%s2207 + $0x88] sm:$0xff]
        %v2226 = vld [vmem:[%s2207 + $0x90] sm:$0xff]
        %v2227 = vld [vmem:[%s2207 + $0x98] sm:$0xff]
        %v2228 = vld [vmem:[%s2207 + $0xa0] sm:$0xff]
        %v2229 = vld [vmem:[%s2207 + $0xa8] sm:$0xff]
        %v2230 = vld [vmem:[%s2207 + $0xb0] sm:$0xff]
        %v2231 = vld [vmem:[%s2207 + $0xb8] sm:$0xff]
        %s2232 = scalar_lea.vmem %s6, 6
        %v2233 = vld [vmem:[%s2232] sm:$0x1]
        %v2234 = vld [vmem:[%s2232 + $0x1] sm:$0x1]
        %v2235 = vld [vmem:[%s2232 + $0x2] sm:$0x1]
        %v2236 = vld [vmem:[%s2232 + $0x3] sm:$0x1]
        %v2237 = vld [vmem:[%s2232 + $0x4] sm:$0x1]
        %v2238 = vld [vmem:[%s2232 + $0x5] sm:$0x1]
        %s2239 = scalar_lea.vmem [#allocation2], 32
        %v2240 = vld [vmem:[%s2239] sm:$0xff]
        %v2241 = vld [vmem:[%s2239 + $0x8] sm:$0xff]
        %v2242 = vld [vmem:[%s2239 + $0x10] sm:$0xff]
        %v2243 = vld [vmem:[%s2239 + $0x18] sm:$0xff]
        %v2245 = vlaneseq
        %v2246 = vshrl.u32 %v2245, 7
        %v2247 = vsub.s32 0, %v2246
        %v2248 = vrot.slane %v2233, %v2247
        %v2251 = vsel %vm742, %v2205, 0
        %v2254 = vsel %vm742, %v2206, 0
        %2256 = vmatprep.subr.mxu0 0.0
        %2257 = vmatpush1.msra.mxu0 %v2208
        %2258 = vmatprep.subr.mxu0 0.0
        %2259 = vmatpush1.msra.mxu0 %v2209
        %2260 = vmatprep.subr.mxu0 0.0
        %2261 = vmatpush1.msra.mxu0 %v2210
        %2262 = vmatprep.subr.mxu0 0.0
        %2263 = vmatpush1.msra.mxu0 %v2211
        %2264 = vmatprep.subr.mxu0 0.0
        %2265 = vmatpush1.msra.mxu0 0.0
        %2266 = vmatprep.subr.mxu0 0.0
        %2267 = vmatpush1.msra.mxu0 0.0
        %2268 = vmatprep.subr.mxu0 0.0
        %2269 = vmatpush1.msra.mxu0 0.0
        %2270 = vmatprep.subr.mxu0 0.0
        %2271 = vmatpush1.msra.mxu0 0.0
        %2272 = vmatprep.subr.mxu0 0.0
        %2273 = vmatpush1.msra.mxu0 0.0
        %2274 = vmatprep.subr.mxu0 0.0
        %2275 = vmatpush1.msra.mxu0 0.0
        %2276 = vmatprep.subr.mxu0 0.0
        %2277 = vmatpush1.msra.mxu0 0.0
        %2278 = vmatprep.subr.mxu0 0.0
        %2279 = vmatpush1.msra.mxu0 0.0
        %2280 = vmatprep.subr.mxu0 0.0
        %2281 = vmatpush1.msra.mxu0 0.0
        %2282 = vmatprep.subr.mxu0 0.0
        %2283 = vmatpush1.msra.mxu0 0.0
        %2284 = vmatprep.subr.mxu0 0.0
        %2285 = vmatpush1.msra.mxu0 0.0
        %2286 = vmatprep.subr.mxu0 0.0
        %2287 = vmatpush1.msra.mxu0 0.0
        %2288 = vmatprep.subr.mxu0 0.0
        %2289 = vmatpush1.msra.mxu0 0.0
        %2290 = vmatprep.subr.mxu0 0.0
        %2291 = vmatpush1.msra.mxu0 0.0
        %2292 = vmatprep.subr.mxu0 0.0
        %2293 = vmatpush1.msra.mxu0 0.0
        %2294 = vmatprep.subr.mxu0 0.0
        %2295 = vmatpush1.msra.mxu0 0.0
        %2296 = vmatprep.subr.mxu0 0.0
        %2297 = vmatpush1.msra.mxu0 0.0
        %2298 = vmatprep.subr.mxu0 0.0
        %2299 = vmatpush1.msra.mxu0 0.0
        %2300 = vmatprep.subr.mxu0 0.0
        %2301 = vmatpush1.msra.mxu0 0.0
        %2302 = vmatprep.subr.mxu0 0.0
        %2303 = vmatpush1.msra.mxu0 0.0
        %2304 = vmatprep.subr.mxu0 0.0
        %2305 = vmatpush1.msra.mxu0 0.0
        %2306 = vmatprep.subr.mxu0 0.0
        %2307 = vmatpush1.msra.mxu0 0.0
        %2308 = vmatprep.subr.mxu0 0.0
        %2309 = vmatpush1.msra.mxu0 0.0
        %2310 = vmatprep.subr.mxu0 0.0
        %2311 = vmatpush1.msra.mxu0 0.0
        %2312 = vmatprep.subr.mxu0 0.0
        %2313 = vmatpush1.msra.mxu0 0.0
        %2314 = vmatprep.subr.mxu0 0.0
        %2315 = vmatpush1.msra.mxu0 0.0
        %2316 = vmatprep.subr.mxu0 0.0
        %2317 = vmatpush1.msra.mxu0 0.0
        %2318 = vmatprep.subr.mxu0 0.0
        %2319 = vmatpush1.msra.mxu0 0.0
        %2320 = vmatprep.mubr.f32.mxu0 0.0
        %2321 = vmatmul.mubr.f32.gmra.mrb[0].mxu0 %v2251
        %v2322 = vpop.f32.mrb[0].mxu0
        %v2323 = vadd.f32 %v2248, %v2322
        %v2324 = vpop.f32.mrb[0].mxu0
        %2325 = vmatprep.mubr.f32.mxu0 0.0
        %2326 = vmatmul.mubr.f32.gmra.mrb[0].mxu0 %v2254
        %v2327 = vpop.f32.mrb[0].mxu0
        %v2328 = vadd.f32 %v2248, %v2327
        %v2329 = vpop.f32.mrb[0].mxu0
        %2330 = vdwg.mxu0
        %v2332 = vlaneseq
        %v2333 = vshrl.u32 %v2332, 7
        %v2334 = vsub.s32 0, %v2333
        %v2335 = vrot.slane %v2235, %v2334
        %2337 = vmatprep.subr.mxu0 0.0
        %2338 = vmatpush1.msra.mxu0 %v2216
        %2339 = vmatprep.subr.mxu0 0.0
        %2340 = vmatpush1.msra.mxu0 %v2217
        %2341 = vmatprep.subr.mxu0 0.0
        %2342 = vmatpush1.msra.mxu0 %v2218
        %2343 = vmatprep.subr.mxu0 0.0
        %2344 = vmatpush1.msra.mxu0 %v2219
        %2345 = vmatprep.subr.mxu0 0.0
        %2346 = vmatpush1.msra.mxu0 0.0
        %2347 = vmatprep.subr.mxu0 0.0
        %2348 = vmatpush1.msra.mxu0 0.0
        %2349 = vmatprep.subr.mxu0 0.0
        %2350 = vmatpush1.msra.mxu0 0.0
        %2351 = vmatprep.subr.mxu0 0.0
        %2352 = vmatpush1.msra.mxu0 0.0
        %2353 = vmatprep.subr.mxu0 0.0
        %2354 = vmatpush1.msra.mxu0 0.0
        %2355 = vmatprep.subr.mxu0 0.0
        %2356 = vmatpush1.msra.mxu0 0.0
        %2357 = vmatprep.subr.mxu0 0.0
        %2358 = vmatpush1.msra.mxu0 0.0
        %2359 = vmatprep.subr.mxu0 0.0
        %2360 = vmatpush1.msra.mxu0 0.0
        %2361 = vmatprep.subr.mxu0 0.0
        %2362 = vmatpush1.msra.mxu0 0.0
        %2363 = vmatprep.subr.mxu0 0.0
        %2364 = vmatpush1.msra.mxu0 0.0
        %2365 = vmatprep.subr.mxu0 0.0
        %2366 = vmatpush1.msra.mxu0 0.0
        %2367 = vmatprep.subr.mxu0 0.0
        %2368 = vmatpush1.msra.mxu0 0.0
        %2369 = vmatprep.subr.mxu0 0.0
        %2370 = vmatpush1.msra.mxu0 0.0
        %2371 = vmatprep.subr.mxu0 0.0
        %2372 = vmatpush1.msra.mxu0 0.0
        %2373 = vmatprep.subr.mxu0 0.0
        %2374 = vmatpush1.msra.mxu0 0.0
        %2375 = vmatprep.subr.mxu0 0.0
        %2376 = vmatpush1.msra.mxu0 0.0
        %2377 = vmatprep.subr.mxu0 0.0
        %2378 = vmatpush1.msra.mxu0 0.0
        %2379 = vmatprep.subr.mxu0 0.0
        %2380 = vmatpush1.msra.mxu0 0.0
        %2381 = vmatprep.subr.mxu0 0.0
        %2382 = vmatpush1.msra.mxu0 0.0
        %2383 = vmatprep.subr.mxu0 0.0
        %2384 = vmatpush1.msra.mxu0 0.0
        %2385 = vmatprep.subr.mxu0 0.0
        %2386 = vmatpush1.msra.mxu0 0.0
        %2387 = vmatprep.subr.mxu0 0.0
        %2388 = vmatpush1.msra.mxu0 0.0
        %2389 = vmatprep.subr.mxu0 0.0
        %2390 = vmatpush1.msra.mxu0 0.0
        %2391 = vmatprep.subr.mxu0 0.0
        %2392 = vmatpush1.msra.mxu0 0.0
        %2393 = vmatprep.subr.mxu0 0.0
        %2394 = vmatpush1.msra.mxu0 0.0
        %2395 = vmatprep.subr.mxu0 0.0
        %2396 = vmatpush1.msra.mxu0 0.0
        %2397 = vmatprep.subr.mxu0 0.0
        %2398 = vmatpush1.msra.mxu0 0.0
        %2399 = vmatprep.subr.mxu0 0.0
        %2400 = vmatpush1.msra.mxu0 0.0
        %2401 = vmatprep.mubr.f32.mxu0 0.0
        %2402 = vmatmul.mubr.f32.gmra.mrb[0].mxu0 %v2251
        %v2403 = vpop.f32.mrb[0].mxu0
        %v2404 = vadd.f32 %v2335, %v2403
        %v2405 = vpop.f32.mrb[0].mxu0
        %2406 = vmatprep.mubr.f32.mxu0 0.0
        %2407 = vmatmul.mubr.f32.gmra.mrb[0].mxu0 %v2254
        %v2408 = vpop.f32.mrb[0].mxu0
        %v2409 = vadd.f32 %v2335, %v2408
        %v2410 = vpop.f32.mrb[0].mxu0
        %2411 = vdwg.mxu0
        %v2413 = vlaneseq
        %v2414 = vshrl.u32 %v2413, 7
        %v2415 = vsub.s32 0, %v2414
        %v2416 = vrot.slane %v2237, %v2415
        %2418 = vmatprep.subr.mxu0 0.0
        %2419 = vmatpush1.msra.mxu0 %v2224
        %2420 = vmatprep.subr.mxu0 0.0
        %2421 = vmatpush1.msra.mxu0 %v2225
        %2422 = vmatprep.subr.mxu0 0.0
        %2423 = vmatpush1.msra.mxu0 %v2226
        %2424 = vmatprep.subr.mxu0 0.0
        %2425 = vmatpush1.msra.mxu0 %v2227
        %2426 = vmatprep.subr.mxu0 0.0
        %2427 = vmatpush1.msra.mxu0 0.0
        %2428 = vmatprep.subr.mxu0 0.0
        %2429 = vmatpush1.msra.mxu0 0.0
        %2430 = vmatprep.subr.mxu0 0.0
        %2431 = vmatpush1.msra.mxu0 0.0
        %2432 = vmatprep.subr.mxu0 0.0
        %2433 = vmatpush1.msra.mxu0 0.0
        %2434 = vmatprep.subr.mxu0 0.0
        %2435 = vmatpush1.msra.mxu0 0.0
        %2436 = vmatprep.subr.mxu0 0.0
        %2437 = vmatpush1.msra.mxu0 0.0
        %2438 = vmatprep.subr.mxu0 0.0
        %2439 = vmatpush1.msra.mxu0 0.0
        %2440 = vmatprep.subr.mxu0 0.0
        %2441 = vmatpush1.msra.mxu0 0.0
        %2442 = vmatprep.subr.mxu0 0.0
        %2443 = vmatpush1.msra.mxu0 0.0
        %2444 = vmatprep.subr.mxu0 0.0
        %2445 = vmatpush1.msra.mxu0 0.0
        %2446 = vmatprep.subr.mxu0 0.0
        %2447 = vmatpush1.msra.mxu0 0.0
        %2448 = vmatprep.subr.mxu0 0.0
        %2449 = vmatpush1.msra.mxu0 0.0
        %2450 = vmatprep.subr.mxu0 0.0
        %2451 = vmatpush1.msra.mxu0 0.0
        %2452 = vmatprep.subr.mxu0 0.0
        %2453 = vmatpush1.msra.mxu0 0.0
        %2454 = vmatprep.subr.mxu0 0.0
        %2455 = vmatpush1.msra.mxu0 0.0
        %2456 = vmatprep.subr.mxu0 0.0
        %2457 = vmatpush1.msra.mxu0 0.0
        %2458 = vmatprep.subr.mxu0 0.0
        %2459 = vmatpush1.msra.mxu0 0.0
        %2460 = vmatprep.subr.mxu0 0.0
        %2461 = vmatpush1.msra.mxu0 0.0
        %2462 = vmatprep.subr.mxu0 0.0
        %2463 = vmatpush1.msra.mxu0 0.0
        %2464 = vmatprep.subr.mxu0 0.0
        %2465 = vmatpush1.msra.mxu0 0.0
        %2466 = vmatprep.subr.mxu0 0.0
        %2467 = vmatpush1.msra.mxu0 0.0
        %2468 = vmatprep.subr.mxu0 0.0
        %2469 = vmatpush1.msra.mxu0 0.0
        %2470 = vmatprep.subr.mxu0 0.0
        %2471 = vmatpush1.msra.mxu0 0.0
        %2472 = vmatprep.subr.mxu0 0.0
        %2473 = vmatpush1.msra.mxu0 0.0
        %2474 = vmatprep.subr.mxu0 0.0
        %2475 = vmatpush1.msra.mxu0 0.0
        %2476 = vmatprep.subr.mxu0 0.0
        %2477 = vmatpush1.msra.mxu0 0.0
        %2478 = vmatprep.subr.mxu0 0.0
        %2479 = vmatpush1.msra.mxu0 0.0
        %2480 = vmatprep.subr.mxu0 0.0
        %2481 = vmatpush1.msra.mxu0 0.0
        %2482 = vmatprep.mubr.f32.mxu0 0.0
        %2483 = vmatmul.mubr.f32.gmra.mrb[0].mxu0 %v2251
        %v2484 = vpop.f32.mrb[0].mxu0
        %v2485 = vadd.f32 %v2416, %v2484
        %v2486 = vpop.f32.mrb[0].mxu0
        %2487 = vmatprep.mubr.f32.mxu0 0.0
        %2488 = vmatmul.mubr.f32.gmra.mrb[0].mxu0 %v2254
        %v2489 = vpop.f32.mrb[0].mxu0
        %v2490 = vadd.f32 %v2416, %v2489
        %v2491 = vpop.f32.mrb[0].mxu0
        %2492 = vdwg.mxu0
        %v2494 = vsel %vm1069, %v2323, 0
        %v2497 = vsel %vm1069, %v2328, 0
        %v2500 = vsel %vm1069, %v2404, 0
        %v2503 = vsel %vm1069, %v2409, 0
        %2505 = vmatprep.subr.mxu0 0.0
        %2506 = vmatpush1.xpose.msra.mxu0 %v2500
        %2507 = vmatprep.subr.mxu0 0.0
        %2508 = vmatpush1.xpose.msra.mxu0 %v2503
        %2509 = vmatprep.subr.mxu0 0.0
        %2510 = vmatpush1.xpose.msra.mxu0 0.0
        %2511 = vmatprep.subr.mxu0 0.0
        %2512 = vmatpush1.xpose.msra.mxu0 0.0
        %2513 = vmatprep.subr.mxu0 0.0
        %2514 = vmatpush1.xpose.msra.mxu0 0.0
        %2515 = vmatprep.subr.mxu0 0.0
        %2516 = vmatpush1.xpose.msra.mxu0 0.0
        %2517 = vmatprep.subr.mxu0 0.0
        %2518 = vmatpush1.xpose.msra.mxu0 0.0
        %2519 = vmatprep.subr.mxu0 0.0
        %2520 = vmatpush1.xpose.msra.mxu0 0.0
        %2521 = vmatprep.subr.mxu0 0.0
        %2522 = vmatpush1.xpose.msra.mxu0 0.0
        %2523 = vmatprep.subr.mxu0 0.0
        %2524 = vmatpush1.xpose.msra.mxu0 0.0
        %2525 = vmatprep.subr.mxu0 0.0
        %2526 = vmatpush1.xpose.msra.mxu0 0.0
        %2527 = vmatprep.subr.mxu0 0.0
        %2528 = vmatpush1.xpose.msra.mxu0 0.0
        %2529 = vmatprep.subr.mxu0 0.0
        %2530 = vmatpush1.xpose.msra.mxu0 0.0
        %2531 = vmatprep.subr.mxu0 0.0
        %2532 = vmatpush1.xpose.msra.mxu0 0.0
        %2533 = vmatprep.subr.mxu0 0.0
        %2534 = vmatpush1.xpose.msra.mxu0 0.0
        %2535 = vmatprep.subr.mxu0 0.0
        %2536 = vmatpush1.xpose.msra.mxu0 0.0
        %2537 = vmatprep.subr.mxu0 0.0
        %2538 = vmatpush1.xpose.msra.mxu0 0.0
        %2539 = vmatprep.subr.mxu0 0.0
        %2540 = vmatpush1.xpose.msra.mxu0 0.0
        %2541 = vmatprep.subr.mxu0 0.0
        %2542 = vmatpush1.xpose.msra.mxu0 0.0
        %2543 = vmatprep.subr.mxu0 0.0
        %2544 = vmatpush1.xpose.msra.mxu0 0.0
        %2545 = vmatprep.subr.mxu0 0.0
        %2546 = vmatpush1.xpose.msra.mxu0 0.0
        %2547 = vmatprep.subr.mxu0 0.0
        %2548 = vmatpush1.xpose.msra.mxu0 0.0
        %2549 = vmatprep.subr.mxu0 0.0
        %2550 = vmatpush1.xpose.msra.mxu0 0.0
        %2551 = vmatprep.subr.mxu0 0.0
        %2552 = vmatpush1.xpose.msra.mxu0 0.0
        %2553 = vmatprep.subr.mxu0 0.0
        %2554 = vmatpush1.xpose.msra.mxu0 0.0
        %2555 = vmatprep.subr.mxu0 0.0
        %2556 = vmatpush1.xpose.msra.mxu0 0.0
        %2557 = vmatprep.subr.mxu0 0.0
        %2558 = vmatpush1.xpose.msra.mxu0 0.0
        %2559 = vmatprep.subr.mxu0 0.0
        %2560 = vmatpush1.xpose.msra.mxu0 0.0
        %2561 = vmatprep.subr.mxu0 0.0
        %2562 = vmatpush1.xpose.msra.mxu0 0.0
        %2563 = vmatprep.subr.mxu0 0.0
        %2564 = vmatpush1.xpose.msra.mxu0 0.0
        %2565 = vmatprep.subr.mxu0 0.0
        %2566 = vmatpush1.xpose.msra.mxu0 0.0
        %2567 = vmatprep.subr.mxu0 0.0
        %2568 = vmatpush1.xpose.msra.mxu0 0.0
        %2569 = vmatprep.mubr.f32.mxu0 0.0
        %2570 = vmatmul.mubr.f32.gmra.mrb[0].mxu0 %v2494
        %v2571 = vpop.f32.mrb[0].mxu0
        %v2572 = vadd.f32 0.0, %v2571
        %v2573 = vpop.f32.mrb[0].mxu0
        %2574 = vmatprep.mubr.f32.mxu0 0.0
        %2575 = vmatmul.mubr.f32.gmra.mrb[0].mxu0 %v2497
        %v2576 = vpop.f32.mrb[0].mxu0
        %v2577 = vadd.f32 0.0, %v2576
        %v2578 = vpop.f32.mrb[0].mxu0
        %2579 = vdwg.mxu0
        %v2580 = vmul.f32 %v2572, 0.25
        %v2581 = vmul.f32 %v2577, 0.25
        %v2582 = vadd.f32 %v2580, %v738
        %v2583 = vadd.f32 %v2581, %v739
        %v2584 = vsel %vm1069, %v2582, -inf
        %2585 = vmax.xlane.f32.xlu0 %v2584
        %v2586 = vpop.xlane.xlu0 %2585
        %v2587 = vsel %vm1069, %v2583, -inf
        %2588 = vmax.xlane.f32.xlu0 %v2587
        %v2589 = vpop.xlane.xlu0 %2588
        %v2590 = vsub.f32 %v2582, %v2586
        %v2591 = vsub.f32 %v2583, %v2589
        %v2592 = vmul.f32 %v2590, 1.442695
        %v2593 = vpow.pop %v2592
        %v2594 = vmul.f32 %v2591, 1.442695
        %v2595 = vpow.pop %v2594
        %v2596 = vsel %vm1069, %v2593, 0.0
        %2597 = vadd.xlane.f32.xlu0 %v2596
        %v2598 = vpop.xlane.xlu0 %2597
        %v2599 = vsel %vm1069, %v2595, 0.0
        %2600 = vadd.xlane.f32.xlu0 %v2599
        %v2601 = vpop.xlane.xlu0 %2600
        %v2602 = vrcp.pop %v2598
        %v2603 = vrcp.pop %v2601
        %v2604 = vmul.f32 %v2593, %v2602
        %v2605 = vmul.f32 %v2595, %v2603
        %v2607 = vsel %vm1069, %v2604, 0
        %v2610 = vsel %vm1069, %v2605, 0
        %2612 = vmatprep.subr.mxu0 0.0
        %2613 = vmatpush1.msra.mxu0 %v2485
        %2614 = vmatprep.subr.mxu0 0.0
        %2615 = vmatpush1.msra.mxu0 %v2490
        %2616 = vmatprep.subr.mxu0 0.0
        %2617 = vmatpush1.msra.mxu0 0.0
        %2618 = vmatprep.subr.mxu0 0.0
        %2619 = vmatpush1.msra.mxu0 0.0
        %2620 = vmatprep.subr.mxu0 0.0
        %2621 = vmatpush1.msra.mxu0 0.0
        %2622 = vmatprep.subr.mxu0 0.0
        %2623 = vmatpush1.msra.mxu0 0.0
        %2624 = vmatprep.subr.mxu0 0.0
        %2625 = vmatpush1.msra.mxu0 0.0
        %2626 = vmatprep.subr.mxu0 0.0
        %2627 = vmatpush1.msra.mxu0 0.0
        %2628 = vmatprep.subr.mxu0 0.0
        %2629 = vmatpush1.msra.mxu0 0.0
        %2630 = vmatprep.subr.mxu0 0.0
        %2631 = vmatpush1.msra.mxu0 0.0
        %2632 = vmatprep.subr.mxu0 0.0
        %2633 = vmatpush1.msra.mxu0 0.0
        %2634 = vmatprep.subr.mxu0 0.0
        %2635 = vmatpush1.msra.mxu0 0.0
        %2636 = vmatprep.subr.mxu0 0.0
        %2637 = vmatpush1.msra.mxu0 0.0
        %2638 = vmatprep.subr.mxu0 0.0
        %2639 = vmatpush1.msra.mxu0 0.0
        %2640 = vmatprep.subr.mxu0 0.0
        %2641 = vmatpush1.msra.mxu0 0.0
        %2642 = vmatprep.subr.mxu0 0.0
        %2643 = vmatpush1.msra.mxu0 0.0
        %2644 = vmatprep.subr.mxu0 0.0
        %2645 = vmatpush1.msra.mxu0 0.0
        %2646 = vmatprep.subr.mxu0 0.0
        %2647 = vmatpush1.msra.mxu0 0.0
        %2648 = vmatprep.subr.mxu0 0.0
        %2649 = vmatpush1.msra.mxu0 0.0
        %2650 = vmatprep.subr.mxu0 0.0
        %2651 = vmatpush1.msra.mxu0 0.0
        %2652 = vmatprep.subr.mxu0 0.0
        %2653 = vmatpush1.msra.mxu0 0.0
        %2654 = vmatprep.subr.mxu0 0.0
        %2655 = vmatpush1.msra.mxu0 0.0
        %2656 = vmatprep.subr.mxu0 0.0
        %2657 = vmatpush1.msra.mxu0 0.0
        %2658 = vmatprep.subr.mxu0 0.0
        %2659 = vmatpush1.msra.mxu0 0.0
        %2660 = vmatprep.subr.mxu0 0.0
        %2661 = vmatpush1.msra.mxu0 0.0
        %2662 = vmatprep.subr.mxu0 0.0
        %2663 = vmatpush1.msra.mxu0 0.0
        %2664 = vmatprep.subr.mxu0 0.0
        %2665 = vmatpush1.msra.mxu0 0.0
        %2666 = vmatprep.subr.mxu0 0.0
        %2667 = vmatpush1.msra.mxu0 0.0
        %2668 = vmatprep.subr.mxu0 0.0
        %2669 = vmatpush1.msra.mxu0 0.0
        %2670 = vmatprep.subr.mxu0 0.0
        %2671 = vmatpush1.msra.mxu0 0.0
        %2672 = vmatprep.subr.mxu0 0.0
        %2673 = vmatpush1.msra.mxu0 0.0
        %2674 = vmatprep.subr.mxu0 0.0
        %2675 = vmatpush1.msra.mxu0 0.0
        %2676 = vmatprep.mubr.f32.mxu0 0.0
        %2677 = vmatmul.mubr.f32.gmra.mrb[0].mxu0 %v2607
        %v2678 = vpop.f32.mrb[0].mxu0
        %v2679 = vadd.f32 0.0, %v2678
        %v2680 = vpop.f32.mrb[0].mxu0
        %2681 = vmatprep.mubr.f32.mxu0 0.0
        %2682 = vmatmul.mubr.f32.gmra.mrb[0].mxu0 %v2610
        %v2683 = vpop.f32.mrb[0].mxu0
        %v2684 = vadd.f32 0.0, %v2683
        %v2685 = vpop.f32.mrb[0].mxu0
        %2686 = vdwg.mxu0
        %v2688 = vlaneseq
        %v2689 = vshrl.u32 %v2688, 7
        %v2690 = vsub.s32 0, %v2689
        %v2691 = vrot.slane %v2234, %v2690
        %2693 = vmatprep.subr.mxu0 0.0
        %2694 = vmatpush1.msra.mxu0 %v2212
        %2695 = vmatprep.subr.mxu0 0.0
        %2696 = vmatpush1.msra.mxu0 %v2213
        %2697 = vmatprep.subr.mxu0 0.0
        %2698 = vmatpush1.msra.mxu0 %v2214
        %2699 = vmatprep.subr.mxu0 0.0
        %2700 = vmatpush1.msra.mxu0 %v2215
        %2701 = vmatprep.subr.mxu0 0.0
        %2702 = vmatpush1.msra.mxu0 0.0
        %2703 = vmatprep.subr.mxu0 0.0
        %2704 = vmatpush1.msra.mxu0 0.0
        %2705 = vmatprep.subr.mxu0 0.0
        %2706 = vmatpush1.msra.mxu0 0.0
        %2707 = vmatprep.subr.mxu0 0.0
        %2708 = vmatpush1.msra.mxu0 0.0
        %2709 = vmatprep.subr.mxu0 0.0
        %2710 = vmatpush1.msra.mxu0 0.0
        %2711 = vmatprep.subr.mxu0 0.0
        %2712 = vmatpush1.msra.mxu0 0.0
        %2713 = vmatprep.subr.mxu0 0.0
        %2714 = vmatpush1.msra.mxu0 0.0
        %2715 = vmatprep.subr.mxu0 0.0
        %2716 = vmatpush1.msra.mxu0 0.0
        %2717 = vmatprep.subr.mxu0 0.0
        %2718 = vmatpush1.msra.mxu0 0.0
        %2719 = vmatprep.subr.mxu0 0.0
        %2720 = vmatpush1.msra.mxu0 0.0
        %2721 = vmatprep.subr.mxu0 0.0
        %2722 = vmatpush1.msra.mxu0 0.0
        %2723 = vmatprep.subr.mxu0 0.0
        %2724 = vmatpush1.msra.mxu0 0.0
        %2725 = vmatprep.subr.mxu0 0.0
        %2726 = vmatpush1.msra.mxu0 0.0
        %2727 = vmatprep.subr.mxu0 0.0
        %2728 = vmatpush1.msra.mxu0 0.0
        %2729 = vmatprep.subr.mxu0 0.0
        %2730 = vmatpush1.msra.mxu0 0.0
        %2731 = vmatprep.subr.mxu0 0.0
        %2732 = vmatpush1.msra.mxu0 0.0
        %2733 = vmatprep.subr.mxu0 0.0
        %2734 = vmatpush1.msra.mxu0 0.0
        %2735 = vmatprep.subr.mxu0 0.0
        %2736 = vmatpush1.msra.mxu0 0.0
        %2737 = vmatprep.subr.mxu0 0.0
        %2738 = vmatpush1.msra.mxu0 0.0
        %2739 = vmatprep.subr.mxu0 0.0
        %2740 = vmatpush1.msra.mxu0 0.0
        %2741 = vmatprep.subr.mxu0 0.0
        %2742 = vmatpush1.msra.mxu0 0.0
        %2743 = vmatprep.subr.mxu0 0.0
        %2744 = vmatpush1.msra.mxu0 0.0
        %2745 = vmatprep.subr.mxu0 0.0
        %2746 = vmatpush1.msra.mxu0 0.0
        %2747 = vmatprep.subr.mxu0 0.0
        %2748 = vmatpush1.msra.mxu0 0.0
        %2749 = vmatprep.subr.mxu0 0.0
        %2750 = vmatpush1.msra.mxu0 0.0
        %2751 = vmatprep.subr.mxu0 0.0
        %2752 = vmatpush1.msra.mxu0 0.0
        %2753 = vmatprep.subr.mxu0 0.0
        %2754 = vmatpush1.msra.mxu0 0.0
        %2755 = vmatprep.subr.mxu0 0.0
        %2756 = vmatpush1.msra.mxu0 0.0
        %2757 = vmatprep.mubr.f32.mxu0 0.0
        %2758 = vmatmul.mubr.f32.gmra.mrb[0].mxu0 %v2251
        %v2759 = vpop.f32.mrb[0].mxu0
        %v2760 = vadd.f32 %v2691, %v2759
        %v2761 = vpop.f32.mrb[0].mxu0
        %2762 = vmatprep.mubr.f32.mxu0 0.0
        %2763 = vmatmul.mubr.f32.gmra.mrb[0].mxu0 %v2254
        %v2764 = vpop.f32.mrb[0].mxu0
        %v2765 = vadd.f32 %v2691, %v2764
        %v2766 = vpop.f32.mrb[0].mxu0
        %2767 = vdwg.mxu0
        %v2769 = vlaneseq
        %v2770 = vshrl.u32 %v2769, 7
        %v2771 = vsub.s32 0, %v2770
        %v2772 = vrot.slane %v2236, %v2771
        %2774 = vmatprep.subr.mxu0 0.0
        %2775 = vmatpush1.msra.mxu0 %v2220
        %2776 = vmatprep.subr.mxu0 0.0
        %2777 = vmatpush1.msra.mxu0 %v2221
        %2778 = vmatprep.subr.mxu0 0.0
        %2779 = vmatpush1.msra.mxu0 %v2222
        %2780 = vmatprep.subr.mxu0 0.0
        %2781 = vmatpush1.msra.mxu0 %v2223
        %2782 = vmatprep.subr.mxu0 0.0
        %2783 = vmatpush1.msra.mxu0 0.0
        %2784 = vmatprep.subr.mxu0 0.0
        %2785 = vmatpush1.msra.mxu0 0.0
        %2786 = vmatprep.subr.mxu0 0.0
        %2787 = vmatpush1.msra.mxu0 0.0
        %2788 = vmatprep.subr.mxu0 0.0
        %2789 = vmatpush1.msra.mxu0 0.0
        %2790 = vmatprep.subr.mxu0 0.0
        %2791 = vmatpush1.msra.mxu0 0.0
        %2792 = vmatprep.subr.mxu0 0.0
        %2793 = vmatpush1.msra.mxu0 0.0
        %2794 = vmatprep.subr.mxu0 0.0
        %2795 = vmatpush1.msra.mxu0 0.0
        %2796 = vmatprep.subr.mxu0 0.0
        %2797 = vmatpush1.msra.mxu0 0.0
        %2798 = vmatprep.subr.mxu0 0.0
        %2799 = vmatpush1.msra.mxu0 0.0
        %2800 = vmatprep.subr.mxu0 0.0
        %2801 = vmatpush1.msra.mxu0 0.0
        %2802 = vmatprep.subr.mxu0 0.0
        %2803 = vmatpush1.msra.mxu0 0.0
        %2804 = vmatprep.subr.mxu0 0.0
        %2805 = vmatpush1.msra.mxu0 0.0
        %2806 = vmatprep.subr.mxu0 0.0
        %2807 = vmatpush1.msra.mxu0 0.0
        %2808 = vmatprep.subr.mxu0 0.0
        %2809 = vmatpush1.msra.mxu0 0.0
        %2810 = vmatprep.subr.mxu0 0.0
        %2811 = vmatpush1.msra.mxu0 0.0
        %2812 = vmatprep.subr.mxu0 0.0
        %2813 = vmatpush1.msra.mxu0 0.0
        %2814 = vmatprep.subr.mxu0 0.0
        %2815 = vmatpush1.msra.mxu0 0.0
        %2816 = vmatprep.subr.mxu0 0.0
        %2817 = vmatpush1.msra.mxu0 0.0
        %2818 = vmatprep.subr.mxu0 0.0
        %2819 = vmatpush1.msra.mxu0 0.0
        %2820 = vmatprep.subr.mxu0 0.0
        %2821 = vmatpush1.msra.mxu0 0.0
        %2822 = vmatprep.subr.mxu0 0.0
        %2823 = vmatpush1.msra.mxu0 0.0
        %2824 = vmatprep.subr.mxu0 0.0
        %2825 = vmatpush1.msra.mxu0 0.0
        %2826 = vmatprep.subr.mxu0 0.0
        %2827 = vmatpush1.msra.mxu0 0.0
        %2828 = vmatprep.subr.mxu0 0.0
        %2829 = vmatpush1.msra.mxu0 0.0
        %2830 = vmatprep.subr.mxu0 0.0
        %2831 = vmatpush1.msra.mxu0 0.0
        %2832 = vmatprep.subr.mxu0 0.0
        %2833 = vmatpush1.msra.mxu0 0.0
        %2834 = vmatprep.subr.mxu0 0.0
        %2835 = vmatpush1.msra.mxu0 0.0
        %2836 = vmatprep.subr.mxu0 0.0
        %2837 = vmatpush1.msra.mxu0 0.0
        %2838 = vmatprep.mubr.f32.mxu0 0.0
        %2839 = vmatmul.mubr.f32.gmra.mrb[0].mxu0 %v2251
        %v2840 = vpop.f32.mrb[0].mxu0
        %v2841 = vadd.f32 %v2772, %v2840
        %v2842 = vpop.f32.mrb[0].mxu0
        %2843 = vmatprep.mubr.f32.mxu0 0.0
        %2844 = vmatmul.mubr.f32.gmra.mrb[0].mxu0 %v2254
        %v2845 = vpop.f32.mrb[0].mxu0
        %v2846 = vadd.f32 %v2772, %v2845
        %v2847 = vpop.f32.mrb[0].mxu0
        %2848 = vdwg.mxu0
        %v2850 = vlaneseq
        %v2851 = vshrl.u32 %v2850, 7
        %v2852 = vsub.s32 0, %v2851
        %v2853 = vrot.slane %v2238, %v2852
        %2855 = vmatprep.subr.mxu0 0.0
        %2856 = vmatpush1.msra.mxu0 %v2228
        %2857 = vmatprep.subr.mxu0 0.0
        %2858 = vmatpush1.msra.mxu0 %v2229
        %2859 = vmatprep.subr.mxu0 0.0
        %2860 = vmatpush1.msra.mxu0 %v2230
        %2861 = vmatprep.subr.mxu0 0.0
        %2862 = vmatpush1.msra.mxu0 %v2231
        %2863 = vmatprep.subr.mxu0 0.0
        %2864 = vmatpush1.msra.mxu0 0.0
        %2865 = vmatprep.subr.mxu0 0.0
        %2866 = vmatpush1.msra.mxu0 0.0
        %2867 = vmatprep.subr.mxu0 0.0
        %2868 = vmatpush1.msra.mxu0 0.0
        %2869 = vmatprep.subr.mxu0 0.0
        %2870 = vmatpush1.msra.mxu0 0.0
        %2871 = vmatprep.subr.mxu0 0.0
        %2872 = vmatpush1.msra.mxu0 0.0
        %2873 = vmatprep.subr.mxu0 0.0
        %2874 = vmatpush1.msra.mxu0 0.0
        %2875 = vmatprep.subr.mxu0 0.0
        %2876 = vmatpush1.msra.mxu0 0.0
        %2877 = vmatprep.subr.mxu0 0.0
        %2878 = vmatpush1.msra.mxu0 0.0
        %2879 = vmatprep.subr.mxu0 0.0
        %2880 = vmatpush1.msra.mxu0 0.0
        %2881 = vmatprep.subr.mxu0 0.0
        %2882 = vmatpush1.msra.mxu0 0.0
        %2883 = vmatprep.subr.mxu0 0.0
        %2884 = vmatpush1.msra.mxu0 0.0
        %2885 = vmatprep.subr.mxu0 0.0
        %2886 = vmatpush1.msra.mxu0 0.0
        %2887 = vmatprep.subr.mxu0 0.0
        %2888 = vmatpush1.msra.mxu0 0.0
        %2889 = vmatprep.subr.mxu0 0.0
        %2890 = vmatpush1.msra.mxu0 0.0
        %2891 = vmatprep.subr.mxu0 0.0
        %2892 = vmatpush1.msra.mxu0 0.0
        %2893 = vmatprep.subr.mxu0 0.0
        %2894 = vmatpush1.msra.mxu0 0.0
        %2895 = vmatprep.subr.mxu0 0.0
        %2896 = vmatpush1.msra.mxu0 0.0
        %2897 = vmatprep.subr.mxu0 0.0
        %2898 = vmatpush1.msra.mxu0 0.0
        %2899 = vmatprep.subr.mxu0 0.0
        %2900 = vmatpush1.msra.mxu0 0.0
        %2901 = vmatprep.subr.mxu0 0.0
        %2902 = vmatpush1.msra.mxu0 0.0
        %2903 = vmatprep.subr.mxu0 0.0
        %2904 = vmatpush1.msra.mxu0 0.0
        %2905 = vmatprep.subr.mxu0 0.0
        %2906 = vmatpush1.msra.mxu0 0.0
        %2907 = vmatprep.subr.mxu0 0.0
        %2908 = vmatpush1.msra.mxu0 0.0
        %2909 = vmatprep.subr.mxu0 0.0
        %2910 = vmatpush1.msra.mxu0 0.0
        %2911 = vmatprep.subr.mxu0 0.0
        %2912 = vmatpush1.msra.mxu0 0.0
        %2913 = vmatprep.subr.mxu0 0.0
        %2914 = vmatpush1.msra.mxu0 0.0
        %2915 = vmatprep.subr.mxu0 0.0
        %2916 = vmatpush1.msra.mxu0 0.0
        %2917 = vmatprep.subr.mxu0 0.0
        %2918 = vmatpush1.msra.mxu0 0.0
        %2919 = vmatprep.mubr.f32.mxu0 0.0
        %2920 = vmatmul.mubr.f32.gmra.mrb[0].mxu0 %v2251
        %v2921 = vpop.f32.mrb[0].mxu0
        %v2922 = vadd.f32 %v2853, %v2921
        %v2923 = vpop.f32.mrb[0].mxu0
        %2924 = vmatprep.mubr.f32.mxu0 0.0
        %2925 = vmatmul.mubr.f32.gmra.mrb[0].mxu0 %v2254
        %v2926 = vpop.f32.mrb[0].mxu0
        %v2927 = vadd.f32 %v2853, %v2926
        %v2928 = vpop.f32.mrb[0].mxu0
        %2929 = vdwg.mxu0
        %v2931 = vsel %vm1069, %v2760, 0
        %v2934 = vsel %vm1069, %v2765, 0
        %v2937 = vsel %vm1069, %v2841, 0
        %v2940 = vsel %vm1069, %v2846, 0
        %2942 = vmatprep.subr.mxu0 0.0
        %2943 = vmatpush1.xpose.msra.mxu0 %v2937
        %2944 = vmatprep.subr.mxu0 0.0
        %2945 = vmatpush1.xpose.msra.mxu0 %v2940
        %2946 = vmatprep.subr.mxu0 0.0
        %2947 = vmatpush1.xpose.msra.mxu0 0.0
        %2948 = vmatprep.subr.mxu0 0.0
        %2949 = vmatpush1.xpose.msra.mxu0 0.0
        %2950 = vmatprep.subr.mxu0 0.0
        %2951 = vmatpush1.xpose.msra.mxu0 0.0
        %2952 = vmatprep.subr.mxu0 0.0
        %2953 = vmatpush1.xpose.msra.mxu0 0.0
        %2954 = vmatprep.subr.mxu0 0.0
        %2955 = vmatpush1.xpose.msra.mxu0 0.0
        %2956 = vmatprep.subr.mxu0 0.0
        %2957 = vmatpush1.xpose.msra.mxu0 0.0
        %2958 = vmatprep.subr.mxu0 0.0
        %2959 = vmatpush1.xpose.msra.mxu0 0.0
        %2960 = vmatprep.subr.mxu0 0.0
        %2961 = vmatpush1.xpose.msra.mxu0 0.0
        %2962 = vmatprep.subr.mxu0 0.0
        %2963 = vmatpush1.xpose.msra.mxu0 0.0
        %2964 = vmatprep.subr.mxu0 0.0
        %2965 = vmatpush1.xpose.msra.mxu0 0.0
        %2966 = vmatprep.subr.mxu0 0.0
        %2967 = vmatpush1.xpose.msra.mxu0 0.0
        %2968 = vmatprep.subr.mxu0 0.0
        %2969 = vmatpush1.xpose.msra.mxu0 0.0
        %2970 = vmatprep.subr.mxu0 0.0
        %2971 = vmatpush1.xpose.msra.mxu0 0.0
        %2972 = vmatprep.subr.mxu0 0.0
        %2973 = vmatpush1.xpose.msra.mxu0 0.0
        %2974 = vmatprep.subr.mxu0 0.0
        %2975 = vmatpush1.xpose.msra.mxu0 0.0
        %2976 = vmatprep.subr.mxu0 0.0
        %2977 = vmatpush1.xpose.msra.mxu0 0.0
        %2978 = vmatprep.subr.mxu0 0.0
        %2979 = vmatpush1.xpose.msra.mxu0 0.0
        %2980 = vmatprep.subr.mxu0 0.0
        %2981 = vmatpush1.xpose.msra.mxu0 0.0
        %2982 = vmatprep.subr.mxu0 0.0
        %2983 = vmatpush1.xpose.msra.mxu0 0.0
        %2984 = vmatprep.subr.mxu0 0.0
        %2985 = vmatpush1.xpose.msra.mxu0 0.0
        %2986 = vmatprep.subr.mxu0 0.0
        %2987 = vmatpush1.xpose.msra.mxu0 0.0
        %2988 = vmatprep.subr.mxu0 0.0
        %2989 = vmatpush1.xpose.msra.mxu0 0.0
        %2990 = vmatprep.subr.mxu0 0.0
        %2991 = vmatpush1.xpose.msra.mxu0 0.0
        %2992 = vmatprep.subr.mxu0 0.0
        %2993 = vmatpush1.xpose.msra.mxu0 0.0
        %2994 = vmatprep.subr.mxu0 0.0
        %2995 = vmatpush1.xpose.msra.mxu0 0.0
        %2996 = vmatprep.subr.mxu0 0.0
        %2997 = vmatpush1.xpose.msra.mxu0 0.0
        %2998 = vmatprep.subr.mxu0 0.0
        %2999 = vmatpush1.xpose.msra.mxu0 0.0
        %3000 = vmatprep.subr.mxu0 0.0
        %3001 = vmatpush1.xpose.msra.mxu0 0.0
        %3002 = vmatprep.subr.mxu0 0.0
        %3003 = vmatpush1.xpose.msra.mxu0 0.0
        %3004 = vmatprep.subr.mxu0 0.0
        %3005 = vmatpush1.xpose.msra.mxu0 0.0
        %3006 = vmatprep.mubr.f32.mxu0 0.0
        %3007 = vmatmul.mubr.f32.gmra.mrb[0].mxu0 %v2931
        %v3008 = vpop.f32.mrb[0].mxu0
        %v3009 = vadd.f32 0.0, %v3008
        %v3010 = vpop.f32.mrb[0].mxu0
        %3011 = vmatprep.mubr.f32.mxu0 0.0
        %3012 = vmatmul.mubr.f32.gmra.mrb[0].mxu0 %v2934
        %v3013 = vpop.f32.mrb[0].mxu0
        %v3014 = vadd.f32 0.0, %v3013
        %v3015 = vpop.f32.mrb[0].mxu0
        %3016 = vdwg.mxu0
        %v3017 = vmul.f32 %v3009, 0.25
        %v3018 = vmul.f32 %v3014, 0.25
        %v3019 = vadd.f32 %v3017, %v738
        %v3020 = vadd.f32 %v3018, %v739
        %v3021 = vsel %vm1069, %v3019, -inf
        %3022 = vmax.xlane.f32.xlu0 %v3021
        %v3023 = vpop.xlane.xlu0 %3022
        %v3024 = vsel %vm1069, %v3020, -inf
        %3025 = vmax.xlane.f32.xlu0 %v3024
        %v3026 = vpop.xlane.xlu0 %3025
        %v3027 = vsub.f32 %v3019, %v3023
        %v3028 = vsub.f32 %v3020, %v3026
        %v3029 = vmul.f32 %v3027, 1.442695
        %v3030 = vpow.pop %v3029
        %v3031 = vmul.f32 %v3028, 1.442695
        %v3032 = vpow.pop %v3031
        %v3033 = vsel %vm1069, %v3030, 0.0
        %3034 = vadd.xlane.f32.xlu0 %v3033
        %v3035 = vpop.xlane.xlu0 %3034
        %v3036 = vsel %vm1069, %v3032, 0.0
        %3037 = vadd.xlane.f32.xlu0 %v3036
        %v3038 = vpop.xlane.xlu0 %3037
        %v3039 = vrcp.pop %v3035
        %v3040 = vrcp.pop %v3038
        %v3041 = vmul.f32 %v3030, %v3039
        %v3042 = vmul.f32 %v3032, %v3040
        %v3044 = vsel %vm1069, %v3041, 0
        %v3047 = vsel %vm1069, %v3042, 0
        %3049 = vmatprep.subr.mxu0 0.0
        %3050 = vmatpush1.msra.mxu0 %v2922
        %3051 = vmatprep.subr.mxu0 0.0
        %3052 = vmatpush1.msra.mxu0 %v2927
        %3053 = vmatprep.subr.mxu0 0.0
        %3054 = vmatpush1.msra.mxu0 0.0
        %3055 = vmatprep.subr.mxu0 0.0
        %3056 = vmatpush1.msra.mxu0 0.0
        %3057 = vmatprep.subr.mxu0 0.0
        %3058 = vmatpush1.msra.mxu0 0.0
        %3059 = vmatprep.subr.mxu0 0.0
        %3060 = vmatpush1.msra.mxu0 0.0
        %3061 = vmatprep.subr.mxu0 0.0
        %3062 = vmatpush1.msra.mxu0 0.0
        %3063 = vmatprep.subr.mxu0 0.0
        %3064 = vmatpush1.msra.mxu0 0.0
        %3065 = vmatprep.subr.mxu0 0.0
        %3066 = vmatpush1.msra.mxu0 0.0
        %3067 = vmatprep.subr.mxu0 0.0
        %3068 = vmatpush1.msra.mxu0 0.0
        %3069 = vmatprep.subr.mxu0 0.0
        %3070 = vmatpush1.msra.mxu0 0.0
        %3071 = vmatprep.subr.mxu0 0.0
        %3072 = vmatpush1.msra.mxu0 0.0
        %3073 = vmatprep.subr.mxu0 0.0
        %3074 = vmatpush1.msra.mxu0 0.0
        %3075 = vmatprep.subr.mxu0 0.0
        %3076 = vmatpush1.msra.mxu0 0.0
        %3077 = vmatprep.subr.mxu0 0.0
        %3078 = vmatpush1.msra.mxu0 0.0
        %3079 = vmatprep.subr.mxu0 0.0
        %3080 = vmatpush1.msra.mxu0 0.0
        %3081 = vmatprep.subr.mxu0 0.0
        %3082 = vmatpush1.msra.mxu0 0.0
        %3083 = vmatprep.subr.mxu0 0.0
        %3084 = vmatpush1.msra.mxu0 0.0
        %3085 = vmatprep.subr.mxu0 0.0
        %3086 = vmatpush1.msra.mxu0 0.0
        %3087 = vmatprep.subr.mxu0 0.0
        %3088 = vmatpush1.msra.mxu0 0.0
        %3089 = vmatprep.subr.mxu0 0.0
        %3090 = vmatpush1.msra.mxu0 0.0
        %3091 = vmatprep.subr.mxu0 0.0
        %3092 = vmatpush1.msra.mxu0 0.0
        %3093 = vmatprep.subr.mxu0 0.0
        %3094 = vmatpush1.msra.mxu0 0.0
        %3095 = vmatprep.subr.mxu0 0.0
        %3096 = vmatpush1.msra.mxu0 0.0
        %3097 = vmatprep.subr.mxu0 0.0
        %3098 = vmatpush1.msra.mxu0 0.0
        %3099 = vmatprep.subr.mxu0 0.0
        %3100 = vmatpush1.msra.mxu0 0.0
        %3101 = vmatprep.subr.mxu0 0.0
        %3102 = vmatpush1.msra.mxu0 0.0
        %3103 = vmatprep.subr.mxu0 0.0
        %3104 = vmatpush1.msra.mxu0 0.0
        %3105 = vmatprep.subr.mxu0 0.0
        %3106 = vmatpush1.msra.mxu0 0.0
        %3107 = vmatprep.subr.mxu0 0.0
        %3108 = vmatpush1.msra.mxu0 0.0
        %3109 = vmatprep.subr.mxu0 0.0
        %3110 = vmatpush1.msra.mxu0 0.0
        %3111 = vmatprep.subr.mxu0 0.0
        %3112 = vmatpush1.msra.mxu0 0.0
        %3113 = vmatprep.mubr.f32.mxu0 0.0
        %3114 = vmatmul.mubr.f32.gmra.mrb[0].mxu0 %v3044
        %v3115 = vpop.f32.mrb[0].mxu0
        %v3116 = vadd.f32 0.0, %v3115
        %v3117 = vpop.f32.mrb[0].mxu0
        %3118 = vmatprep.mubr.f32.mxu0 0.0
        %3119 = vmatmul.mubr.f32.gmra.mrb[0].mxu0 %v3047
        %v3120 = vpop.f32.mrb[0].mxu0
        %v3121 = vadd.f32 0.0, %v3120
        %v3122 = vpop.f32.mrb[0].mxu0
        %3123 = vdwg.mxu0
        %v3125 = vsel %vm1069, %v3116, 0
        %v3128 = vsel %vm1069, %v3121, 0
        %3130 = vmatprep.subr.mxu0 0.0
        %3131 = vmatpush1.msra.mxu0 %v2242
        %3132 = vmatprep.subr.mxu0 0.0
        %3133 = vmatpush1.msra.mxu0 %v2243
        %3134 = vmatprep.subr.mxu0 0.0
        %3135 = vmatpush1.msra.mxu0 0.0
        %3136 = vmatprep.subr.mxu0 0.0
        %3137 = vmatpush1.msra.mxu0 0.0
        %3138 = vmatprep.subr.mxu0 0.0
        %3139 = vmatpush1.msra.mxu0 0.0
        %3140 = vmatprep.subr.mxu0 0.0
        %3141 = vmatpush1.msra.mxu0 0.0
        %3142 = vmatprep.subr.mxu0 0.0
        %3143 = vmatpush1.msra.mxu0 0.0
        %3144 = vmatprep.subr.mxu0 0.0
        %3145 = vmatpush1.msra.mxu0 0.0
        %3146 = vmatprep.subr.mxu0 0.0
        %3147 = vmatpush1.msra.mxu0 0.0
        %3148 = vmatprep.subr.mxu0 0.0
        %3149 = vmatpush1.msra.mxu0 0.0
        %3150 = vmatprep.subr.mxu0 0.0
        %3151 = vmatpush1.msra.mxu0 0.0
        %3152 = vmatprep.subr.mxu0 0.0
        %3153 = vmatpush1.msra.mxu0 0.0
        %3154 = vmatprep.subr.mxu0 0.0
        %3155 = vmatpush1.msra.mxu0 0.0
        %3156 = vmatprep.subr.mxu0 0.0
        %3157 = vmatpush1.msra.mxu0 0.0
        %3158 = vmatprep.subr.mxu0 0.0
        %3159 = vmatpush1.msra.mxu0 0.0
        %3160 = vmatprep.subr.mxu0 0.0
        %3161 = vmatpush1.msra.mxu0 0.0
        %3162 = vmatprep.subr.mxu0 0.0
        %3163 = vmatpush1.msra.mxu0 0.0
        %3164 = vmatprep.subr.mxu0 0.0
        %3165 = vmatpush1.msra.mxu0 0.0
        %3166 = vmatprep.subr.mxu0 0.0
        %3167 = vmatpush1.msra.mxu0 0.0
        %3168 = vmatprep.subr.mxu0 0.0
        %3169 = vmatpush1.msra.mxu0 0.0
        %3170 = vmatprep.subr.mxu0 0.0
        %3171 = vmatpush1.msra.mxu0 0.0
        %3172 = vmatprep.subr.mxu0 0.0
        %3173 = vmatpush1.msra.mxu0 0.0
        %3174 = vmatprep.subr.mxu0 0.0
        %3175 = vmatpush1.msra.mxu0 0.0
        %3176 = vmatprep.subr.mxu0 0.0
        %3177 = vmatpush1.msra.mxu0 0.0
        %3178 = vmatprep.subr.mxu0 0.0
        %3179 = vmatpush1.msra.mxu0 0.0
        %3180 = vmatprep.subr.mxu0 0.0
        %3181 = vmatpush1.msra.mxu0 0.0
        %3182 = vmatprep.subr.mxu0 0.0
        %3183 = vmatpush1.msra.mxu0 0.0
        %3184 = vmatprep.subr.mxu0 0.0
        %3185 = vmatpush1.msra.mxu0 0.0
        %3186 = vmatprep.subr.mxu0 0.0
        %3187 = vmatpush1.msra.mxu0 0.0
        %3188 = vmatprep.subr.mxu0 0.0
        %3189 = vmatpush1.msra.mxu0 0.0
        %3190 = vmatprep.subr.mxu0 0.0
        %3191 = vmatpush1.msra.mxu0 0.0
        %3192 = vmatprep.subr.mxu0 0.0
        %3193 = vmatpush1.msra.mxu0 0.0
        %3194 = vmatprep.mubr.f32.mxu0 0.0
        %3195 = vmatmul.mubr.f32.gmra.mrb[0].mxu0 %v3125
        %v3196 = vpop.f32.mrb[0].mxu0
        %v3197 = vadd.f32 0.0, %v3196
        %v3198 = vpop.f32.mrb[0].mxu0
        %3199 = vmatprep.mubr.f32.mxu0 0.0
        %3200 = vmatmul.mubr.f32.gmra.mrb[0].mxu0 %v3128
        %v3201 = vpop.f32.mrb[0].mxu0
        %v3202 = vadd.f32 0.0, %v3201
        %v3203 = vpop.f32.mrb[0].mxu0
        %3204 = vdwg.mxu0
        %v3206 = vsel %vm1069, %v2679, 0
        %v3209 = vsel %vm1069, %v2684, 0
        %3211 = vmatprep.subr.mxu0 0.0
        %3212 = vmatpush1.msra.mxu0 %v2240
        %3213 = vmatprep.subr.mxu0 0.0
        %3214 = vmatpush1.msra.mxu0 %v2241
        %3215 = vmatprep.subr.mxu0 0.0
        %3216 = vmatpush1.msra.mxu0 0.0
        %3217 = vmatprep.subr.mxu0 0.0
        %3218 = vmatpush1.msra.mxu0 0.0
        %3219 = vmatprep.subr.mxu0 0.0
        %3220 = vmatpush1.msra.mxu0 0.0
        %3221 = vmatprep.subr.mxu0 0.0
        %3222 = vmatpush1.msra.mxu0 0.0
        %3223 = vmatprep.subr.mxu0 0.0
        %3224 = vmatpush1.msra.mxu0 0.0
        %3225 = vmatprep.subr.mxu0 0.0
        %3226 = vmatpush1.msra.mxu0 0.0
        %3227 = vmatprep.subr.mxu0 0.0
        %3228 = vmatpush1.msra.mxu0 0.0
        %3229 = vmatprep.subr.mxu0 0.0
        %3230 = vmatpush1.msra.mxu0 0.0
        %3231 = vmatprep.subr.mxu0 0.0
        %3232 = vmatpush1.msra.mxu0 0.0
        %3233 = vmatprep.subr.mxu0 0.0
        %3234 = vmatpush1.msra.mxu0 0.0
        %3235 = vmatprep.subr.mxu0 0.0
        %3236 = vmatpush1.msra.mxu0 0.0
        %3237 = vmatprep.subr.mxu0 0.0
        %3238 = vmatpush1.msra.mxu0 0.0
        %3239 = vmatprep.subr.mxu0 0.0
        %3240 = vmatpush1.msra.mxu0 0.0
        %3241 = vmatprep.subr.mxu0 0.0
        %3242 = vmatpush1.msra.mxu0 0.0
        %3243 = vmatprep.subr.mxu0 0.0
        %3244 = vmatpush1.msra.mxu0 0.0
        %3245 = vmatprep.subr.mxu0 0.0
        %3246 = vmatpush1.msra.mxu0 0.0
        %3247 = vmatprep.subr.mxu0 0.0
        %3248 = vmatpush1.msra.mxu0 0.0
        %3249 = vmatprep.subr.mxu0 0.0
        %3250 = vmatpush1.msra.mxu0 0.0
        %3251 = vmatprep.subr.mxu0 0.0
        %3252 = vmatpush1.msra.mxu0 0.0
        %3253 = vmatprep.subr.mxu0 0.0
        %3254 = vmatpush1.msra.mxu0 0.0
        %3255 = vmatprep.subr.mxu0 0.0
        %3256 = vmatpush1.msra.mxu0 0.0
        %3257 = vmatprep.subr.mxu0 0.0
        %3258 = vmatpush1.msra.mxu0 0.0
        %3259 = vmatprep.subr.mxu0 0.0
        %3260 = vmatpush1.msra.mxu0 0.0
        %3261 = vmatprep.subr.mxu0 0.0
        %3262 = vmatpush1.msra.mxu0 0.0
        %3263 = vmatprep.subr.mxu0 0.0
        %3264 = vmatpush1.msra.mxu0 0.0
        %3265 = vmatprep.subr.mxu0 0.0
        %3266 = vmatpush1.msra.mxu0 0.0
        %3267 = vmatprep.subr.mxu0 0.0
        %3268 = vmatpush1.msra.mxu0 0.0
        %3269 = vmatprep.subr.mxu0 0.0
        %3270 = vmatpush1.msra.mxu0 0.0
        %3271 = vmatprep.subr.mxu0 0.0
        %3272 = vmatpush1.msra.mxu0 0.0
        %3273 = vmatprep.subr.mxu0 0.0
        %3274 = vmatpush1.msra.mxu0 0.0
        %3275 = vmatprep.mubr.f32.mxu0 0.0
        %3276 = vmatmul.mubr.f32.gmra.mrb[0].mxu0 %v3206
        %v3277 = vpop.f32.mrb[0].mxu0
        %v3278 = vadd.f32 %v3197, %v3277
        %v3279 = vpop.f32.mrb[0].mxu0
        %3280 = vmatprep.mubr.f32.mxu0 0.0
        %3281 = vmatmul.mubr.f32.gmra.mrb[0].mxu0 %v3209
        %v3282 = vpop.f32.mrb[0].mxu0
        %v3283 = vadd.f32 %v3202, %v3282
        %v3284 = vpop.f32.mrb[0].mxu0
        %3285 = vdwg.mxu0
        %s3286 = scalar_lea.vmem %s8, 1
        %v3287 = vld [vmem:[%s3286] sm:$0x1]
        %v3289 = vlaneseq
        %v3290 = vshrl.u32 %v3289, 7
        %v3291 = vsub.s32 0, %v3290
        %v3292 = vrot.slane %v3287, %v3291
        %v3294 = vadd.f32 %v3278, %v3292
        %v3295 = vadd.f32 %v3283, %v3292
        %v3296 = vadd.f32 %v3294, %v2205
        %v3297 = vadd.f32 %v3295, %v2206
        %s3298 = scalar_lea.vmem %s9, 1
        %v3299 = vld [vmem:[%s3298] sm:$0x1]
        %s3300 = scalar_lea.vmem %s10, 1
        %v3301 = vld [vmem:[%s3300] sm:$0x1]
        %v3302 = vsel %vm742, %v3296, 0.0
        %3303 = vadd.xlane.f32.xlu0 %v3302
        %v3304 = vpop.xlane.xlu0 %3303
        %v3305 = vsel %vm742, %v3297, 0.0
        %3306 = vadd.xlane.f32.xlu0 %v3305
        %v3307 = vpop.xlane.xlu0 %3306
        %v3308 = vmul.f32 %v3304, %v749
        %v3309 = vmul.f32 %v3307, %v749
        %v3310 = vsub.f32 %v3296, %v3308
        %v3311 = vsub.f32 %v3297, %v3309
        %v3312 = vmul.f32 %v3310, %v3310
        %v3313 = vmul.f32 %v3311, %v3311
        %v3314 = vsel %vm742, %v3312, 0.0
        %3315 = vadd.xlane.f32.xlu0 %v3314
        %v3316 = vpop.xlane.xlu0 %3315
        %v3317 = vsel %vm742, %v3313, 0.0
        %3318 = vadd.xlane.f32.xlu0 %v3317
        %v3319 = vpop.xlane.xlu0 %3318
        %v3320 = vmul.f32 %v3316, %v749
        %v3321 = vmul.f32 %v3319, %v749
        %v3322 = vadd.f32 %v3320, 1e-05
        %v3323 = vadd.f32 %v3321, 1e-05
        %v3324 = vrsqrt.pop %v3322
        %v3325 = vrsqrt.pop %v3323
        %v3326 = vmul.f32 %v3310, %v3324
        %v3327 = vmul.f32 %v3311, %v3325
        %v3329 = vlaneseq
        %v3330 = vshrl.u32 %v3329, 7
        %v3331 = vsub.s32 0, %v3330
        %v3332 = vrot.slane %v3299, %v3331
        %v3334 = vmul.f32 %v3326, %v3332
        %v3335 = vmul.f32 %v3327, %v3332
        %v3337 = vlaneseq
        %v3338 = vshrl.u32 %v3337, 7
        %v3339 = vsub.s32 0, %v3338
        %v3340 = vrot.slane %v3301, %v3339
        %v3342 = vadd.f32 %v3334, %v3340
        %v3343 = vadd.f32 %v3335, %v3340
        %s3344 = scalar_lea.vmem [#allocation4], 32
        %v3345 = vld [vmem:[%s3344] sm:$0xff]
        %v3346 = vld [vmem:[%s3344 + $0x8] sm:$0xff]
        %v3347 = vld [vmem:[%s3344 + $0x10] sm:$0xff]
        %v3348 = vld [vmem:[%s3344 + $0x18] sm:$0xff]
        %s3349 = scalar_lea.vmem %s12, 1
        %v3350 = vld [vmem:[%s3349] sm:$0x1]
        %v3352 = vlaneseq
        %v3353 = vshrl.u32 %v3352, 7
        %v3354 = vsub.s32 0, %v3353
        %v3355 = vrot.slane %v3350, %v3354
        %v3358 = vsel %vm742, %v3342, 0
        %v3361 = vsel %vm742, %v3343, 0
        %3363 = vmatprep.subr.mxu0 0.0
        %3364 = vmatpush1.msra.mxu0 %v3345
        %3365 = vmatprep.subr.mxu0 0.0
        %3366 = vmatpush1.msra.mxu0 %v3346
        %3367 = vmatprep.subr.mxu0 0.0
        %3368 = vmatpush1.msra.mxu0 %v3347
        %3369 = vmatprep.subr.mxu0 0.0
        %3370 = vmatpush1.msra.mxu0 %v3348
        %3371 = vmatprep.subr.mxu0 0.0
        %3372 = vmatpush1.msra.mxu0 0.0
        %3373 = vmatprep.subr.mxu0 0.0
        %3374 = vmatpush1.msra.mxu0 0.0
        %3375 = vmatprep.subr.mxu0 0.0
        %3376 = vmatpush1.msra.mxu0 0.0
        %3377 = vmatprep.subr.mxu0 0.0
        %3378 = vmatpush1.msra.mxu0 0.0
        %3379 = vmatprep.subr.mxu0 0.0
        %3380 = vmatpush1.msra.mxu0 0.0
        %3381 = vmatprep.subr.mxu0 0.0
        %3382 = vmatpush1.msra.mxu0 0.0
        %3383 = vmatprep.subr.mxu0 0.0
        %3384 = vmatpush1.msra.mxu0 0.0
        %3385 = vmatprep.subr.mxu0 0.0
        %3386 = vmatpush1.msra.mxu0 0.0
        %3387 = vmatprep.subr.mxu0 0.0
        %3388 = vmatpush1.msra.mxu0 0.0
        %3389 = vmatprep.subr.mxu0 0.0
        %3390 = vmatpush1.msra.mxu0 0.0
        %3391 = vmatprep.subr.mxu0 0.0
        %3392 = vmatpush1.msra.mxu0 0.0
        %3393 = vmatprep.subr.mxu0 0.0
        %3394 = vmatpush1.msra.mxu0 0.0
        %3395 = vmatprep.subr.mxu0 0.0
        %3396 = vmatpush1.msra.mxu0 0.0
        %3397 = vmatprep.subr.mxu0 0.0
        %3398 = vmatpush1.msra.mxu0 0.0
        %3399 = vmatprep.subr.mxu0 0.0
        %3400 = vmatpush1.msra.mxu0 0.0
        %3401 = vmatprep.subr.mxu0 0.0
        %3402 = vmatpush1.msra.mxu0 0.0
        %3403 = vmatprep.subr.mxu0 0.0
        %3404 = vmatpush1.msra.mxu0 0.0
        %3405 = vmatprep.subr.mxu0 0.0
        %3406 = vmatpush1.msra.mxu0 0.0
        %3407 = vmatprep.subr.mxu0 0.0
        %3408 = vmatpush1.msra.mxu0 0.0
        %3409 = vmatprep.subr.mxu0 0.0
        %3410 = vmatpush1.msra.mxu0 0.0
        %3411 = vmatprep.subr.mxu0 0.0
        %3412 = vmatpush1.msra.mxu0 0.0
        %3413 = vmatprep.subr.mxu0 0.0
        %3414 = vmatpush1.msra.mxu0 0.0
        %3415 = vmatprep.subr.mxu0 0.0
        %3416 = vmatpush1.msra.mxu0 0.0
        %3417 = vmatprep.subr.mxu0 0.0
        %3418 = vmatpush1.msra.mxu0 0.0
        %3419 = vmatprep.subr.mxu0 0.0
        %3420 = vmatpush1.msra.mxu0 0.0
        %3421 = vmatprep.subr.mxu0 0.0
        %3422 = vmatpush1.msra.mxu0 0.0
        %3423 = vmatprep.subr.mxu0 0.0
        %3424 = vmatpush1.msra.mxu0 0.0
        %3425 = vmatprep.subr.mxu0 0.0
        %3426 = vmatpush1.msra.mxu0 0.0
        %3427 = vmatprep.mubr.f32.mxu0 0.0
        %3428 = vmatmul.mubr.f32.gmra.mrb[0].mxu0 %v3358
        %v3429 = vpop.f32.mrb[0].mxu0
        %v3430 = vadd.f32 %v3355, %v3429
        %v3431 = vpop.f32.mrb[0].mxu0
        %3432 = vmatprep.mubr.f32.mxu0 0.0
        %3433 = vmatmul.mubr.f32.gmra.mrb[0].mxu0 %v3361
        %v3434 = vpop.f32.mrb[0].mxu0
        %v3435 = vadd.f32 %v3355, %v3434
        %v3436 = vpop.f32.mrb[0].mxu0
        %3437 = vdwg.mxu0
        %v3438 = vmul.f32 %v3430, 0.5
        %v3439 = vmul.f32 %v3435, 0.5
        %v3440 = vmul.f32 %v3430, 0.70710677
        %v3441 = vmul.f32 %v3435, 0.70710677
        %v3442 = vand.u32 2147483647, %v3440
        %v3443 = vand.u32 2147483647, %v3441
        %v3444 = vmul.f32 %v3442, 0.3275911
        %v3445 = vmul.f32 %v3443, 0.3275911
        %v3446 = vadd.f32 %v3444, 1.0
        %v3447 = vadd.f32 %v3445, 1.0
        %v3448 = vrcp.pop %v3446
        %v3449 = vmul.f32 1.0, %v3448
        %v3450 = vrcp.pop %v3447
        %v3451 = vmul.f32 1.0, %v3450
        %v3452 = vmul.f32 %v3449, 1.0614054
        %v3453 = vmul.f32 %v3451, 1.0614054
        %v3454 = vadd.f32 %v3452, -1.4531521
        %v3455 = vadd.f32 %v3453, -1.4531521
        %v3456 = vmul.f32 %v3454, %v3449
        %v3457 = vmul.f32 %v3455, %v3451
        %v3458 = vadd.f32 %v3456, 1.4214138
        %v3459 = vadd.f32 %v3457, 1.4214138
        %v3460 = vmul.f32 %v3458, %v3449
        %v3461 = vmul.f32 %v3459, %v3451
        %v3462 = vadd.f32 %v3460, -0.28449672
        %v3463 = vadd.f32 %v3461, -0.28449672
        %v3464 = vmul.f32 %v3462, %v3449
        %v3465 = vmul.f32 %v3463, %v3451
        %v3466 = vadd.f32 %v3464, 0.2548296
        %v3467 = vadd.f32 %v3465, 0.2548296
        %v3468 = vmul.f32 %v3466, %v3449
        %v3469 = vmul.f32 %v3467, %v3451
        %v3470 = vmul.f32 %v3442, %v3442
        %v3471 = vmul.f32 %v3443, %v3443
        %v3472 = vsub.f32 0.0, %v3470
        %v3473 = vsub.f32 0.0, %v3471
        %v3474 = vmul.f32 %v3472, 1.442695
        %v3475 = vpow.pop %v3474
        %v3476 = vmul.f32 %v3473, 1.442695
        %v3477 = vpow.pop %v3476
        %v3478 = vmul.f32 %v3468, %v3475
        %v3479 = vmul.f32 %v3469, %v3477
        %v3480 = vsub.f32 1.0, %v3478
        %v3481 = vsub.f32 1.0, %v3479
        %vm3482 = vcmp.ge.f32.partialorder %v3440, 0.0
        %vm3483 = vcmp.ge.f32.partialorder %v3441, 0.0
        %v3484 = vsub.f32 0.0, %v3480
        %v3485 = vsub.f32 0.0, %v3481
        %v3486 = vsel %vm3482, %v3480, %v3484
        %v3487 = vsel %vm3483, %v3481, %v3485
        %v3488 = vadd.f32 %v3486, 1.0
        %v3489 = vadd.f32 %v3487, 1.0
        %v3490 = vmul.f32 %v3438, %v3488
        %v3491 = vmul.f32 %v3439, %v3489
        %s3492 = scalar_lea.vmem %s13, 64
        %v3493 = vld [vmem:[%s3492] sm:$0xff]
        %v3494 = vld [vmem:[%s3492 + $0x8] sm:$0xff]
        %v3495 = vld [vmem:[%s3492 + $0x10] sm:$0xff]
        %v3496 = vld [vmem:[%s3492 + $0x18] sm:$0xff]
        %v3497 = vld [vmem:[%s3492 + $0x20] sm:$0xff]
        %v3498 = vld [vmem:[%s3492 + $0x28] sm:$0xff]
        %v3499 = vld [vmem:[%s3492 + $0x30] sm:$0xff]
        %v3500 = vld [vmem:[%s3492 + $0x38] sm:$0xff]
        %s3501 = scalar_lea.vmem %s14, 1
        %v3502 = vld [vmem:[%s3501] sm:$0x1]
        %v3504 = vlaneseq
        %v3505 = vshrl.u32 %v3504, 7
        %v3506 = vsub.s32 0, %v3505
        %v3507 = vrot.slane %v3502, %v3506
        %v3510 = vsel %vm2079, %v3490, 0
        %v3513 = vsel %vm2079, %v3491, 0
        %3515 = vmatprep.subr.mxu0 0.0
        %3516 = vmatpush1.msra.mxu0 %v3493
        %3517 = vmatprep.subr.mxu0 0.0
        %3518 = vmatpush1.msra.mxu0 %v3494
        %3519 = vmatprep.subr.mxu0 0.0
        %3520 = vmatpush1.msra.mxu0 %v3495
        %3521 = vmatprep.subr.mxu0 0.0
        %3522 = vmatpush1.msra.mxu0 %v3496
        %3523 = vmatprep.subr.mxu0 0.0
        %3524 = vmatpush1.msra.mxu0 %v3497
        %3525 = vmatprep.subr.mxu0 0.0
        %3526 = vmatpush1.msra.mxu0 %v3498
        %3527 = vmatprep.subr.mxu0 0.0
        %3528 = vmatpush1.msra.mxu0 %v3499
        %3529 = vmatprep.subr.mxu0 0.0
        %3530 = vmatpush1.msra.mxu0 %v3500
        %3531 = vmatprep.subr.mxu0 0.0
        %3532 = vmatpush1.msra.mxu0 0.0
        %3533 = vmatprep.subr.mxu0 0.0
        %3534 = vmatpush1.msra.mxu0 0.0
        %3535 = vmatprep.subr.mxu0 0.0
        %3536 = vmatpush1.msra.mxu0 0.0
        %3537 = vmatprep.subr.mxu0 0.0
        %3538 = vmatpush1.msra.mxu0 0.0
        %3539 = vmatprep.subr.mxu0 0.0
        %3540 = vmatpush1.msra.mxu0 0.0
        %3541 = vmatprep.subr.mxu0 0.0
        %3542 = vmatpush1.msra.mxu0 0.0
        %3543 = vmatprep.subr.mxu0 0.0
        %3544 = vmatpush1.msra.mxu0 0.0
        %3545 = vmatprep.subr.mxu0 0.0
        %3546 = vmatpush1.msra.mxu0 0.0
        %3547 = vmatprep.subr.mxu0 0.0
        %3548 = vmatpush1.msra.mxu0 0.0
        %3549 = vmatprep.subr.mxu0 0.0
        %3550 = vmatpush1.msra.mxu0 0.0
        %3551 = vmatprep.subr.mxu0 0.0
        %3552 = vmatpush1.msra.mxu0 0.0
        %3553 = vmatprep.subr.mxu0 0.0
        %3554 = vmatpush1.msra.mxu0 0.0
        %3555 = vmatprep.subr.mxu0 0.0
        %3556 = vmatpush1.msra.mxu0 0.0
        %3557 = vmatprep.subr.mxu0 0.0
        %3558 = vmatpush1.msra.mxu0 0.0
        %3559 = vmatprep.subr.mxu0 0.0
        %3560 = vmatpush1.msra.mxu0 0.0
        %3561 = vmatprep.subr.mxu0 0.0
        %3562 = vmatpush1.msra.mxu0 0.0
        %3563 = vmatprep.subr.mxu0 0.0
        %3564 = vmatpush1.msra.mxu0 0.0
        %3565 = vmatprep.subr.mxu0 0.0
        %3566 = vmatpush1.msra.mxu0 0.0
        %3567 = vmatprep.subr.mxu0 0.0
        %3568 = vmatpush1.msra.mxu0 0.0
        %3569 = vmatprep.subr.mxu0 0.0
        %3570 = vmatpush1.msra.mxu0 0.0
        %3571 = vmatprep.subr.mxu0 0.0
        %3572 = vmatpush1.msra.mxu0 0.0
        %3573 = vmatprep.subr.mxu0 0.0
        %3574 = vmatpush1.msra.mxu0 0.0
        %3575 = vmatprep.subr.mxu0 0.0
        %3576 = vmatpush1.msra.mxu0 0.0
        %3577 = vmatprep.subr.mxu0 0.0
        %3578 = vmatpush1.msra.mxu0 0.0
        %3579 = vmatprep.mubr.f32.mxu0 0.0
        %3580 = vmatmul.mubr.f32.gmra.mrb[0].mxu0 %v3510
        %v3581 = vpop.f32.mrb[0].mxu0
        %v3582 = vadd.f32 %v3507, %v3581
        %v3583 = vpop.f32.mrb[0].mxu0
        %3584 = vmatprep.mubr.f32.mxu0 0.0
        %3585 = vmatmul.mubr.f32.gmra.mrb[0].mxu0 %v3513
        %v3586 = vpop.f32.mrb[0].mxu0
        %v3587 = vadd.f32 %v3507, %v3586
        %v3588 = vpop.f32.mrb[0].mxu0
        %3589 = vdwg.mxu0
        %v3590 = vadd.f32 %v3582, %v3342
        %v3591 = vadd.f32 %v3587, %v3343
        %s3592 = scalar_lea.vmem %s15, 1
        %v3593 = vld [vmem:[%s3592] sm:$0x1]
        %s3594 = scalar_lea.vmem %s16, 1
        %v3595 = vld [vmem:[%s3594] sm:$0x1]
        %v3596 = vsel %vm742, %v3590, 0.0
        %3597 = vadd.xlane.f32.xlu0 %v3596
        %v3598 = vpop.xlane.xlu0 %3597
        %v3599 = vsel %vm742, %v3591, 0.0
        %3600 = vadd.xlane.f32.xlu0 %v3599
        %v3601 = vpop.xlane.xlu0 %3600
        %v3602 = vmul.f32 %v3598, %v749
        %v3603 = vmul.f32 %v3601, %v749
        %v3604 = vsub.f32 %v3590, %v3602
        %v3605 = vsub.f32 %v3591, %v3603
        %v3606 = vmul.f32 %v3604, %v3604
        %v3607 = vmul.f32 %v3605, %v3605
        %v3608 = vsel %vm742, %v3606, 0.0
        %3609 = vadd.xlane.f32.xlu0 %v3608
        %v3610 = vpop.xlane.xlu0 %3609
        %v3611 = vsel %vm742, %v3607, 0.0
        %3612 = vadd.xlane.f32.xlu0 %v3611
        %v3613 = vpop.xlane.xlu0 %3612
        %v3614 = vmul.f32 %v3610, %v749
        %v3615 = vmul.f32 %v3613, %v749
        %v3616 = vadd.f32 %v3614, 1e-05
        %v3617 = vadd.f32 %v3615, 1e-05
        %v3618 = vrsqrt.pop %v3616
        %v3619 = vrsqrt.pop %v3617
        %v3620 = vmul.f32 %v3604, %v3618
        %v3621 = vmul.f32 %v3605, %v3619
        %v3623 = vlaneseq
        %v3624 = vshrl.u32 %v3623, 7
        %v3625 = vsub.s32 0, %v3624
        %v3626 = vrot.slane %v3593, %v3625
        %v3628 = vmul.f32 %v3620, %v3626
        %v3629 = vmul.f32 %v3621, %v3626
        %v3631 = vlaneseq
        %v3632 = vshrl.u32 %v3631, 7
        %v3633 = vsub.s32 0, %v3632
        %v3634 = vrot.slane %v3595, %v3633
        %v3636 = vadd.f32 %v3628, %v3634
        %v3637 = vadd.f32 %v3629, %v3634
        %v3638 = vld [vmem:[%s2] sm:$0x3]
        %v3640 = vsel %vm1069, %v3638, 0
        %3642 = vmatprep.subr.mxu0 0.0
        %3643 = vmatpush1.msra.mxu0 %v3636
        %3644 = vmatprep.subr.mxu0 0.0
        %3645 = vmatpush1.msra.mxu0 %v3637
        %3646 = vmatprep.subr.mxu0 0.0
        %3647 = vmatpush1.msra.mxu0 0.0
        %3648 = vmatprep.subr.mxu0 0.0
        %3649 = vmatpush1.msra.mxu0 0.0
        %3650 = vmatprep.subr.mxu0 0.0
        %3651 = vmatpush1.msra.mxu0 0.0
        %3652 = vmatprep.subr.mxu0 0.0
        %3653 = vmatpush1.msra.mxu0 0.0
        %3654 = vmatprep.subr.mxu0 0.0
        %3655 = vmatpush1.msra.mxu0 0.0
        %3656 = vmatprep.subr.mxu0 0.0
        %3657 = vmatpush1.msra.mxu0 0.0
        %3658 = vmatprep.subr.mxu0 0.0
        %3659 = vmatpush1.msra.mxu0 0.0
        %3660 = vmatprep.subr.mxu0 0.0
        %3661 = vmatpush1.msra.mxu0 0.0
        %3662 = vmatprep.subr.mxu0 0.0
        %3663 = vmatpush1.msra.mxu0 0.0
        %3664 = vmatprep.subr.mxu0 0.0
        %3665 = vmatpush1.msra.mxu0 0.0
        %3666 = vmatprep.subr.mxu0 0.0
        %3667 = vmatpush1.msra.mxu0 0.0
        %3668 = vmatprep.subr.mxu0 0.0
        %3669 = vmatpush1.msra.mxu0 0.0
        %3670 = vmatprep.subr.mxu0 0.0
        %3671 = vmatpush1.msra.mxu0 0.0
        %3672 = vmatprep.subr.mxu0 0.0
        %3673 = vmatpush1.msra.mxu0 0.0
        %3674 = vmatprep.subr.mxu0 0.0
        %3675 = vmatpush1.msra.mxu0 0.0
        %3676 = vmatprep.subr.mxu0 0.0
        %3677 = vmatpush1.msra.mxu0 0.0
        %3678 = vmatprep.subr.mxu0 0.0
        %3679 = vmatpush1.msra.mxu0 0.0
        %3680 = vmatprep.subr.mxu0 0.0
        %3681 = vmatpush1.msra.mxu0 0.0
        %3682 = vmatprep.subr.mxu0 0.0
        %3683 = vmatpush1.msra.mxu0 0.0
        %3684 = vmatprep.subr.mxu0 0.0
        %3685 = vmatpush1.msra.mxu0 0.0
        %3686 = vmatprep.subr.mxu0 0.0
        %3687 = vmatpush1.msra.mxu0 0.0
        %3688 = vmatprep.subr.mxu0 0.0
        %3689 = vmatpush1.msra.mxu0 0.0
        %3690 = vmatprep.subr.mxu0 0.0
        %3691 = vmatpush1.msra.mxu0 0.0
        %3692 = vmatprep.subr.mxu0 0.0
        %3693 = vmatpush1.msra.mxu0 0.0
        %3694 = vmatprep.subr.mxu0 0.0
        %3695 = vmatpush1.msra.mxu0 0.0
        %3696 = vmatprep.subr.mxu0 0.0
        %3697 = vmatpush1.msra.mxu0 0.0
        %3698 = vmatprep.subr.mxu0 0.0
        %3699 = vmatpush1.msra.mxu0 0.0
        %3700 = vmatprep.subr.mxu0 0.0
        %3701 = vmatpush1.msra.mxu0 0.0
        %3702 = vmatprep.subr.mxu0 0.0
        %3703 = vmatpush1.msra.mxu0 0.0
        %3704 = vmatprep.subr.mxu0 0.0
        %3705 = vmatpush1.msra.mxu0 0.0
        %3706 = vmatprep.mubr.f32.mxu0 0.0
        %3707 = vmatmul.mubr.f32.gmra.mrb[0].mxu0 %v3640
        %v3708 = vpop.f32.mrb[0].mxu0
        %v3709 = vadd.f32 0.0, %v3708
        %v3710 = vpop.f32.mrb[0].mxu0
        %3711 = vdwg.mxu0
        %v3712 = vld [vmem:[#allocation6] sm:$0xff]
        %v3713 = vld [vmem:[#allocation6 + $0x8] sm:$0xff]
        %v3714 = vld [vmem:[#allocation6 + $0x10] sm:$0xff]
        %v3715 = vld [vmem:[#allocation6 + $0x18] sm:$0xff]
        %v3716 = vld [vmem:[#allocation6 + $0x20] sm:$0xff]
        %v3717 = vld [vmem:[#allocation6 + $0x28] sm:$0xff]
        %v3718 = vld [vmem:[#allocation6 + $0x30] sm:$0xff]
        %v3719 = vld [vmem:[#allocation6 + $0x38] sm:$0xff]
        %v3720 = vld [vmem:[%s18] sm:$0x3]
        %v3722 = vlaneseq
        %v3723 = vshrl.u32 %v3722, 7
        %v3724 = vsub.s32 0, %v3723
        %v3725 = vrot.slane %v3720, %v3724
        %v3726 = vlaneseq
        %v3727 = vshrl.u32 %v3726, 7
        %v3728 = vsub.s32 1, %v3727
        %v3729 = vrot.slane %v3720, %v3728
        %v3733 = vsel %vm742, %v3709, 0
        %3735 = vmatprep.subr.mxu0 %v3713
        %3736 = vmatpush1.msra.mxu0 %v3712
        %3737 = vmatprep.subr.mxu0 %v3715
        %3738 = vmatpush1.msra.mxu0 %v3714
        %3739 = vmatprep.subr.mxu0 %v3717
        %3740 = vmatpush1.msra.mxu0 %v3716
        %3741 = vmatprep.subr.mxu0 %v3719
        %3742 = vmatpush1.msra.mxu0 %v3718
        %3743 = vmatprep.subr.mxu0 0.0
        %3744 = vmatpush1.msra.mxu0 0.0
        %3745 = vmatprep.subr.mxu0 0.0
        %3746 = vmatpush1.msra.mxu0 0.0
        %3747 = vmatprep.subr.mxu0 0.0
        %3748 = vmatpush1.msra.mxu0 0.0
        %3749 = vmatprep.subr.mxu0 0.0
        %3750 = vmatpush1.msra.mxu0 0.0
        %3751 = vmatprep.subr.mxu0 0.0
        %3752 = vmatpush1.msra.mxu0 0.0
        %3753 = vmatprep.subr.mxu0 0.0
        %3754 = vmatpush1.msra.mxu0 0.0
        %3755 = vmatprep.subr.mxu0 0.0
        %3756 = vmatpush1.msra.mxu0 0.0
        %3757 = vmatprep.subr.mxu0 0.0
        %3758 = vmatpush1.msra.mxu0 0.0
        %3759 = vmatprep.subr.mxu0 0.0
        %3760 = vmatpush1.msra.mxu0 0.0
        %3761 = vmatprep.subr.mxu0 0.0
        %3762 = vmatpush1.msra.mxu0 0.0
        %3763 = vmatprep.subr.mxu0 0.0
        %3764 = vmatpush1.msra.mxu0 0.0
        %3765 = vmatprep.subr.mxu0 0.0
        %3766 = vmatpush1.msra.mxu0 0.0
        %3767 = vmatprep.subr.mxu0 0.0
        %3768 = vmatpush1.msra.mxu0 0.0
        %3769 = vmatprep.subr.mxu0 0.0
        %3770 = vmatpush1.msra.mxu0 0.0
        %3771 = vmatprep.subr.mxu0 0.0
        %3772 = vmatpush1.msra.mxu0 0.0
        %3773 = vmatprep.subr.mxu0 0.0
        %3774 = vmatpush1.msra.mxu0 0.0
        %3775 = vmatprep.subr.mxu0 0.0
        %3776 = vmatpush1.msra.mxu0 0.0
        %3777 = vmatprep.subr.mxu0 0.0
        %3778 = vmatpush1.msra.mxu0 0.0
        %3779 = vmatprep.subr.mxu0 0.0
        %3780 = vmatpush1.msra.mxu0 0.0
        %3781 = vmatprep.subr.mxu0 0.0
        %3782 = vmatpush1.msra.mxu0 0.0
        %3783 = vmatprep.subr.mxu0 0.0
        %3784 = vmatpush1.msra.mxu0 0.0
        %3785 = vmatprep.subr.mxu0 0.0
        %3786 = vmatpush1.msra.mxu0 0.0
        %3787 = vmatprep.subr.mxu0 0.0
        %3788 = vmatpush1.msra.mxu0 0.0
        %3789 = vmatprep.subr.mxu0 0.0
        %3790 = vmatpush1.msra.mxu0 0.0
        %3791 = vmatprep.subr.mxu0 0.0
        %3792 = vmatpush1.msra.mxu0 0.0
        %3793 = vmatprep.subr.mxu0 0.0
        %3794 = vmatpush1.msra.mxu0 0.0
        %3795 = vmatprep.subr.mxu0 0.0
        %3796 = vmatpush1.msra.mxu0 0.0
        %3797 = vmatprep.subr.mxu0 0.0
        %3798 = vmatpush1.msra.mxu0 0.0
        %3799 = vmatprep.mubr.f32.mxu0 0.0
        %3800 = vmatmul.mubr.f32.gmra.mrb[0].mxu0 %v3733
        %v3801 = vpop.f32.mrb[0].mxu0
        %v3802 = vadd.f32 %v3725, %v3801
        %v3803 = vpop.f32.mrb[0].mxu0
        %v3804 = vadd.f32 %v3729, %v3803
        %3805 = vdwg.mxu0
        %v3806 = vmax.f32 %v3802, 0.0
        %v3807 = vmax.f32 %v3804, 0.0
        %v3808 = vld [vmem:[#allocation7] sm:$0xff]
        %v3809 = vld [vmem:[#allocation7 + $0x8] sm:$0xff]
        %v3810 = vld [vmem:[#allocation7 + $0x10] sm:$0xff]
        %v3811 = vld [vmem:[#allocation7 + $0x18] sm:$0xff]
        %v3812 = vld [vmem:[#allocation7 + $0x20] sm:$0xff]
        %v3813 = vld [vmem:[#allocation7 + $0x28] sm:$0xff]
        %v3814 = vld [vmem:[#allocation7 + $0x30] sm:$0xff]
        %v3815 = vld [vmem:[#allocation7 + $0x38] sm:$0xff]
        %v3816 = vld [vmem:[#allocation7 + $0x40] sm:$0xff]
        %v3817 = vld [vmem:[#allocation7 + $0x48] sm:$0xff]
        %v3818 = vld [vmem:[#allocation7 + $0x50] sm:$0xff]
        %v3819 = vld [vmem:[#allocation7 + $0x58] sm:$0xff]
        %v3820 = vld [vmem:[#allocation7 + $0x60] sm:$0xff]
        %v3821 = vld [vmem:[#allocation7 + $0x68] sm:$0xff]
        %v3822 = vld [vmem:[#allocation7 + $0x70] sm:$0xff]
        %v3823 = vld [vmem:[#allocation7 + $0x78] sm:$0xff]
        %v3824 = vld [vmem:[#allocation7 + $0x80] sm:$0xff]
        %v3825 = vld [vmem:[#allocation7 + $0x88] sm:$0xff]
        %v3826 = vld [vmem:[#allocation7 + $0x90] sm:$0xff]
        %v3827 = vld [vmem:[#allocation7 + $0x98] sm:$0xff]
        %v3828 = vld [vmem:[#allocation7 + $0xa0] sm:$0xff]
        %v3829 = vld [vmem:[#allocation7 + $0xa8] sm:$0xff]
        %v3830 = vld [vmem:[#allocation7 + $0xb0] sm:$0xff]
        %v3831 = vld [vmem:[#allocation7 + $0xb8] sm:$0xff]
        %v3832 = vld [vmem:[#allocation7 + $0xc0] sm:$0xff]
        %v3833 = vld [vmem:[#allocation7 + $0xc8] sm:$0xff]
        %v3834 = vld [vmem:[#allocation7 + $0xd0] sm:$0xff]
        %v3835 = vld [vmem:[#allocation7 + $0xd8] sm:$0xff]
        %v3836 = vld [vmem:[#allocation7 + $0xe0] sm:$0xff]
        %v3837 = vld [vmem:[#allocation7 + $0xe8] sm:$0xff]
        %v3838 = vld [vmem:[#allocation7 + $0xf0] sm:$0xff]
        %v3839 = vld [vmem:[#allocation7 + $0xf8] sm:$0xff]
        %v3840 = vld [vmem:[%s20] sm:$0x1]
        %v3842 = vlaneseq
        %v3843 = vshrl.u32 %v3842, 7
        %v3844 = vsub.s32 0, %v3843
        %v3845 = vrot.slane %v3840, %v3844
        %3847 = vmatprep.subr.mxu0 0.0
        %3848 = vmatpush1.msra.mxu0 %v3808
        %3849 = vmatprep.subr.mxu0 0.0
        %3850 = vmatpush1.msra.mxu0 %v3809
        %3851 = vmatprep.subr.mxu0 0.0
        %3852 = vmatpush1.msra.mxu0 %v3810
        %3853 = vmatprep.subr.mxu0 0.0
        %3854 = vmatpush1.msra.mxu0 %v3811
        %3855 = vmatprep.subr.mxu0 0.0
        %3856 = vmatpush1.msra.mxu0 %v3812
        %3857 = vmatprep.subr.mxu0 0.0
        %3858 = vmatpush1.msra.mxu0 %v3813
        %3859 = vmatprep.subr.mxu0 0.0
        %3860 = vmatpush1.msra.mxu0 %v3814
        %3861 = vmatprep.subr.mxu0 0.0
        %3862 = vmatpush1.msra.mxu0 %v3815
        %3863 = vmatprep.subr.mxu0 0.0
        %3864 = vmatpush1.msra.mxu0 %v3816
        %3865 = vmatprep.subr.mxu0 0.0
        %3866 = vmatpush1.msra.mxu0 %v3817
        %3867 = vmatprep.subr.mxu0 0.0
        %3868 = vmatpush1.msra.mxu0 %v3818
        %3869 = vmatprep.subr.mxu0 0.0
        %3870 = vmatpush1.msra.mxu0 %v3819
        %3871 = vmatprep.subr.mxu0 0.0
        %3872 = vmatpush1.msra.mxu0 %v3820
        %3873 = vmatprep.subr.mxu0 0.0
        %3874 = vmatpush1.msra.mxu0 %v3821
        %3875 = vmatprep.subr.mxu0 0.0
        %3876 = vmatpush1.msra.mxu0 %v3822
        %3877 = vmatprep.subr.mxu0 0.0
        %3878 = vmatpush1.msra.mxu0 %v3823
        %3879 = vmatprep.subr.mxu0 0.0
        %3880 = vmatpush1.msra.mxu0 %v3824
        %3881 = vmatprep.subr.mxu0 0.0
        %3882 = vmatpush1.msra.mxu0 %v3825
        %3883 = vmatprep.subr.mxu0 0.0
        %3884 = vmatpush1.msra.mxu0 %v3826
        %3885 = vmatprep.subr.mxu0 0.0
        %3886 = vmatpush1.msra.mxu0 %v3827
        %3887 = vmatprep.subr.mxu0 0.0
        %3888 = vmatpush1.msra.mxu0 %v3828
        %3889 = vmatprep.subr.mxu0 0.0
        %3890 = vmatpush1.msra.mxu0 %v3829
        %3891 = vmatprep.subr.mxu0 0.0
        %3892 = vmatpush1.msra.mxu0 %v3830
        %3893 = vmatprep.subr.mxu0 0.0
        %3894 = vmatpush1.msra.mxu0 %v3831
        %3895 = vmatprep.subr.mxu0 0.0
        %3896 = vmatpush1.msra.mxu0 %v3832
        %3897 = vmatprep.subr.mxu0 0.0
        %3898 = vmatpush1.msra.mxu0 %v3833
        %3899 = vmatprep.subr.mxu0 0.0
        %3900 = vmatpush1.msra.mxu0 %v3834
        %3901 = vmatprep.subr.mxu0 0.0
        %3902 = vmatpush1.msra.mxu0 %v3835
        %3903 = vmatprep.subr.mxu0 0.0
        %3904 = vmatpush1.msra.mxu0 %v3836
        %3905 = vmatprep.subr.mxu0 0.0
        %3906 = vmatpush1.msra.mxu0 %v3837
        %3907 = vmatprep.subr.mxu0 0.0
        %3908 = vmatpush1.msra.mxu0 %v3838
        %3909 = vmatprep.subr.mxu0 0.0
        %3910 = vmatpush1.msra.mxu0 %v3839
        %3911 = vmatprep.mubr.f32.mxu0 %v3807
        %3912 = vmatmul.mubr.f32.gmra.mrb[0].mxu0 %v3806
        %v3913 = vpop.f32.mrb[0].mxu0
        %v3914 = vadd.f32 %v3845, %v3913
        %v3915 = vpop.f32.mrb[0].mxu0
        %3916 = vdwg.mxu0
        %3917 = vst [vmem:[%s735] sm:$0x3] %v3914
        %p3918 = scmp.lt.s32.totalorder %s35, 1
        %s3919 = scalar_select %p3918, %s35, 1
        %s3920 = smul.addr %s3919, 2
        %s3921 = scalar_lea.vmem %s21, %s3920
        // Predicated region
        $region121: #{pallas_contrastive_forward.1} parent=103 // pred_check
          %p3922 = pneg %p504
        $region122: #{pallas_contrastive_forward.1} parent=103 // pred_check_branch
          %3924 = sbr.rel (%p3922) target = $region124
        $region123: #{pallas_contrastive_forward.1} parent=103 // pred_region
          _
        $region124: #{pallas_contrastive_forward.1} parent=103 // pred_fallthru
          _
      $region104: #{pallas_contrastive_forward.1} parent=5 // pred_fallthru
        _
      %p3925 = scmp.le.s32.totalorder 2, %s30
      // Predicated region
      $region125: #{pallas_contrastive_forward.1} parent=5 // pred_check
        %p3926 = pneg %p3925
      $region126: #{pallas_contrastive_forward.1} parent=5 // pred_check_branch
        %3928 = sbr.rel (%p3926) target = $region128
      $region127: #{pallas_contrastive_forward.1} parent=5 // pred_region
        %s3929 = ssub.s32 %s30, 2
        // Predicated region
        $region129: #{pallas_contrastive_forward.1} parent=127 // pred_check
          %p3930 = pneg %p510
        $region130: #{pallas_contrastive_forward.1} parent=127 // pred_check_branch
          %3932 = sbr.rel (%p3930) target = $region132
        $region131: #{pallas_contrastive_forward.1} parent=127 // pred_region
          %p3933 = scmp.lt.s32.totalorder %s36, 1
          %s3934 = scalar_select %p3933, %s36, 1
          %s3935 = smul.addr %s3934, 2
          %s3936 = scalar_lea.vmem %s21, %s3935
        $region132: #{pallas_contrastive_forward.1} parent=127 // pred_fallthru
          _
      $region128: #{pallas_contrastive_forward.1} parent=5 // pred_fallthru
        _
    $region6: #{pallas_contrastive_forward.1} parent=1 // loop_footer
      %s34 = sadd.s32 1, %s30
    $region7: #{pallas_contrastive_forward.1} parent=1 // loop_footer_branch
      %29 = sbr.rel target = $region3
    $region8: #{pallas_contrastive_forward.1} parent=1 // loop_exit
      _
    %3937 = vsyncpa [#allocation3], 1
    %s3938 = scalar_lea.sflag [#allocation3], 1
    %3939 = vsyncpa %s3938, 1
    %3940 = vsyncpa [#allocation5], 1
    %3941 = vsyncpa [#allocation8], 1

</llo_original>
